<compile_context>
chip_gen: v7x
topology: tpu7x:2x2x1
jax: 0.10.0
libtpu: 0.0.40
codegen_flags: <defaults>
</compile_context>

<pallas_src>
import functools

import jax
import jax.numpy as jnp
from jax.experimental import pallas as pl
from jax.experimental.pallas import tpu as pltpu


LOG_SCALE_FACTOR_ACTNORM = 3.0   # ConActNorm.log_scale_factor
LOG_SCALE_FACTOR_ZEROS = 1.0     # ConConv2dZeros.log_scale_factor


def _connn_fused_kernel(x_ref, w1_ref, w2_ref, w3_ref,
                        b1_ref, s1_ref, b2_ref, s2_ref, b3_ref, s3_ref,
                        out_ref, *, H, W, Cin, Ch, Cout):
    """Fused conv1->actnorm->relu -> conv2->actnorm->relu -> conv3->affine
    for ONE batch sample.

    x_ref:   (1, H, W, Cin)   input sample (NHWC)
    w1_ref:  (9*Cin, Ch)      conv1 3x3 weight, (kh, kw, cin) row order
    w2_ref:  (Ch, Ch)         conv2 1x1 weight
    w3_ref:  (9*Ch, Cout)     conv3 3x3 weight, (kh, kw, cin) row order
    b*_ref:  (1, 1, C)        per-sample bias   (bias_embed(label))
    s*_ref:  (1, 1, C)        per-sample log_scale * log_scale_factor
    out_ref: (1, H*W, Cout)   flattened output (reshaped to NHWC outside)
    """

    def replicate_pad(t):
        # (H, W, C) -> (H+2, W+2, C), edge replicate == F.pad(mode='replicate')
        t = jnp.concatenate([t[0:1], t, t[H - 1:H]], axis=0)
        t = jnp.concatenate([t[:, 0:1], t, t[:, W - 1:W]], axis=1)
        return t

    def im2col_3x3(t, c):
        # (H, W, c) -> (H*W, 9*c) patch matrix, (kh, kw, cin) column order
        # (matches the HWIO weight reshaped to (9*c, cout) in the wrapper).
        tp = replicate_pad(t)
        cols = [tp[kh:kh + H, kw:kw + W, :]
                for kh in range(3) for kw in range(3)]
        return jnp.concatenate(cols, axis=-1).reshape(H * W, 9 * c)

    def cond_affine(y, b_ref, s_ref, relu):
        # (y + bias) * exp(log_scale * factor); exp on (1, C) runs on the EUP.
        y = (y + b_ref[0]) * jnp.exp(s_ref[0])
        return jnp.maximum(y, 0.0) if relu else y

    x = x_ref[0].astype(jnp.float32)                          # (H, W, Cin)

    # conv1: 3x3 replicate-pad conv as one im2col matmul + ConActNorm + ReLU
    h1 = jnp.dot(im2col_3x3(x, Cin), w1_ref[...],
                 preferred_element_type=jnp.float32)          # (HW, Ch)
    h1 = cond_affine(h1, b1_ref, s1_ref, relu=True)

    # conv2: 1x1 conv == plain matmul on the flattened activation
    h2 = jnp.dot(h1, w2_ref[...],
                 preferred_element_type=jnp.float32)          # (HW, Ch)
    h2 = cond_affine(h2, b2_ref, s2_ref, relu=True)

    # conv3: 3x3 conv (zero-init in the module) + conditional affine, no ReLU
    h3 = jnp.dot(im2col_3x3(h2.reshape(H, W, Ch), Ch), w3_ref[...],
                 preferred_element_type=jnp.float32)          # (HW, Cout)
    h3 = cond_affine(h3, b3_ref, s3_ref, relu=False)

    out_ref[...] = h3.reshape(1, H * W, Cout).astype(out_ref.dtype)


def connn_forward(params, x_nchw, label):
    """ConNN.forward(x, label). x: (B, C, H, W) NCHW, label: (B,) int."""
    B, Cin, H, W = x_nchw.shape
    Ch = params['w1'].shape[-1]
    Cout = params['w3'].shape[-1]

    x = jnp.transpose(x_nchw, (0, 2, 3, 1))                   # NCHW -> NHWC

    # Pre-reshape conv weights to im2col layout: HWIO -> (kh*kw*cin, cout).
    w1 = params['w1'].reshape(9 * Cin, Ch)
    w2 = params['w2'].reshape(Ch, Ch)
    w3 = params['w3'].reshape(9 * Ch, Cout)

    # Per-sample conditional affine parameters (embedding gathers).
    b1 = params['b1'][label].reshape(B, 1, Ch)
    s1 = (params['ls1'][label] * LOG_SCALE_FACTOR_ACTNORM).reshape(B, 1, Ch)
    b2 = params['b2'][label].reshape(B, 1, Ch)
    s2 = (params['ls2'][label] * LOG_SCALE_FACTOR_ACTNORM).reshape(B, 1, Ch)
    b3 = params['b3'][label].reshape(B, 1, Cout)
    s3 = (params['ls3'][label] * LOG_SCALE_FACTOR_ZEROS).reshape(B, 1, Cout)

    kernel = functools.partial(_connn_fused_kernel, H=H, W=W,
                               Cin=Cin, Ch=Ch, Cout=Cout)

    out_flat = pl.pallas_call(
        kernel,
        out_shape=jax.ShapeDtypeStruct((B, H * W, Cout), x.dtype),
        grid_spec=pltpu.PrefetchScalarGridSpec(
            num_scalar_prefetch=0,
            grid=(B,),
            in_specs=[
                pl.BlockSpec((1, H, W, Cin), lambda b: (b, 0, 0, 0)),
                pl.BlockSpec((9 * Cin, Ch), lambda b: (0, 0)),
                pl.BlockSpec((Ch, Ch), lambda b: (0, 0)),
                pl.BlockSpec((9 * Ch, Cout), lambda b: (0, 0)),
                pl.BlockSpec((1, 1, Ch), lambda b: (b, 0, 0)),     # bias1
                pl.BlockSpec((1, 1, Ch), lambda b: (b, 0, 0)),     # ls1*3
                pl.BlockSpec((1, 1, Ch), lambda b: (b, 0, 0)),     # bias2
                pl.BlockSpec((1, 1, Ch), lambda b: (b, 0, 0)),     # ls2*3
                pl.BlockSpec((1, 1, Cout), lambda b: (b, 0, 0)),   # bias3
                pl.BlockSpec((1, 1, Cout), lambda b: (b, 0, 0)),   # ls3*1
            ],
            out_specs=pl.BlockSpec((1, H * W, Cout), lambda b: (b, 0, 0)),
        ),
        compiler_params=pltpu.CompilerParams(
            dimension_semantics=("parallel",),
            vmem_limit_bytes=32 * 1024 * 1024,
        ),
    )(x, w1, w2, w3, b1, s1, b2, s2, b3, s3)

    out = out_flat.reshape(B, H, W, Cout)                     # free metadata
    return jnp.transpose(out, (0, 3, 1, 2))                   # NHWC -> NCHW


def init_params(key, in_channels, out_channels, n_classes, hidden_channels):
    """Deterministic init matching the PyTorch module __init__ semantics."""
    ks = jax.random.split(key, 6)
    p = {}
    # ConConv2d #1: weight ~ N(0, 0.05); actnorm Embedding default ~ N(0, 1)
    p['w1'] = 0.05 * jax.random.normal(ks[0], (3, 3, in_channels, hidden_channels), jnp.float32)
    p['ls1'] = jax.random.normal(ks[1], (n_classes, hidden_channels), jnp.float32)
    p['b1'] = jax.random.normal(ks[2], (n_classes, hidden_channels), jnp.float32)
    # ConConv2d #2 (1x1 conv, padding=0)
    p['w2'] = 0.05 * jax.random.normal(ks[3], (1, 1, hidden_channels, hidden_channels), jnp.float32)
    p['ls2'] = jax.random.normal(ks[4], (n_classes, hidden_channels), jnp.float32)
    p['b2'] = jax.random.normal(ks[5], (n_classes, hidden_channels), jnp.float32)
    # ConConv2dZeros: weight and both embeddings are zero-initialized
    p['w3'] = jnp.zeros((3, 3, hidden_channels, out_channels), jnp.float32)
    p['ls3'] = jnp.zeros((n_classes, out_channels), jnp.float32)
    p['b3'] = jnp.zeros((n_classes, out_channels), jnp.float32)
    return p


def _ref_forward(params, x_nchw, label):
    """Pure-JAX reference (XLA conv, full f32 precision) for validation."""
    x = jnp.transpose(x_nchw, (0, 2, 3, 1))

    def conv(x, w, pad):
        if pad:
            x = jnp.pad(x, ((0, 0), (1, 1), (1, 1), (0, 0)), mode='edge')
        return jax.lax.conv_general_dilated(
            x, w, window_strides=(1, 1), padding='VALID',
            dimension_numbers=('NHWC', 'HWIO', 'NHWC'),
            precision=jax.lax.Precision.HIGHEST)

    def affine(o, bias, ls):
        return (o + bias[:, None, None, :]) * jnp.exp(ls)[:, None, None, :]

    o = conv(x, params['w1'], True)
    o = jax.nn.relu(affine(o, params['b1'][label],
                           params['ls1'][label] * LOG_SCALE_FACTOR_ACTNORM))
    o = conv(o, params['w2'], False)
    o = jax.nn.relu(affine(o, params['b2'][label],
                           params['ls2'][label] * LOG_SCALE_FACTOR_ACTNORM))
    o = conv(o, params['w3'], True)
    o = affine(o, params['b3'][label],
               params['ls3'][label] * LOG_SCALE_FACTOR_ZEROS)
    return jnp.transpose(o, (0, 3, 1, 2))


if __name__ == "__main__":
    B, Cin, Cout, H, W = 2, 4, 8, 16, 16
    hidden, n_classes = 32, 10

    key = jax.random.PRNGKey(0)
    k_param, k_x, k_lbl, k_w3, k_ls3, k_b3 = jax.random.split(key, 6)

    params = init_params(k_param, Cin, Cout, n_classes, hidden)
    x = jax.random.normal(k_x, (B, Cin, H, W), jnp.float32)   # NCHW like PyTorch
    label = jax.random.randint(k_lbl, (B,), 0, n_classes)

    fwd = jax.jit(connn_forward)

    # 1) Faithful module init (conv3 is zero-initialized -> output is zeros).
    out = jax.block_until_ready(fwd(params, x, label))
    assert out.shape == (B, Cout, H, W), out.shape
    ref = jax.block_until_ready(_ref_forward(params, x, label))
    assert jnp.allclose(out, ref, atol=1e-4, rtol=1e-4), \
        float(jnp.max(jnp.abs(out - ref)))

    # 2) Non-trivial numeric check: test-only override of the zero-initialized
    #    conv3 parameters (and moderated log-scale embeddings for a numerically
    #    well-conditioned comparison) so every fused stage is exercised.
    tparams = dict(params)
    tparams['ls1'] = 0.1 * params['ls1']
    tparams['ls2'] = 0.1 * params['ls2']
    tparams['w3'] = 0.05 * jax.random.normal(k_w3, params['w3'].shape, jnp.float32)
    tparams['ls3'] = 0.1 * jax.random.normal(k_ls3, params['ls3'].shape, jnp.float32)
    tparams['b3'] = jax.random.normal(k_b3, params['b3'].shape, jnp.float32)

    out2 = jax.block_until_ready(fwd(tparams, x, label))
    ref2 = jax.block_until_ready(_ref_forward(tparams, x, label))
    err = float(jnp.max(jnp.abs(out2 - ref2)))
    scale = float(jnp.max(jnp.abs(ref2))) + 1e-6
    assert err <= 1e-3 * scale + 1e-4, (err, scale)

    print("KERNEL_OK")
</pallas_src>

<mosaic_0001>
module attributes {stable_mosaic.version = 11 : i64} {
  func.func @_connn_fused_kernel(%arg0: i32, %arg1: memref<1x16x16x4xf32, #tpu.memory_space<vmem>>, %arg2: memref<36x32xf32, #tpu.memory_space<vmem>>, %arg3: memref<32x32xf32, #tpu.memory_space<vmem>>, %arg4: memref<288x8xf32, #tpu.memory_space<vmem>>, %arg5: memref<1x1x32xf32, #tpu.memory_space<vmem>>, %arg6: memref<1x1x32xf32, #tpu.memory_space<vmem>>, %arg7: memref<1x1x32xf32, #tpu.memory_space<vmem>>, %arg8: memref<1x1x32xf32, #tpu.memory_space<vmem>>, %arg9: memref<1x1x8xf32, #tpu.memory_space<vmem>>, %arg10: memref<1x1x8xf32, #tpu.memory_space<vmem>>, %arg11: memref<1x256x8xf32, #tpu.memory_space<vmem>>) attributes {dimension_semantics = [#tpu.dimension_semantics<parallel>], iteration_bounds = array<i64: 2>, scalar_prefetch = 0 : i64, scratch_operands = 0 : i64, tpu.core_type = #tpu.core_type<tc>, window_params = [{transform_indices = @transform_0, window_bounds = array<i64: 1, 16, 16, 4>}, {pipeline_mode = #tpu.pipeline_mode<synchronous>, transform_indices = @transform_1, window_bounds = array<i64: 36, 32>}, {pipeline_mode = #tpu.pipeline_mode<synchronous>, transform_indices = @transform_2, window_bounds = array<i64: 32, 32>}, {pipeline_mode = #tpu.pipeline_mode<synchronous>, transform_indices = @transform_3, window_bounds = array<i64: 288, 8>}, {transform_indices = @transform_4, window_bounds = array<i64: 1, 1, 32>}, {transform_indices = @transform_5, window_bounds = array<i64: 1, 1, 32>}, {transform_indices = @transform_6, window_bounds = array<i64: 1, 1, 32>}, {transform_indices = @transform_7, window_bounds = array<i64: 1, 1, 32>}, {transform_indices = @transform_8, window_bounds = array<i64: 1, 1, 8>}, {transform_indices = @transform_9, window_bounds = array<i64: 1, 1, 8>}, {transform_indices = @transform_10, window_bounds = array<i64: 1, 256, 8>}]} {
    %c0 = arith.constant 0 : index
    %c0_0 = arith.constant 0 : index
    %c0_1 = arith.constant 0 : index
    %c0_2 = arith.constant 0 : index
    %0 = vector.load %arg1[%c0, %c0_0, %c0_1, %c0_2] : memref<1x16x16x4xf32, #tpu.memory_space<vmem>>, vector<1x16x16x4xf32>
    %1 = vector.shape_cast %0 : vector<1x16x16x4xf32> to vector<16x16x4xf32>
    %2 = vector.extract_strided_slice %1 {offsets = [0, 0, 0], sizes = [1, 16, 4], strides = [1, 1, 1]} : vector<16x16x4xf32> to vector<1x16x4xf32>
    %3 = vector.extract_strided_slice %1 {offsets = [15, 0, 0], sizes = [1, 16, 4], strides = [1, 1, 1]} : vector<16x16x4xf32> to vector<1x16x4xf32>
    %4 = tpu.concatenate %2, %1, %3 in 0 : vector<1x16x4xf32>, vector<16x16x4xf32>, vector<1x16x4xf32> -> vector<18x16x4xf32>
    %5 = vector.extract_strided_slice %4 {offsets = [0, 0, 0], sizes = [18, 1, 4], strides = [1, 1, 1]} : vector<18x16x4xf32> to vector<18x1x4xf32>
    %6 = vector.extract_strided_slice %4 {offsets = [0, 15, 0], sizes = [18, 1, 4], strides = [1, 1, 1]} : vector<18x16x4xf32> to vector<18x1x4xf32>
    %7 = tpu.concatenate %5, %4, %6 in 1 : vector<18x1x4xf32>, vector<18x16x4xf32>, vector<18x1x4xf32> -> vector<18x18x4xf32>
    %8 = vector.extract_strided_slice %7 {offsets = [0, 0, 0], sizes = [16, 16, 4], strides = [1, 1, 1]} : vector<18x18x4xf32> to vector<16x16x4xf32>
    %9 = vector.extract_strided_slice %7 {offsets = [0, 1, 0], sizes = [16, 16, 4], strides = [1, 1, 1]} : vector<18x18x4xf32> to vector<16x16x4xf32>
    %10 = vector.extract_strided_slice %7 {offsets = [0, 2, 0], sizes = [16, 16, 4], strides = [1, 1, 1]} : vector<18x18x4xf32> to vector<16x16x4xf32>
    %11 = vector.extract_strided_slice %7 {offsets = [1, 0, 0], sizes = [16, 16, 4], strides = [1, 1, 1]} : vector<18x18x4xf32> to vector<16x16x4xf32>
    %12 = vector.extract_strided_slice %7 {offsets = [1, 1, 0], sizes = [16, 16, 4], strides = [1, 1, 1]} : vector<18x18x4xf32> to vector<16x16x4xf32>
    %13 = vector.extract_strided_slice %7 {offsets = [1, 2, 0], sizes = [16, 16, 4], strides = [1, 1, 1]} : vector<18x18x4xf32> to vector<16x16x4xf32>
    %14 = vector.extract_strided_slice %7 {offsets = [2, 0, 0], sizes = [16, 16, 4], strides = [1, 1, 1]} : vector<18x18x4xf32> to vector<16x16x4xf32>
    %15 = vector.extract_strided_slice %7 {offsets = [2, 1, 0], sizes = [16, 16, 4], strides = [1, 1, 1]} : vector<18x18x4xf32> to vector<16x16x4xf32>
    %16 = vector.extract_strided_slice %7 {offsets = [2, 2, 0], sizes = [16, 16, 4], strides = [1, 1, 1]} : vector<18x18x4xf32> to vector<16x16x4xf32>
    %17 = tpu.concatenate %8, %9, %10, %11, %12, %13, %14, %15, %16 in 2 : vector<16x16x4xf32>, vector<16x16x4xf32>, vector<16x16x4xf32>, vector<16x16x4xf32>, vector<16x16x4xf32>, vector<16x16x4xf32>, vector<16x16x4xf32>, vector<16x16x4xf32>, vector<16x16x4xf32> -> vector<16x16x36xf32>
    %18 = vector.shape_cast %17 : vector<16x16x36xf32> to vector<256x36xf32>
    %c0_3 = arith.constant 0 : index
    %c0_4 = arith.constant 0 : index
    %19 = vector.load %arg2[%c0_3, %c0_4] : memref<36x32xf32, #tpu.memory_space<vmem>>, vector<36x32xf32>
    %cst = arith.constant dense<0.000000e+00> : vector<256x32xf32>
    %20 = tpu.matmul %18, %19, %cst {dimension_numbers = #tpu.dot_dimension_numbers<[1], [0], [0], [1], [0, 0, 1, 1], [], []>} : vector<256x36xf32>, vector<36x32xf32>, vector<256x32xf32> -> vector<256x32xf32>
    %c0_5 = arith.constant 0 : index
    %c0_6 = arith.constant 0 : index
    %c0_7 = arith.constant 0 : index
    %21 = vector.load %arg5[%c0_5, %c0_6, %c0_7] : memref<1x1x32xf32, #tpu.memory_space<vmem>>, vector<1x1x32xf32>
    %22 = vector.shape_cast %21 : vector<1x1x32xf32> to vector<1x32xf32>
    %23 = vector.broadcast %22 : vector<1x32xf32> to vector<256x32xf32>
    %24 = arith.addf %20, %23 : vector<256x32xf32>
    %c0_8 = arith.constant 0 : index
    %c0_9 = arith.constant 0 : index
    %c0_10 = arith.constant 0 : index
    %25 = vector.load %arg6[%c0_8, %c0_9, %c0_10] : memref<1x1x32xf32, #tpu.memory_space<vmem>>, vector<1x1x32xf32>
    %26 = vector.shape_cast %25 : vector<1x1x32xf32> to vector<1x32xf32>
    %27 = math.exp %26 : vector<1x32xf32>
    %28 = vector.broadcast %27 : vector<1x32xf32> to vector<256x32xf32>
    %29 = arith.mulf %24, %28 : vector<256x32xf32>
    %cst_11 = arith.constant 0.000000e+00 : f32
    %30 = vector.broadcast %cst_11 : f32 to vector<256x32xf32>
    %31 = arith.maximumf %29, %30 : vector<256x32xf32>
    %c0_12 = arith.constant 0 : index
    %c0_13 = arith.constant 0 : index
    %32 = vector.load %arg3[%c0_12, %c0_13] : memref<32x32xf32, #tpu.memory_space<vmem>>, vector<32x32xf32>
    %cst_14 = arith.constant dense<0.000000e+00> : vector<256x32xf32>
    %33 = tpu.matmul %31, %32, %cst_14 {dimension_numbers = #tpu.dot_dimension_numbers<[1], [0], [0], [1], [0, 0, 1, 1], [], []>} : vector<256x32xf32>, vector<32x32xf32>, vector<256x32xf32> -> vector<256x32xf32>
    %c0_15 = arith.constant 0 : index
    %c0_16 = arith.constant 0 : index
    %c0_17 = arith.constant 0 : index
    %34 = vector.load %arg7[%c0_15, %c0_16, %c0_17] : memref<1x1x32xf32, #tpu.memory_space<vmem>>, vector<1x1x32xf32>
    %35 = vector.shape_cast %34 : vector<1x1x32xf32> to vector<1x32xf32>
    %36 = vector.broadcast %35 : vector<1x32xf32> to vector<256x32xf32>
    %37 = arith.addf %33, %36 : vector<256x32xf32>
    %c0_18 = arith.constant 0 : index
    %c0_19 = arith.constant 0 : index
    %c0_20 = arith.constant 0 : index
    %38 = vector.load %arg8[%c0_18, %c0_19, %c0_20] : memref<1x1x32xf32, #tpu.memory_space<vmem>>, vector<1x1x32xf32>
    %39 = vector.shape_cast %38 : vector<1x1x32xf32> to vector<1x32xf32>
    %40 = math.exp %39 : vector<1x32xf32>
    %41 = vector.broadcast %40 : vector<1x32xf32> to vector<256x32xf32>
    %42 = arith.mulf %37, %41 : vector<256x32xf32>
    %cst_21 = arith.constant 0.000000e+00 : f32
    %43 = vector.broadcast %cst_21 : f32 to vector<256x32xf32>
    %44 = arith.maximumf %42, %43 : vector<256x32xf32>
    %45 = vector.shape_cast %44 : vector<256x32xf32> to vector<16x16x32xf32>
    %46 = vector.extract_strided_slice %45 {offsets = [0, 0, 0], sizes = [1, 16, 32], strides = [1, 1, 1]} : vector<16x16x32xf32> to vector<1x16x32xf32>
    %47 = vector.extract_strided_slice %45 {offsets = [15, 0, 0], sizes = [1, 16, 32], strides = [1, 1, 1]} : vector<16x16x32xf32> to vector<1x16x32xf32>
    %48 = tpu.concatenate %46, %45, %47 in 0 : vector<1x16x32xf32>, vector<16x16x32xf32>, vector<1x16x32xf32> -> vector<18x16x32xf32>
    %49 = vector.extract_strided_slice %48 {offsets = [0, 0, 0], sizes = [18, 1, 32], strides = [1, 1, 1]} : vector<18x16x32xf32> to vector<18x1x32xf32>
    %50 = vector.extract_strided_slice %48 {offsets = [0, 15, 0], sizes = [18, 1, 32], strides = [1, 1, 1]} : vector<18x16x32xf32> to vector<18x1x32xf32>
    %51 = tpu.concatenate %49, %48, %50 in 1 : vector<18x1x32xf32>, vector<18x16x32xf32>, vector<18x1x32xf32> -> vector<18x18x32xf32>
    %52 = vector.extract_strided_slice %51 {offsets = [0, 0, 0], sizes = [16, 16, 32], strides = [1, 1, 1]} : vector<18x18x32xf32> to vector<16x16x32xf32>
    %53 = vector.extract_strided_slice %51 {offsets = [0, 1, 0], sizes = [16, 16, 32], strides = [1, 1, 1]} : vector<18x18x32xf32> to vector<16x16x32xf32>
    %54 = vector.extract_strided_slice %51 {offsets = [0, 2, 0], sizes = [16, 16, 32], strides = [1, 1, 1]} : vector<18x18x32xf32> to vector<16x16x32xf32>
    %55 = vector.extract_strided_slice %51 {offsets = [1, 0, 0], sizes = [16, 16, 32], strides = [1, 1, 1]} : vector<18x18x32xf32> to vector<16x16x32xf32>
    %56 = vector.extract_strided_slice %51 {offsets = [1, 1, 0], sizes = [16, 16, 32], strides = [1, 1, 1]} : vector<18x18x32xf32> to vector<16x16x32xf32>
    %57 = vector.extract_strided_slice %51 {offsets = [1, 2, 0], sizes = [16, 16, 32], strides = [1, 1, 1]} : vector<18x18x32xf32> to vector<16x16x32xf32>
    %58 = vector.extract_strided_slice %51 {offsets = [2, 0, 0], sizes = [16, 16, 32], strides = [1, 1, 1]} : vector<18x18x32xf32> to vector<16x16x32xf32>
    %59 = vector.extract_strided_slice %51 {offsets = [2, 1, 0], sizes = [16, 16, 32], strides = [1, 1, 1]} : vector<18x18x32xf32> to vector<16x16x32xf32>
    %60 = vector.extract_strided_slice %51 {offsets = [2, 2, 0], sizes = [16, 16, 32], strides = [1, 1, 1]} : vector<18x18x32xf32> to vector<16x16x32xf32>
    %61 = tpu.concatenate %52, %53, %54, %55, %56, %57, %58, %59, %60 in 2 : vector<16x16x32xf32>, vector<16x16x32xf32>, vector<16x16x32xf32>, vector<16x16x32xf32>, vector<16x16x32xf32>, vector<16x16x32xf32>, vector<16x16x32xf32>, vector<16x16x32xf32>, vector<16x16x32xf32> -> vector<16x16x288xf32>
    %62 = vector.shape_cast %61 : vector<16x16x288xf32> to vector<256x288xf32>
    %c0_22 = arith.constant 0 : index
    %c0_23 = arith.constant 0 : index
    %63 = vector.load %arg4[%c0_22, %c0_23] : memref<288x8xf32, #tpu.memory_space<vmem>>, vector<288x8xf32>
    %cst_24 = arith.constant dense<0.000000e+00> : vector<256x8xf32>
    %64 = tpu.matmul %62, %63, %cst_24 {dimension_numbers = #tpu.dot_dimension_numbers<[1], [0], [0], [1], [0, 0, 1, 1], [], []>} : vector<256x288xf32>, vector<288x8xf32>, vector<256x8xf32> -> vector<256x8xf32>
    %c0_25 = arith.constant 0 : index
    %c0_26 = arith.constant 0 : index
    %c0_27 = arith.constant 0 : index
    %65 = vector.load %arg9[%c0_25, %c0_26, %c0_27] : memref<1x1x8xf32, #tpu.memory_space<vmem>>, vector<1x1x8xf32>
    %66 = vector.shape_cast %65 : vector<1x1x8xf32> to vector<1x8xf32>
    %67 = vector.broadcast %66 : vector<1x8xf32> to vector<256x8xf32>
    %68 = arith.addf %64, %67 : vector<256x8xf32>
    %c0_28 = arith.constant 0 : index
    %c0_29 = arith.constant 0 : index
    %c0_30 = arith.constant 0 : index
    %69 = vector.load %arg10[%c0_28, %c0_29, %c0_30] : memref<1x1x8xf32, #tpu.memory_space<vmem>>, vector<1x1x8xf32>
    %70 = vector.shape_cast %69 : vector<1x1x8xf32> to vector<1x8xf32>
    %71 = math.exp %70 : vector<1x8xf32>
    %72 = vector.broadcast %71 : vector<1x8xf32> to vector<256x8xf32>
    %73 = arith.mulf %68, %72 : vector<256x8xf32>
    %74 = vector.shape_cast %73 : vector<256x8xf32> to vector<1x256x8xf32>
    %c0_31 = arith.constant 0 : index
    %c0_32 = arith.constant 0 : index
    %c0_33 = arith.constant 0 : index
    %75 = vector.load %arg11[%c0_31, %c0_32, %c0_33] : memref<1x256x8xf32, #tpu.memory_space<vmem>>, vector<1x256x8xf32>
    tpu.vector_store %arg11[%c0_31, %c0_32, %c0_33], %74 {strides = array<i32>} : memref<1x256x8xf32, #tpu.memory_space<vmem>>, vector<1x256x8xf32>,
    return
  }
  func.func @transform_0(%arg0: i32) -> (i32, i32, i32, i32) {
    %c0_i32 = arith.constant 0 : i32
    %c0_i32_0 = arith.constant 0 : i32
    %c0_i32_1 = arith.constant 0 : i32
    %c0_i32_2 = arith.constant 0 : i32
    return %arg0, %c0_i32, %c0_i32_0, %c0_i32_1 : i32, i32, i32, i32
  }
  func.func @transform_1(%arg0: i32) -> (i32, i32) {
    %c0_i32 = arith.constant 0 : i32
    %c0_i32_0 = arith.constant 0 : i32
    %c0_i32_1 = arith.constant 0 : i32
    return %c0_i32, %c0_i32_0 : i32, i32
  }
  func.func @transform_2(%arg0: i32) -> (i32, i32) {
    %c0_i32 = arith.constant 0 : i32
    %c0_i32_0 = arith.constant 0 : i32
    %c0_i32_1 = arith.constant 0 : i32
    return %c0_i32, %c0_i32_0 : i32, i32
  }
  func.func @transform_3(%arg0: i32) -> (i32, i32) {
    %c0_i32 = arith.constant 0 : i32
    %c0_i32_0 = arith.constant 0 : i32
    %c0_i32_1 = arith.constant 0 : i32
    return %c0_i32, %c0_i32_0 : i32, i32
  }
  func.func @transform_4(%arg0: i32) -> (i32, i32, i32) {
    %c0_i32 = arith.constant 0 : i32
    %c0_i32_0 = arith.constant 0 : i32
    %c0_i32_1 = arith.constant 0 : i32
    return %arg0, %c0_i32, %c0_i32_0 : i32, i32, i32
  }
  func.func @transform_5(%arg0: i32) -> (i32, i32, i32) {
    %c0_i32 = arith.constant 0 : i32
    %c0_i32_0 = arith.constant 0 : i32
    %c0_i32_1 = arith.constant 0 : i32
    return %arg0, %c0_i32, %c0_i32_0 : i32, i32, i32
  }
  func.func @transform_6(%arg0: i32) -> (i32, i32, i32) {
    %c0_i32 = arith.constant 0 : i32
    %c0_i32_0 = arith.constant 0 : i32
    %c0_i32_1 = arith.constant 0 : i32
    return %arg0, %c0_i32, %c0_i32_0 : i32, i32, i32
  }
  func.func @transform_7(%arg0: i32) -> (i32, i32, i32) {
    %c0_i32 = arith.constant 0 : i32
    %c0_i32_0 = arith.constant 0 : i32
    %c0_i32_1 = arith.constant 0 : i32
    return %arg0, %c0_i32, %c0_i32_0 : i32, i32, i32
  }
  func.func @transform_8(%arg0: i32) -> (i32, i32, i32) {
    %c0_i32 = arith.constant 0 : i32
    %c0_i32_0 = arith.constant 0 : i32
    %c0_i32_1 = arith.constant 0 : i32
    return %arg0, %c0_i32, %c0_i32_0 : i32, i32, i32
  }
  func.func @transform_9(%arg0: i32) -> (i32, i32, i32) {
    %c0_i32 = arith.constant 0 : i32
    %c0_i32_0 = arith.constant 0 : i32
    %c0_i32_1 = arith.constant 0 : i32
    return %arg0, %c0_i32, %c0_i32_0 : i32, i32, i32
  }
  func.func @transform_10(%arg0: i32) -> (i32, i32, i32) {
    %c0_i32 = arith.constant 0 : i32
    %c0_i32_0 = arith.constant 0 : i32
    %c0_i32_1 = arith.constant 0 : i32
    return %arg0, %c0_i32, %c0_i32_0 : i32, i32, i32
  }
}

</mosaic_0001>

<llo_original>
// kernel: connn_forward.1
$region0: #{connn_forward.1}
  #allocation0 [shape = 'u32[]', space=smem, size = 0x4, offset = 0x4, fixed_abs, tag = 'smem constant byte address 0x4 - core index']
  #allocation1 [shape = 'u32[144,128]{1,0:T(1,128)}', space=vmem, size = 0x12000, scoped, tag = 'internal scratch']
  %s0 = inlined_call_operand.vmem [shape: f32[2,16,16,4], index: 0, kind: input, shape index: {}]
  %s1 = inlined_call_operand.vmem [shape: f32[36,32], index: 1, kind: input, shape index: {}]
  %s2 = inlined_call_operand.vmem [shape: f32[32,32], index: 2, kind: input, shape index: {}]
  %s3 = inlined_call_operand.vmem [shape: f32[288,8], index: 3, kind: input, shape index: {}]
  %s4 = inlined_call_operand.vmem [shape: f32[2,1,32], index: 4, kind: input, shape index: {}]
  %s5 = inlined_call_operand.vmem [shape: f32[2,1,32], index: 5, kind: input, shape index: {}]
  %s6 = inlined_call_operand.vmem [shape: f32[2,1,32], index: 6, kind: input, shape index: {}]
  %s7 = inlined_call_operand.vmem [shape: f32[2,1,32], index: 7, kind: input, shape index: {}]
  %s8 = inlined_call_operand.vmem [shape: f32[2,1,8], index: 8, kind: input, shape index: {}]
  %s9 = inlined_call_operand.vmem [shape: f32[2,1,8], index: 9, kind: input, shape index: {}]
  %s10 = inlined_call_operand.vmem [shape: f32[2,256,8], index: 10, kind: output, shape index: {}]
  %s11 = sld [smem:[#allocation0]]
  $region73: #{connn_forward.1} parent=0
    _
  %s13 = ssub.s32 1, %s11
  %s14 = scalar_select 0, %s13, %s11
  loop: start=0, step=1, limit=4
  $region2: #{connn_forward.1} parent=0 // loop_pre_header
    _
  $region3: #{connn_forward.1} parent=0 // loop_header
    %s16 = sphi 0, %s20
    %p17 = scmp.ge.s32.totalorder %s16, 4
    %s26 = sphi 0, %s28
    %s29 = sphi 0, %s26
    %s30 = sphi 0, %s29
    %s46 = sphi 0, %s30
    %s50 = sphi 0, %s50
    %s52 = sphi 0, %s50
    %s53 = sphi 0, %s52
    %s67 = sphi 0, %s53
    %s71 = sphi 0, %s71
    %s73 = sphi 0, %s71
    %s74 = sphi 0, %s73
    %s88 = sphi 0, %s74
    %s92 = sphi 0, %s92
    %s94 = sphi 0, %s92
    %s95 = sphi 0, %s94
    %s109 = sphi 0, %s95
    %s115 = sphi 0, %s117
    %s118 = sphi 0, %s115
    %s119 = sphi 0, %s118
    %s135 = sphi 0, %s119
    %s141 = sphi 0, %s143
    %s144 = sphi 0, %s141
    %s145 = sphi 0, %s144
    %s161 = sphi 0, %s145
    %s167 = sphi 0, %s169
    %s170 = sphi 0, %s167
    %s171 = sphi 0, %s170
    %s187 = sphi 0, %s171
    %s193 = sphi 0, %s195
    %s196 = sphi 0, %s193
    %s197 = sphi 0, %s196
    %s213 = sphi 0, %s197
    %s219 = sphi 0, %s221
    %s222 = sphi 0, %s219
    %s223 = sphi 0, %s222
    %s239 = sphi 0, %s223
    %s245 = sphi 0, %s247
    %s248 = sphi 0, %s245
    %s249 = sphi 0, %s248
    %s265 = sphi 0, %s249
    %s271 = sphi 0, %s273
    %s274 = sphi 0, %s271
    %s275 = sphi 0, %s274
    %s291 = sphi 0, %s275
  $region4: #{connn_forward.1} parent=0 // loop_header_branch
    %19 = sbr.rel (%p17) target = $region8
  $region5: #{connn_forward.1} parent=0 // loop_body
    %s21 = ssub.s32 %s16, 1
    %s22 = ssub.s32 %s16, 2
    %s23 = sadd.s32 %s16, 1
    %s24 = ssub.s32 %s16, %s23
    %p25 = scmp.eq.s32.totalorder %s24, 0
    %s27 = sadd.s32 %s26, 1
    %s28 = scalar_select %p25, %s26, %s27
    %p31 = pneg %p25
    %p32 = scmp.eq.s32.totalorder %s16, 1
    %p33 = por %p31, %p32
    %p34 = scmp.ne.s32.totalorder %s26, %s29
    %p35 = scmp.eq.s32.totalorder %s16, 0
    %p36 = por %p34, %p35
    %p37 = scmp.ne.s32.totalorder %s26, %s29
    %p38 = scmp.eq.s32.totalorder %s21, 1
    %p39 = por %p37, %p38
    %p40 = scmp.ne.s32.totalorder %s29, %s30
    %p41 = scmp.eq.s32.totalorder %s21, 0
    %p42 = por %p40, %p41
    %p43 = scmp.ne.s32.totalorder %s29, %s30
    %p44 = scmp.eq.s32.totalorder %s22, 1
    %p45 = por %p43, %p44
    %p47 = scmp.ne.s32.totalorder %s30, %s46
    %p48 = scmp.eq.s32.totalorder %s22, 0
    %p49 = por %p47, %p48
    %s51 = sadd.s32 %s50, 1
    %p54 = scmp.eq.s32.totalorder %s16, 1
    %p55 = scmp.ne.s32.totalorder %s50, %s52
    %p56 = scmp.eq.s32.totalorder %s16, 0
    %p57 = por %p55, %p56
    %p58 = scmp.ne.s32.totalorder %s50, %s52
    %p59 = scmp.eq.s32.totalorder %s21, 1
    %p60 = por %p58, %p59
    %p61 = scmp.ne.s32.totalorder %s52, %s53
    %p62 = scmp.eq.s32.totalorder %s21, 0
    %p63 = por %p61, %p62
    %p64 = scmp.ne.s32.totalorder %s52, %s53
    %p65 = scmp.eq.s32.totalorder %s22, 1
    %p66 = por %p64, %p65
    %p68 = scmp.ne.s32.totalorder %s53, %s67
    %p69 = scmp.eq.s32.totalorder %s22, 0
    %p70 = por %p68, %p69
    %s72 = sadd.s32 %s71, 1
    %p75 = scmp.eq.s32.totalorder %s16, 1
    %p76 = scmp.ne.s32.totalorder %s71, %s73
    %p77 = scmp.eq.s32.totalorder %s16, 0
    %p78 = por %p76, %p77
    %p79 = scmp.ne.s32.totalorder %s71, %s73
    %p80 = scmp.eq.s32.totalorder %s21, 1
    %p81 = por %p79, %p80
    %p82 = scmp.ne.s32.totalorder %s73, %s74
    %p83 = scmp.eq.s32.totalorder %s21, 0
    %p84 = por %p82, %p83
    %p85 = scmp.ne.s32.totalorder %s73, %s74
    %p86 = scmp.eq.s32.totalorder %s22, 1
    %p87 = por %p85, %p86
    %p89 = scmp.ne.s32.totalorder %s74, %s88
    %p90 = scmp.eq.s32.totalorder %s22, 0
    %p91 = por %p89, %p90
    %s93 = sadd.s32 %s92, 1
    %p96 = scmp.eq.s32.totalorder %s16, 1
    %p97 = scmp.ne.s32.totalorder %s92, %s94
    %p98 = scmp.eq.s32.totalorder %s16, 0
    %p99 = por %p97, %p98
    %p100 = scmp.ne.s32.totalorder %s92, %s94
    %p101 = scmp.eq.s32.totalorder %s21, 1
    %p102 = por %p100, %p101
    %p103 = scmp.ne.s32.totalorder %s94, %s95
    %p104 = scmp.eq.s32.totalorder %s21, 0
    %p105 = por %p103, %p104
    %p106 = scmp.ne.s32.totalorder %s94, %s95
    %p107 = scmp.eq.s32.totalorder %s22, 1
    %p108 = por %p106, %p107
    %p110 = scmp.ne.s32.totalorder %s95, %s109
    %p111 = scmp.eq.s32.totalorder %s22, 0
    %p112 = por %p110, %p111
    %s113 = ssub.s32 %s16, %s23
    %p114 = scmp.eq.s32.totalorder %s113, 0
    %s116 = sadd.s32 %s115, 1
    %s117 = scalar_select %p114, %s115, %s116
    %p120 = pneg %p114
    %p121 = scmp.eq.s32.totalorder %s16, 1
    %p122 = por %p120, %p121
    %p123 = scmp.ne.s32.totalorder %s115, %s118
    %p124 = scmp.eq.s32.totalorder %s16, 0
    %p125 = por %p123, %p124
    %p126 = scmp.ne.s32.totalorder %s115, %s118
    %p127 = scmp.eq.s32.totalorder %s21, 1
    %p128 = por %p126, %p127
    %p129 = scmp.ne.s32.totalorder %s118, %s119
    %p130 = scmp.eq.s32.totalorder %s21, 0
    %p131 = por %p129, %p130
    %p132 = scmp.ne.s32.totalorder %s118, %s119
    %p133 = scmp.eq.s32.totalorder %s22, 1
    %p134 = por %p132, %p133
    %p136 = scmp.ne.s32.totalorder %s119, %s135
    %p137 = scmp.eq.s32.totalorder %s22, 0
    %p138 = por %p136, %p137
    %s139 = ssub.s32 %s16, %s23
    %p140 = scmp.eq.s32.totalorder %s139, 0
    %s142 = sadd.s32 %s141, 1
    %s143 = scalar_select %p140, %s141, %s142
    %p146 = pneg %p140
    %p147 = scmp.eq.s32.totalorder %s16, 1
    %p148 = por %p146, %p147
    %p149 = scmp.ne.s32.totalorder %s141, %s144
    %p150 = scmp.eq.s32.totalorder %s16, 0
    %p151 = por %p149, %p150
    %p152 = scmp.ne.s32.totalorder %s141, %s144
    %p153 = scmp.eq.s32.totalorder %s21, 1
    %p154 = por %p152, %p153
    %p155 = scmp.ne.s32.totalorder %s144, %s145
    %p156 = scmp.eq.s32.totalorder %s21, 0
    %p157 = por %p155, %p156
    %p158 = scmp.ne.s32.totalorder %s144, %s145
    %p159 = scmp.eq.s32.totalorder %s22, 1
    %p160 = por %p158, %p159
    %p162 = scmp.ne.s32.totalorder %s145, %s161
    %p163 = scmp.eq.s32.totalorder %s22, 0
    %p164 = por %p162, %p163
    %s165 = ssub.s32 %s16, %s23
    %p166 = scmp.eq.s32.totalorder %s165, 0
    %s168 = sadd.s32 %s167, 1
    %s169 = scalar_select %p166, %s167, %s168
    %p172 = pneg %p166
    %p173 = scmp.eq.s32.totalorder %s16, 1
    %p174 = por %p172, %p173
    %p175 = scmp.ne.s32.totalorder %s167, %s170
    %p176 = scmp.eq.s32.totalorder %s16, 0
    %p177 = por %p175, %p176
    %p178 = scmp.ne.s32.totalorder %s167, %s170
    %p179 = scmp.eq.s32.totalorder %s21, 1
    %p180 = por %p178, %p179
    %p181 = scmp.ne.s32.totalorder %s170, %s171
    %p182 = scmp.eq.s32.totalorder %s21, 0
    %p183 = por %p181, %p182
    %p184 = scmp.ne.s32.totalorder %s170, %s171
    %p185 = scmp.eq.s32.totalorder %s22, 1
    %p186 = por %p184, %p185
    %p188 = scmp.ne.s32.totalorder %s171, %s187
    %p189 = scmp.eq.s32.totalorder %s22, 0
    %p190 = por %p188, %p189
    %s191 = ssub.s32 %s16, %s23
    %p192 = scmp.eq.s32.totalorder %s191, 0
    %s194 = sadd.s32 %s193, 1
    %s195 = scalar_select %p192, %s193, %s194
    %p198 = pneg %p192
    %p199 = scmp.eq.s32.totalorder %s16, 1
    %p200 = por %p198, %p199
    %p201 = scmp.ne.s32.totalorder %s193, %s196
    %p202 = scmp.eq.s32.totalorder %s16, 0
    %p203 = por %p201, %p202
    %p204 = scmp.ne.s32.totalorder %s193, %s196
    %p205 = scmp.eq.s32.totalorder %s21, 1
    %p206 = por %p204, %p205
    %p207 = scmp.ne.s32.totalorder %s196, %s197
    %p208 = scmp.eq.s32.totalorder %s21, 0
    %p209 = por %p207, %p208
    %p210 = scmp.ne.s32.totalorder %s196, %s197
    %p211 = scmp.eq.s32.totalorder %s22, 1
    %p212 = por %p210, %p211
    %p214 = scmp.ne.s32.totalorder %s197, %s213
    %p215 = scmp.eq.s32.totalorder %s22, 0
    %p216 = por %p214, %p215
    %s217 = ssub.s32 %s16, %s23
    %p218 = scmp.eq.s32.totalorder %s217, 0
    %s220 = sadd.s32 %s219, 1
    %s221 = scalar_select %p218, %s219, %s220
    %p224 = pneg %p218
    %p225 = scmp.eq.s32.totalorder %s16, 1
    %p226 = por %p224, %p225
    %p227 = scmp.ne.s32.totalorder %s219, %s222
    %p228 = scmp.eq.s32.totalorder %s16, 0
    %p229 = por %p227, %p228
    %p230 = scmp.ne.s32.totalorder %s219, %s222
    %p231 = scmp.eq.s32.totalorder %s21, 1
    %p232 = por %p230, %p231
    %p233 = scmp.ne.s32.totalorder %s222, %s223
    %p234 = scmp.eq.s32.totalorder %s21, 0
    %p235 = por %p233, %p234
    %p236 = scmp.ne.s32.totalorder %s222, %s223
    %p237 = scmp.eq.s32.totalorder %s22, 1
    %p238 = por %p236, %p237
    %p240 = scmp.ne.s32.totalorder %s223, %s239
    %p241 = scmp.eq.s32.totalorder %s22, 0
    %p242 = por %p240, %p241
    %s243 = ssub.s32 %s16, %s23
    %p244 = scmp.eq.s32.totalorder %s243, 0
    %s246 = sadd.s32 %s245, 1
    %s247 = scalar_select %p244, %s245, %s246
    %p250 = pneg %p244
    %p251 = scmp.eq.s32.totalorder %s16, 1
    %p252 = por %p250, %p251
    %p253 = scmp.ne.s32.totalorder %s245, %s248
    %p254 = scmp.eq.s32.totalorder %s16, 0
    %p255 = por %p253, %p254
    %p256 = scmp.ne.s32.totalorder %s245, %s248
    %p257 = scmp.eq.s32.totalorder %s21, 1
    %p258 = por %p256, %p257
    %p259 = scmp.ne.s32.totalorder %s248, %s249
    %p260 = scmp.eq.s32.totalorder %s21, 0
    %p261 = por %p259, %p260
    %p262 = scmp.ne.s32.totalorder %s248, %s249
    %p263 = scmp.eq.s32.totalorder %s22, 1
    %p264 = por %p262, %p263
    %p266 = scmp.ne.s32.totalorder %s249, %s265
    %p267 = scmp.eq.s32.totalorder %s22, 0
    %p268 = por %p266, %p267
    %s269 = ssub.s32 %s16, %s23
    %p270 = scmp.eq.s32.totalorder %s269, 0
    %s272 = sadd.s32 %s271, 1
    %s273 = scalar_select %p270, %s271, %s272
    %p276 = pneg %p270
    %p277 = scmp.eq.s32.totalorder %s16, 1
    %p278 = por %p276, %p277
    %p279 = scmp.ne.s32.totalorder %s271, %s274
    %p280 = scmp.eq.s32.totalorder %s16, 0
    %p281 = por %p279, %p280
    %p282 = scmp.ne.s32.totalorder %s271, %s274
    %p283 = scmp.eq.s32.totalorder %s21, 1
    %p284 = por %p282, %p283
    %p285 = scmp.ne.s32.totalorder %s274, %s275
    %p286 = scmp.eq.s32.totalorder %s21, 0
    %p287 = por %p285, %p286
    %p288 = scmp.ne.s32.totalorder %s274, %s275
    %p289 = scmp.eq.s32.totalorder %s22, 1
    %p290 = por %p288, %p289
    %p292 = scmp.ne.s32.totalorder %s275, %s291
    %p293 = scmp.eq.s32.totalorder %s22, 0
    %p294 = por %p292, %p293
    %p295 = scmp.le.s32.totalorder 1, %s16
    %p296 = scmp.lt.s32.totalorder %s16, 3
    %p297 = pnand %p295, %p296
    %p298 = pneg %p297
    // Predicated region
    $region9: #{connn_forward.1} parent=5 // pred_check
      _
    $region10: #{connn_forward.1} parent=5 // pred_check_branch
      %300 = sbr.rel (%p297) target = $region12
    $region11: #{connn_forward.1} parent=5 // pred_region
      %s301 = ssub.s32 %s16, 1
      // Predicated region
      $region13: #{connn_forward.1} parent=11 // pred_check
        %p302 = pneg %p63
      $region14: #{connn_forward.1} parent=11 // pred_check_branch
        %304 = sbr.rel (%p302) target = $region16
      $region15: #{connn_forward.1} parent=11 // pred_region
        _
      $region16: #{connn_forward.1} parent=11 // pred_fallthru
        _
      // Predicated region
      $region17: #{connn_forward.1} parent=11 // pred_check
        %p305 = pneg %p84
      $region18: #{connn_forward.1} parent=11 // pred_check_branch
        %307 = sbr.rel (%p305) target = $region20
      $region19: #{connn_forward.1} parent=11 // pred_region
        _
      $region20: #{connn_forward.1} parent=11 // pred_fallthru
        _
      // Predicated region
      $region21: #{connn_forward.1} parent=11 // pred_check
        %p308 = pneg %p105
      $region22: #{connn_forward.1} parent=11 // pred_check_branch
        %310 = sbr.rel (%p308) target = $region24
      $region23: #{connn_forward.1} parent=11 // pred_region
        _
      $region24: #{connn_forward.1} parent=11 // pred_fallthru
        _
    $region12: #{connn_forward.1} parent=5 // pred_fallthru
      _
    %p311 = scmp.lt.s32.totalorder %s16, 2
    // Predicated region
    $region25: #{connn_forward.1} parent=5 // pred_check
      %p312 = pneg %p311
    $region26: #{connn_forward.1} parent=5 // pred_check_branch
      %314 = sbr.rel (%p312) target = $region28
    $region27: #{connn_forward.1} parent=5 // pred_region
      // Predicated region
      $region29: #{connn_forward.1} parent=27 // pred_check
        %p315 = pneg %p36
      $region30: #{connn_forward.1} parent=27 // pred_check_branch
        %317 = sbr.rel (%p315) target = $region32
      $region31: #{connn_forward.1} parent=27 // pred_region
        %p318 = scmp.lt.s32.totalorder %s16, 1
        %s319 = scalar_select %p318, %s16, 1
        %s320 = smul.addr %s319, 32
        %s321 = smul.addr %s320, 8
        %s322 = scalar_lea.vmem %s0, %s321
      $region32: #{connn_forward.1} parent=27 // pred_fallthru
        _
      // Predicated region
      $region33: #{connn_forward.1} parent=27 // pred_check
        %p323 = pneg %p125
      $region34: #{connn_forward.1} parent=27 // pred_check_branch
        %325 = sbr.rel (%p323) target = $region36
      $region35: #{connn_forward.1} parent=27 // pred_region
        %p326 = scmp.lt.s32.totalorder %s16, 1
        %s327 = scalar_select %p326, %s16, 1
        %s328 = scalar_lea.vmem %s4, %s327
      $region36: #{connn_forward.1} parent=27 // pred_fallthru
        _
      // Predicated region
      $region37: #{connn_forward.1} parent=27 // pred_check
        %p329 = pneg %p151
      $region38: #{connn_forward.1} parent=27 // pred_check_branch
        %331 = sbr.rel (%p329) target = $region40
      $region39: #{connn_forward.1} parent=27 // pred_region
        %p332 = scmp.lt.s32.totalorder %s16, 1
        %s333 = scalar_select %p332, %s16, 1
        %s334 = scalar_lea.vmem %s5, %s333
      $region40: #{connn_forward.1} parent=27 // pred_fallthru
        _
      // Predicated region
      $region41: #{connn_forward.1} parent=27 // pred_check
        %p335 = pneg %p177
      $region42: #{connn_forward.1} parent=27 // pred_check_branch
        %337 = sbr.rel (%p335) target = $region44
      $region43: #{connn_forward.1} parent=27 // pred_region
        %p338 = scmp.lt.s32.totalorder %s16, 1
        %s339 = scalar_select %p338, %s16, 1
        %s340 = scalar_lea.vmem %s6, %s339
      $region44: #{connn_forward.1} parent=27 // pred_fallthru
        _
      // Predicated region
      $region45: #{connn_forward.1} parent=27 // pred_check
        %p341 = pneg %p203
      $region46: #{connn_forward.1} parent=27 // pred_check_branch
        %343 = sbr.rel (%p341) target = $region48
      $region47: #{connn_forward.1} parent=27 // pred_region
        %p344 = scmp.lt.s32.totalorder %s16, 1
        %s345 = scalar_select %p344, %s16, 1
        %s346 = scalar_lea.vmem %s7, %s345
      $region48: #{connn_forward.1} parent=27 // pred_fallthru
        _
      // Predicated region
      $region49: #{connn_forward.1} parent=27 // pred_check
        %p347 = pneg %p229
      $region50: #{connn_forward.1} parent=27 // pred_check_branch
        %349 = sbr.rel (%p347) target = $region52
      $region51: #{connn_forward.1} parent=27 // pred_region
        %p350 = scmp.lt.s32.totalorder %s16, 1
        %s351 = scalar_select %p350, %s16, 1
        %s352 = scalar_lea.vmem %s8, %s351
      $region52: #{connn_forward.1} parent=27 // pred_fallthru
        _
      // Predicated region
      $region53: #{connn_forward.1} parent=27 // pred_check
        %p353 = pneg %p255
      $region54: #{connn_forward.1} parent=27 // pred_check_branch
        %355 = sbr.rel (%p353) target = $region56
      $region55: #{connn_forward.1} parent=27 // pred_region
        %p356 = scmp.lt.s32.totalorder %s16, 1
        %s357 = scalar_select %p356, %s16, 1
        %s358 = scalar_lea.vmem %s9, %s357
      $region56: #{connn_forward.1} parent=27 // pred_fallthru
        _
    $region28: #{connn_forward.1} parent=5 // pred_fallthru
      _
    %p359 = scmp.le.s32.totalorder 1, %s16
    %p360 = scmp.lt.s32.totalorder %s16, 3
    %p361 = pnand %p359, %p360
    %p362 = pneg %p361
    // Predicated region
    $region57: #{connn_forward.1} parent=5 // pred_check
      _
    $region58: #{connn_forward.1} parent=5 // pred_check_branch
      %364 = sbr.rel (%p361) target = $region60
    $region59: #{connn_forward.1} parent=5 // pred_region
      %s365 = ssub.s32 %s16, 1
      %p366 = scmp.lt.s32.totalorder %s21, 1
      %s367 = scalar_select %p366, %s21, 1
      %s368 = smul.addr %s367, 32
      %s369 = smul.addr %s368, 8
      %s370 = scalar_lea.vmem %s0, %s369
      %p371 = pneg %p42
      %p372 = pneg %p39
      %p373 = pneg %p63
      %p374 = pneg %p60
      %p375 = pneg %p84
      %p376 = pneg %p81
      %p377 = pneg %p105
      %p378 = pneg %p102
      %p379 = scmp.lt.s32.totalorder %s21, 1
      %s380 = scalar_select %p379, %s21, 1
      %s381 = scalar_lea.vmem %s4, %s380
      %p382 = pneg %p131
      %p383 = pneg %p128
      %p384 = scmp.lt.s32.totalorder %s21, 1
      %s385 = scalar_select %p384, %s21, 1
      %s386 = scalar_lea.vmem %s5, %s385
      %p387 = pneg %p157
      %p388 = pneg %p154
      %p389 = scmp.lt.s32.totalorder %s21, 1
      %s390 = scalar_select %p389, %s21, 1
      %s391 = scalar_lea.vmem %s6, %s390
      %p392 = pneg %p183
      %p393 = pneg %p180
      %p394 = scmp.lt.s32.totalorder %s21, 1
      %s395 = scalar_select %p394, %s21, 1
      %s396 = scalar_lea.vmem %s7, %s395
      %p397 = pneg %p209
      %p398 = pneg %p206
      %p399 = scmp.lt.s32.totalorder %s21, 1
      %s400 = scalar_select %p399, %s21, 1
      %s401 = scalar_lea.vmem %s8, %s400
      %p402 = pneg %p235
      %p403 = pneg %p232
      %p404 = scmp.lt.s32.totalorder %s21, 1
      %s405 = scalar_select %p404, %s21, 1
      %s406 = scalar_lea.vmem %s9, %s405
      %p407 = pneg %p261
      %p408 = pneg %p258
      %p409 = pneg %p287
      %p410 = pneg %p284
      %p411 = scmp.lt.s32.totalorder %s21, 1
      %s412 = scalar_select %p411, %s21, 1
      %s413 = smul.addr %s412, 32
      %s414 = smul.addr %s413, 8
      %s415 = scalar_lea.vmem %s10, %s414
      %p416 = scmp.lt.s32.totalorder %s21, 1
      %s417 = scalar_select %p416, %s21, 1
      %s418 = smul.addr %s417, 32
      %s419 = smul.addr %s418, 8
      %s420 = scalar_lea.vmem %s0, %s419
      %p421 = scmp.lt.s32.totalorder %s21, 1
      %s422 = scalar_select %p421, %s21, 1
      %s423 = scalar_lea.vmem %s4, %s422
      %p424 = scmp.lt.s32.totalorder %s21, 1
      %s425 = scalar_select %p424, %s21, 1
      %s426 = scalar_lea.vmem %s5, %s425
      %p427 = scmp.lt.s32.totalorder %s21, 1
      %s428 = scalar_select %p427, %s21, 1
      %s429 = scalar_lea.vmem %s6, %s428
      %p430 = scmp.lt.s32.totalorder %s21, 1
      %s431 = scalar_select %p430, %s21, 1
      %s432 = scalar_lea.vmem %s7, %s431
      %p433 = scmp.lt.s32.totalorder %s21, 1
      %s434 = scalar_select %p433, %s21, 1
      %s435 = scalar_lea.vmem %s8, %s434
      %p436 = scmp.lt.s32.totalorder %s21, 1
      %s437 = scalar_select %p436, %s21, 1
      %s438 = scalar_lea.vmem %s9, %s437
      %p439 = scmp.lt.s32.totalorder %s21, 1
      %s440 = scalar_select %p439, %s21, 1
      %s441 = smul.addr %s440, 32
      %s442 = smul.addr %s441, 8
      %s443 = scalar_lea.vmem %s10, %s442
      %v444 = vld [vmem:[%s420] sm:$0xff]
      %v445 = vld [vmem:[%s420 + $0x8] sm:$0xff]
      %v446 = vld [vmem:[%s420 + $0x10] sm:$0xff]
      %v447 = vld [vmem:[%s420 + $0x18] sm:$0xff]
      %v448 = vld [vmem:[%s420 + $0x20] sm:$0xff]
      %v449 = vld [vmem:[%s420 + $0x28] sm:$0xff]
      %v450 = vld [vmem:[%s420 + $0x30] sm:$0xff]
      %v451 = vld [vmem:[%s420 + $0x38] sm:$0xff]
      %v452 = vld [vmem:[%s420 + $0x40] sm:$0xff]
      %v453 = vld [vmem:[%s420 + $0x48] sm:$0xff]
      %v454 = vld [vmem:[%s420 + $0x50] sm:$0xff]
      %v455 = vld [vmem:[%s420 + $0x58] sm:$0xff]
      %v456 = vld [vmem:[%s420 + $0x60] sm:$0xff]
      %v457 = vld [vmem:[%s420 + $0x68] sm:$0xff]
      %v458 = vld [vmem:[%s420 + $0x70] sm:$0xff]
      %v459 = vld [vmem:[%s420 + $0x78] sm:$0xff]
      %v460 = vld [vmem:[%s420 + $0x80] sm:$0xff]
      %v461 = vld [vmem:[%s420 + $0x88] sm:$0xff]
      %v462 = vld [vmem:[%s420 + $0x90] sm:$0xff]
      %v463 = vld [vmem:[%s420 + $0x98] sm:$0xff]
      %v464 = vld [vmem:[%s420 + $0xa0] sm:$0xff]
      %v465 = vld [vmem:[%s420 + $0xa8] sm:$0xff]
      %v466 = vld [vmem:[%s420 + $0xb0] sm:$0xff]
      %v467 = vld [vmem:[%s420 + $0xb8] sm:$0xff]
      %v468 = vld [vmem:[%s420 + $0xc0] sm:$0xff]
      %v469 = vld [vmem:[%s420 + $0xc8] sm:$0xff]
      %v470 = vld [vmem:[%s420 + $0xd0] sm:$0xff]
      %v471 = vld [vmem:[%s420 + $0xd8] sm:$0xff]
      %v472 = vld [vmem:[%s420 + $0xe0] sm:$0xff]
      %v473 = vld [vmem:[%s420 + $0xe8] sm:$0xff]
      %v474 = vld [vmem:[%s420 + $0xf0] sm:$0xff]
      %v475 = vld [vmem:[%s420 + $0xf8] sm:$0xff]
      %vm508 = vcmask 1040384
      %v509 = vrot.slane %v444, 7
      %v510 = vrot.slane %v445, 7
      %v511 = vsel %vm508, %v509, %v510
      %v512 = vrot.slane %v446, 7
      %v513 = vrot.slane %v447, 7
      %v514 = vsel %vm508, %v512, %v513
      %v515 = vrot.slane %v448, 7
      %v516 = vrot.slane %v449, 7
      %v517 = vsel %vm508, %v515, %v516
      %v518 = vrot.slane %v450, 7
      %v519 = vrot.slane %v451, 7
      %v520 = vsel %vm508, %v518, %v519
      %v521 = vrot.slane %v452, 7
      %v522 = vrot.slane %v453, 7
      %v523 = vsel %vm508, %v521, %v522
      %v524 = vrot.slane %v454, 7
      %v525 = vrot.slane %v455, 7
      %v526 = vsel %vm508, %v524, %v525
      %v527 = vrot.slane %v456, 7
      %v528 = vrot.slane %v457, 7
      %v529 = vsel %vm508, %v527, %v528
      %v530 = vrot.slane %v458, 7
      %v531 = vrot.slane %v459, 7
      %v532 = vsel %vm508, %v530, %v531
      %v533 = vrot.slane %v460, 7
      %v534 = vrot.slane %v461, 7
      %v535 = vsel %vm508, %v533, %v534
      %v536 = vrot.slane %v462, 7
      %v537 = vrot.slane %v463, 7
      %v538 = vsel %vm508, %v536, %v537
      %v539 = vrot.slane %v464, 7
      %v540 = vrot.slane %v465, 7
      %v541 = vsel %vm508, %v539, %v540
      %v542 = vrot.slane %v466, 7
      %v543 = vrot.slane %v467, 7
      %v544 = vsel %vm508, %v542, %v543
      %v545 = vrot.slane %v468, 7
      %v546 = vrot.slane %v469, 7
      %v547 = vsel %vm508, %v545, %v546
      %v548 = vrot.slane %v470, 7
      %v549 = vrot.slane %v471, 7
      %v550 = vsel %vm508, %v548, %v549
      %v551 = vrot.slane %v472, 7
      %v552 = vrot.slane %v473, 7
      %v553 = vsel %vm508, %v551, %v552
      %v554 = vrot.slane %v474, 7
      %v555 = vrot.slane %v475, 7
      %v556 = vsel %vm508, %v554, %v555
      %v604 = vrot.slane %v445, 6
      %v605 = vrot.slane %v447, 6
      %v606 = vrot.slane %v449, 6
      %v607 = vrot.slane %v451, 6
      %v608 = vrot.slane %v453, 6
      %v609 = vrot.slane %v455, 6
      %v610 = vrot.slane %v457, 6
      %v611 = vrot.slane %v459, 6
      %v612 = vrot.slane %v461, 6
      %v613 = vrot.slane %v463, 6
      %v614 = vrot.slane %v465, 6
      %v615 = vrot.slane %v467, 6
      %v616 = vrot.slane %v469, 6
      %v617 = vrot.slane %v471, 6
      %v618 = vrot.slane %v473, 6
      %v619 = vrot.slane %v475, 6
      %v636 = vsel %vm508, %v444, %v509
      %v637 = vsel %vm508, %v446, %v512
      %v638 = vsel %vm508, %v448, %v515
      %v639 = vsel %vm508, %v450, %v518
      %v640 = vsel %vm508, %v452, %v521
      %v641 = vsel %vm508, %v454, %v524
      %v642 = vsel %vm508, %v456, %v527
      %v643 = vsel %vm508, %v458, %v530
      %v644 = vsel %vm508, %v460, %v533
      %v645 = vsel %vm508, %v462, %v536
      %v646 = vsel %vm508, %v464, %v539
      %v647 = vsel %vm508, %v466, %v542
      %v648 = vsel %vm508, %v468, %v545
      %v649 = vsel %vm508, %v470, %v548
      %v650 = vsel %vm508, %v472, %v551
      %v651 = vsel %vm508, %v474, %v554
      %v652 = vsel %vm508, %v510, %v604
      %v653 = vsel %vm508, %v513, %v605
      %v654 = vsel %vm508, %v516, %v606
      %v655 = vsel %vm508, %v519, %v607
      %v656 = vsel %vm508, %v522, %v608
      %v657 = vsel %vm508, %v525, %v609
      %v658 = vsel %vm508, %v528, %v610
      %v659 = vsel %vm508, %v531, %v611
      %v660 = vsel %vm508, %v534, %v612
      %v661 = vsel %vm508, %v537, %v613
      %v662 = vsel %vm508, %v540, %v614
      %v663 = vsel %vm508, %v543, %v615
      %v664 = vsel %vm508, %v546, %v616
      %v665 = vsel %vm508, %v549, %v617
      %v666 = vsel %vm508, %v552, %v618
      %v667 = vsel %vm508, %v555, %v619
      %vm698 = vcmask 1046528
      %v699 = vrot.slane %v636, 1
      %v700 = vrot.slane %v511, 1
      %v701 = vsel %vm698, %v699, %v700
      %v702 = vrot.slane %v652, 1
      %v703 = vsel %vm698, %v700, %v702
      %v704 = vrot.slane %v637, 1
      %v705 = vrot.slane %v514, 1
      %v706 = vsel %vm698, %v704, %v705
      %v707 = vrot.slane %v653, 1
      %v708 = vsel %vm698, %v705, %v707
      %v709 = vrot.slane %v638, 1
      %v710 = vrot.slane %v517, 1
      %v711 = vsel %vm698, %v709, %v710
      %v712 = vrot.slane %v654, 1
      %v713 = vsel %vm698, %v710, %v712
      %v714 = vrot.slane %v639, 1
      %v715 = vrot.slane %v520, 1
      %v716 = vsel %vm698, %v714, %v715
      %v717 = vrot.slane %v655, 1
      %v718 = vsel %vm698, %v715, %v717
      %v719 = vrot.slane %v640, 1
      %v720 = vrot.slane %v523, 1
      %v721 = vsel %vm698, %v719, %v720
      %v722 = vrot.slane %v656, 1
      %v723 = vsel %vm698, %v720, %v722
      %v724 = vrot.slane %v641, 1
      %v725 = vrot.slane %v526, 1
      %v726 = vsel %vm698, %v724, %v725
      %v727 = vrot.slane %v657, 1
      %v728 = vsel %vm698, %v725, %v727
      %v729 = vrot.slane %v642, 1
      %v730 = vrot.slane %v529, 1
      %v731 = vsel %vm698, %v729, %v730
      %v732 = vrot.slane %v658, 1
      %v733 = vsel %vm698, %v730, %v732
      %v734 = vrot.slane %v643, 1
      %v735 = vrot.slane %v532, 1
      %v736 = vsel %vm698, %v734, %v735
      %v737 = vrot.slane %v659, 1
      %v738 = vsel %vm698, %v735, %v737
      %v739 = vrot.slane %v644, 1
      %v740 = vrot.slane %v535, 1
      %v741 = vsel %vm698, %v739, %v740
      %v742 = vrot.slane %v660, 1
      %v743 = vsel %vm698, %v740, %v742
      %v744 = vrot.slane %v645, 1
      %v745 = vrot.slane %v538, 1
      %v746 = vsel %vm698, %v744, %v745
      %v747 = vrot.slane %v661, 1
      %v748 = vsel %vm698, %v745, %v747
      %v749 = vrot.slane %v646, 1
      %v750 = vrot.slane %v541, 1
      %v751 = vsel %vm698, %v749, %v750
      %v752 = vrot.slane %v662, 1
      %v753 = vsel %vm698, %v750, %v752
      %v754 = vrot.slane %v647, 1
      %v755 = vrot.slane %v544, 1
      %v756 = vsel %vm698, %v754, %v755
      %v757 = vrot.slane %v663, 1
      %v758 = vsel %vm698, %v755, %v757
      %v759 = vrot.slane %v648, 1
      %v760 = vrot.slane %v547, 1
      %v761 = vsel %vm698, %v759, %v760
      %v762 = vrot.slane %v664, 1
      %v763 = vsel %vm698, %v760, %v762
      %v764 = vrot.slane %v649, 1
      %v765 = vrot.slane %v550, 1
      %v766 = vsel %vm698, %v764, %v765
      %v767 = vrot.slane %v665, 1
      %v768 = vsel %vm698, %v765, %v767
      %v769 = vrot.slane %v650, 1
      %v770 = vrot.slane %v553, 1
      %v771 = vsel %vm698, %v769, %v770
      %v772 = vrot.slane %v666, 1
      %v773 = vsel %vm698, %v770, %v772
      %774 = vrot.lane.b32.xlu0 %v701, 4
      %v775 = vpop.permute.xlu0 %774
      %776 = vrot.lane.b32.xlu0 %v703, 4
      %v777 = vpop.permute.xlu0 %776
      %778 = vrot.lane.b32.xlu0 %v706, 4
      %v779 = vpop.permute.xlu0 %778
      %780 = vrot.lane.b32.xlu0 %v708, 4
      %v781 = vpop.permute.xlu0 %780
      %782 = vrot.lane.b32.xlu0 %v711, 4
      %v783 = vpop.permute.xlu0 %782
      %784 = vrot.lane.b32.xlu0 %v713, 4
      %v785 = vpop.permute.xlu0 %784
      %786 = vrot.lane.b32.xlu0 %v716, 4
      %v787 = vpop.permute.xlu0 %786
      %788 = vrot.lane.b32.xlu0 %v718, 4
      %v789 = vpop.permute.xlu0 %788
      %790 = vrot.lane.b32.xlu0 %v721, 4
      %v791 = vpop.permute.xlu0 %790
      %792 = vrot.lane.b32.xlu0 %v723, 4
      %v793 = vpop.permute.xlu0 %792
      %794 = vrot.lane.b32.xlu0 %v726, 4
      %v795 = vpop.permute.xlu0 %794
      %796 = vrot.lane.b32.xlu0 %v728, 4
      %v797 = vpop.permute.xlu0 %796
      %798 = vrot.lane.b32.xlu0 %v731, 4
      %v799 = vpop.permute.xlu0 %798
      %800 = vrot.lane.b32.xlu0 %v733, 4
      %v801 = vpop.permute.xlu0 %800
      %802 = vrot.lane.b32.xlu0 %v736, 4
      %v803 = vpop.permute.xlu0 %802
      %804 = vrot.lane.b32.xlu0 %v738, 4
      %v805 = vpop.permute.xlu0 %804
      %806 = vrot.lane.b32.xlu0 %v741, 4
      %v807 = vpop.permute.xlu0 %806
      %808 = vrot.lane.b32.xlu0 %v743, 4
      %v809 = vpop.permute.xlu0 %808
      %810 = vrot.lane.b32.xlu0 %v746, 4
      %v811 = vpop.permute.xlu0 %810
      %812 = vrot.lane.b32.xlu0 %v748, 4
      %v813 = vpop.permute.xlu0 %812
      %814 = vrot.lane.b32.xlu0 %v751, 4
      %v815 = vpop.permute.xlu0 %814
      %816 = vrot.lane.b32.xlu0 %v753, 4
      %v817 = vpop.permute.xlu0 %816
      %818 = vrot.lane.b32.xlu0 %v756, 4
      %v819 = vpop.permute.xlu0 %818
      %820 = vrot.lane.b32.xlu0 %v758, 4
      %v821 = vpop.permute.xlu0 %820
      %822 = vrot.lane.b32.xlu0 %v761, 4
      %v823 = vpop.permute.xlu0 %822
      %824 = vrot.lane.b32.xlu0 %v763, 4
      %v825 = vpop.permute.xlu0 %824
      %826 = vrot.lane.b32.xlu0 %v766, 4
      %v827 = vpop.permute.xlu0 %826
      %828 = vrot.lane.b32.xlu0 %v768, 4
      %v829 = vpop.permute.xlu0 %828
      %830 = vrot.lane.b32.xlu0 %v771, 4
      %v831 = vpop.permute.xlu0 %830
      %832 = vrot.lane.b32.xlu0 %v773, 4
      %v833 = vpop.permute.xlu0 %832
      %vm864 = vcmask 1045504
      %v865 = vrot.slane %v636, 2
      %v866 = vrot.slane %v511, 2
      %v867 = vsel %vm864, %v865, %v866
      %v868 = vrot.slane %v652, 2
      %v869 = vsel %vm864, %v866, %v868
      %v870 = vrot.slane %v637, 2
      %v871 = vrot.slane %v514, 2
      %v872 = vsel %vm864, %v870, %v871
      %v873 = vrot.slane %v653, 2
      %v874 = vsel %vm864, %v871, %v873
      %v875 = vrot.slane %v638, 2
      %v876 = vrot.slane %v517, 2
      %v877 = vsel %vm864, %v875, %v876
      %v878 = vrot.slane %v654, 2
      %v879 = vsel %vm864, %v876, %v878
      %v880 = vrot.slane %v639, 2
      %v881 = vrot.slane %v520, 2
      %v882 = vsel %vm864, %v880, %v881
      %v883 = vrot.slane %v655, 2
      %v884 = vsel %vm864, %v881, %v883
      %v885 = vrot.slane %v640, 2
      %v886 = vrot.slane %v523, 2
      %v887 = vsel %vm864, %v885, %v886
      %v888 = vrot.slane %v656, 2
      %v889 = vsel %vm864, %v886, %v888
      %v890 = vrot.slane %v641, 2
      %v891 = vrot.slane %v526, 2
      %v892 = vsel %vm864, %v890, %v891
      %v893 = vrot.slane %v657, 2
      %v894 = vsel %vm864, %v891, %v893
      %v895 = vrot.slane %v642, 2
      %v896 = vrot.slane %v529, 2
      %v897 = vsel %vm864, %v895, %v896
      %v898 = vrot.slane %v658, 2
      %v899 = vsel %vm864, %v896, %v898
      %v900 = vrot.slane %v643, 2
      %v901 = vrot.slane %v532, 2
      %v902 = vsel %vm864, %v900, %v901
      %v903 = vrot.slane %v659, 2
      %v904 = vsel %vm864, %v901, %v903
      %v905 = vrot.slane %v644, 2
      %v906 = vrot.slane %v535, 2
      %v907 = vsel %vm864, %v905, %v906
      %v908 = vrot.slane %v660, 2
      %v909 = vsel %vm864, %v906, %v908
      %v910 = vrot.slane %v645, 2
      %v911 = vrot.slane %v538, 2
      %v912 = vsel %vm864, %v910, %v911
      %v913 = vrot.slane %v661, 2
      %v914 = vsel %vm864, %v911, %v913
      %v915 = vrot.slane %v646, 2
      %v916 = vrot.slane %v541, 2
      %v917 = vsel %vm864, %v915, %v916
      %v918 = vrot.slane %v662, 2
      %v919 = vsel %vm864, %v916, %v918
      %v920 = vrot.slane %v647, 2
      %v921 = vrot.slane %v544, 2
      %v922 = vsel %vm864, %v920, %v921
      %v923 = vrot.slane %v663, 2
      %v924 = vsel %vm864, %v921, %v923
      %v925 = vrot.slane %v648, 2
      %v926 = vrot.slane %v547, 2
      %v927 = vsel %vm864, %v925, %v926
      %v928 = vrot.slane %v664, 2
      %v929 = vsel %vm864, %v926, %v928
      %v930 = vrot.slane %v649, 2
      %v931 = vrot.slane %v550, 2
      %v932 = vsel %vm864, %v930, %v931
      %v933 = vrot.slane %v665, 2
      %v934 = vsel %vm864, %v931, %v933
      %v935 = vrot.slane %v650, 2
      %v936 = vrot.slane %v553, 2
      %v937 = vsel %vm864, %v935, %v936
      %v938 = vrot.slane %v666, 2
      %v939 = vsel %vm864, %v936, %v938
      %940 = vrot.lane.b32.xlu0 %v867, 8
      %v941 = vpop.permute.xlu0 %940
      %942 = vrot.lane.b32.xlu0 %v869, 8
      %v943 = vpop.permute.xlu0 %942
      %944 = vrot.lane.b32.xlu0 %v872, 8
      %v945 = vpop.permute.xlu0 %944
      %946 = vrot.lane.b32.xlu0 %v874, 8
      %v947 = vpop.permute.xlu0 %946
      %948 = vrot.lane.b32.xlu0 %v877, 8
      %v949 = vpop.permute.xlu0 %948
      %950 = vrot.lane.b32.xlu0 %v879, 8
      %v951 = vpop.permute.xlu0 %950
      %952 = vrot.lane.b32.xlu0 %v882, 8
      %v953 = vpop.permute.xlu0 %952
      %954 = vrot.lane.b32.xlu0 %v884, 8
      %v955 = vpop.permute.xlu0 %954
      %956 = vrot.lane.b32.xlu0 %v887, 8
      %v957 = vpop.permute.xlu0 %956
      %958 = vrot.lane.b32.xlu0 %v889, 8
      %v959 = vpop.permute.xlu0 %958
      %960 = vrot.lane.b32.xlu0 %v892, 8
      %v961 = vpop.permute.xlu0 %960
      %962 = vrot.lane.b32.xlu0 %v894, 8
      %v963 = vpop.permute.xlu0 %962
      %964 = vrot.lane.b32.xlu0 %v897, 8
      %v965 = vpop.permute.xlu0 %964
      %966 = vrot.lane.b32.xlu0 %v899, 8
      %v967 = vpop.permute.xlu0 %966
      %968 = vrot.lane.b32.xlu0 %v902, 8
      %v969 = vpop.permute.xlu0 %968
      %970 = vrot.lane.b32.xlu0 %v904, 8
      %v971 = vpop.permute.xlu0 %970
      %972 = vrot.lane.b32.xlu0 %v907, 8
      %v973 = vpop.permute.xlu0 %972
      %974 = vrot.lane.b32.xlu0 %v909, 8
      %v975 = vpop.permute.xlu0 %974
      %976 = vrot.lane.b32.xlu0 %v912, 8
      %v977 = vpop.permute.xlu0 %976
      %978 = vrot.lane.b32.xlu0 %v914, 8
      %v979 = vpop.permute.xlu0 %978
      %980 = vrot.lane.b32.xlu0 %v917, 8
      %v981 = vpop.permute.xlu0 %980
      %982 = vrot.lane.b32.xlu0 %v919, 8
      %v983 = vpop.permute.xlu0 %982
      %984 = vrot.lane.b32.xlu0 %v922, 8
      %v985 = vpop.permute.xlu0 %984
      %986 = vrot.lane.b32.xlu0 %v924, 8
      %v987 = vpop.permute.xlu0 %986
      %988 = vrot.lane.b32.xlu0 %v927, 8
      %v989 = vpop.permute.xlu0 %988
      %990 = vrot.lane.b32.xlu0 %v929, 8
      %v991 = vpop.permute.xlu0 %990
      %992 = vrot.lane.b32.xlu0 %v932, 8
      %v993 = vpop.permute.xlu0 %992
      %994 = vrot.lane.b32.xlu0 %v934, 8
      %v995 = vpop.permute.xlu0 %994
      %996 = vrot.lane.b32.xlu0 %v937, 8
      %v997 = vpop.permute.xlu0 %996
      %998 = vrot.lane.b32.xlu0 %v939, 8
      %v999 = vpop.permute.xlu0 %998
      %1031 = vrot.lane.b32.xlu0 %v636, 12
      %v1032 = vpop.permute.xlu0 %1031
      %1033 = vrot.lane.b32.xlu0 %v511, 12
      %v1034 = vpop.permute.xlu0 %1033
      %1035 = vrot.lane.b32.xlu0 %v637, 12
      %v1036 = vpop.permute.xlu0 %1035
      %1037 = vrot.lane.b32.xlu0 %v514, 12
      %v1038 = vpop.permute.xlu0 %1037
      %1039 = vrot.lane.b32.xlu0 %v638, 12
      %v1040 = vpop.permute.xlu0 %1039
      %1041 = vrot.lane.b32.xlu0 %v517, 12
      %v1042 = vpop.permute.xlu0 %1041
      %1043 = vrot.lane.b32.xlu0 %v639, 12
      %v1044 = vpop.permute.xlu0 %1043
      %1045 = vrot.lane.b32.xlu0 %v520, 12
      %v1046 = vpop.permute.xlu0 %1045
      %1047 = vrot.lane.b32.xlu0 %v640, 12
      %v1048 = vpop.permute.xlu0 %1047
      %1049 = vrot.lane.b32.xlu0 %v523, 12
      %v1050 = vpop.permute.xlu0 %1049
      %1051 = vrot.lane.b32.xlu0 %v641, 12
      %v1052 = vpop.permute.xlu0 %1051
      %1053 = vrot.lane.b32.xlu0 %v526, 12
      %v1054 = vpop.permute.xlu0 %1053
      %1055 = vrot.lane.b32.xlu0 %v642, 12
      %v1056 = vpop.permute.xlu0 %1055
      %1057 = vrot.lane.b32.xlu0 %v529, 12
      %v1058 = vpop.permute.xlu0 %1057
      %1059 = vrot.lane.b32.xlu0 %v643, 12
      %v1060 = vpop.permute.xlu0 %1059
      %1061 = vrot.lane.b32.xlu0 %v532, 12
      %v1062 = vpop.permute.xlu0 %1061
      %1063 = vrot.lane.b32.xlu0 %v644, 12
      %v1064 = vpop.permute.xlu0 %1063
      %1065 = vrot.lane.b32.xlu0 %v535, 12
      %v1066 = vpop.permute.xlu0 %1065
      %1067 = vrot.lane.b32.xlu0 %v645, 12
      %v1068 = vpop.permute.xlu0 %1067
      %1069 = vrot.lane.b32.xlu0 %v538, 12
      %v1070 = vpop.permute.xlu0 %1069
      %1071 = vrot.lane.b32.xlu0 %v646, 12
      %v1072 = vpop.permute.xlu0 %1071
      %1073 = vrot.lane.b32.xlu0 %v541, 12
      %v1074 = vpop.permute.xlu0 %1073
      %1075 = vrot.lane.b32.xlu0 %v647, 12
      %v1076 = vpop.permute.xlu0 %1075
      %1077 = vrot.lane.b32.xlu0 %v544, 12
      %v1078 = vpop.permute.xlu0 %1077
      %1079 = vrot.lane.b32.xlu0 %v648, 12
      %v1080 = vpop.permute.xlu0 %1079
      %1081 = vrot.lane.b32.xlu0 %v547, 12
      %v1082 = vpop.permute.xlu0 %1081
      %1083 = vrot.lane.b32.xlu0 %v649, 12
      %v1084 = vpop.permute.xlu0 %1083
      %1085 = vrot.lane.b32.xlu0 %v550, 12
      %v1086 = vpop.permute.xlu0 %1085
      %1087 = vrot.lane.b32.xlu0 %v650, 12
      %v1088 = vpop.permute.xlu0 %1087
      %1089 = vrot.lane.b32.xlu0 %v553, 12
      %v1090 = vpop.permute.xlu0 %1089
      %1091 = vrot.lane.b32.xlu0 %v651, 12
      %v1092 = vpop.permute.xlu0 %1091
      %1093 = vrot.lane.b32.xlu0 %v556, 12
      %v1094 = vpop.permute.xlu0 %1093
      %v1128 = vrot.slane %v651, 1
      %v1129 = vrot.slane %v556, 1
      %v1130 = vsel %vm698, %v1128, %v1129
      %v1131 = vrot.slane %v667, 1
      %v1132 = vsel %vm698, %v1129, %v1131
      %1133 = vrot.lane.b32.xlu0 %v701, 16
      %v1134 = vpop.permute.xlu0 %1133
      %1135 = vrot.lane.b32.xlu0 %v703, 16
      %v1136 = vpop.permute.xlu0 %1135
      %1137 = vrot.lane.b32.xlu0 %v706, 16
      %v1138 = vpop.permute.xlu0 %1137
      %1139 = vrot.lane.b32.xlu0 %v708, 16
      %v1140 = vpop.permute.xlu0 %1139
      %1141 = vrot.lane.b32.xlu0 %v711, 16
      %v1142 = vpop.permute.xlu0 %1141
      %1143 = vrot.lane.b32.xlu0 %v713, 16
      %v1144 = vpop.permute.xlu0 %1143
      %1145 = vrot.lane.b32.xlu0 %v716, 16
      %v1146 = vpop.permute.xlu0 %1145
      %1147 = vrot.lane.b32.xlu0 %v718, 16
      %v1148 = vpop.permute.xlu0 %1147
      %1149 = vrot.lane.b32.xlu0 %v721, 16
      %v1150 = vpop.permute.xlu0 %1149
      %1151 = vrot.lane.b32.xlu0 %v723, 16
      %v1152 = vpop.permute.xlu0 %1151
      %1153 = vrot.lane.b32.xlu0 %v726, 16
      %v1154 = vpop.permute.xlu0 %1153
      %1155 = vrot.lane.b32.xlu0 %v728, 16
      %v1156 = vpop.permute.xlu0 %1155
      %1157 = vrot.lane.b32.xlu0 %v731, 16
      %v1158 = vpop.permute.xlu0 %1157
      %1159 = vrot.lane.b32.xlu0 %v733, 16
      %v1160 = vpop.permute.xlu0 %1159
      %1161 = vrot.lane.b32.xlu0 %v736, 16
      %v1162 = vpop.permute.xlu0 %1161
      %1163 = vrot.lane.b32.xlu0 %v738, 16
      %v1164 = vpop.permute.xlu0 %1163
      %1165 = vrot.lane.b32.xlu0 %v741, 16
      %v1166 = vpop.permute.xlu0 %1165
      %1167 = vrot.lane.b32.xlu0 %v743, 16
      %v1168 = vpop.permute.xlu0 %1167
      %1169 = vrot.lane.b32.xlu0 %v746, 16
      %v1170 = vpop.permute.xlu0 %1169
      %1171 = vrot.lane.b32.xlu0 %v748, 16
      %v1172 = vpop.permute.xlu0 %1171
      %1173 = vrot.lane.b32.xlu0 %v751, 16
      %v1174 = vpop.permute.xlu0 %1173
      %1175 = vrot.lane.b32.xlu0 %v753, 16
      %v1176 = vpop.permute.xlu0 %1175
      %1177 = vrot.lane.b32.xlu0 %v756, 16
      %v1178 = vpop.permute.xlu0 %1177
      %1179 = vrot.lane.b32.xlu0 %v758, 16
      %v1180 = vpop.permute.xlu0 %1179
      %1181 = vrot.lane.b32.xlu0 %v761, 16
      %v1182 = vpop.permute.xlu0 %1181
      %1183 = vrot.lane.b32.xlu0 %v763, 16
      %v1184 = vpop.permute.xlu0 %1183
      %1185 = vrot.lane.b32.xlu0 %v766, 16
      %v1186 = vpop.permute.xlu0 %1185
      %1187 = vrot.lane.b32.xlu0 %v768, 16
      %v1188 = vpop.permute.xlu0 %1187
      %1189 = vrot.lane.b32.xlu0 %v771, 16
      %v1190 = vpop.permute.xlu0 %1189
      %1191 = vrot.lane.b32.xlu0 %v773, 16
      %v1192 = vpop.permute.xlu0 %1191
      %1193 = vrot.lane.b32.xlu0 %v1130, 16
      %v1194 = vpop.permute.xlu0 %1193
      %1195 = vrot.lane.b32.xlu0 %v1132, 16
      %v1196 = vpop.permute.xlu0 %1195
      %v1229 = vrot.slane %v651, 2
      %v1230 = vrot.slane %v556, 2
      %v1231 = vsel %vm864, %v1229, %v1230
      %v1232 = vrot.slane %v667, 2
      %v1233 = vsel %vm864, %v1230, %v1232
      %1234 = vrot.lane.b32.xlu0 %v867, 20
      %v1235 = vpop.permute.xlu0 %1234
      %1236 = vrot.lane.b32.xlu0 %v869, 20
      %v1237 = vpop.permute.xlu0 %1236
      %1238 = vrot.lane.b32.xlu0 %v872, 20
      %v1239 = vpop.permute.xlu0 %1238
      %1240 = vrot.lane.b32.xlu0 %v874, 20
      %v1241 = vpop.permute.xlu0 %1240
      %1242 = vrot.lane.b32.xlu0 %v877, 20
      %v1243 = vpop.permute.xlu0 %1242
      %1244 = vrot.lane.b32.xlu0 %v879, 20
      %v1245 = vpop.permute.xlu0 %1244
      %1246 = vrot.lane.b32.xlu0 %v882, 20
      %v1247 = vpop.permute.xlu0 %1246
      %1248 = vrot.lane.b32.xlu0 %v884, 20
      %v1249 = vpop.permute.xlu0 %1248
      %1250 = vrot.lane.b32.xlu0 %v887, 20
      %v1251 = vpop.permute.xlu0 %1250
      %1252 = vrot.lane.b32.xlu0 %v889, 20
      %v1253 = vpop.permute.xlu0 %1252
      %1254 = vrot.lane.b32.xlu0 %v892, 20
      %v1255 = vpop.permute.xlu0 %1254
      %1256 = vrot.lane.b32.xlu0 %v894, 20
      %v1257 = vpop.permute.xlu0 %1256
      %1258 = vrot.lane.b32.xlu0 %v897, 20
      %v1259 = vpop.permute.xlu0 %1258
      %1260 = vrot.lane.b32.xlu0 %v899, 20
      %v1261 = vpop.permute.xlu0 %1260
      %1262 = vrot.lane.b32.xlu0 %v902, 20
      %v1263 = vpop.permute.xlu0 %1262
      %1264 = vrot.lane.b32.xlu0 %v904, 20
      %v1265 = vpop.permute.xlu0 %1264
      %1266 = vrot.lane.b32.xlu0 %v907, 20
      %v1267 = vpop.permute.xlu0 %1266
      %1268 = vrot.lane.b32.xlu0 %v909, 20
      %v1269 = vpop.permute.xlu0 %1268
      %1270 = vrot.lane.b32.xlu0 %v912, 20
      %v1271 = vpop.permute.xlu0 %1270
      %1272 = vrot.lane.b32.xlu0 %v914, 20
      %v1273 = vpop.permute.xlu0 %1272
      %1274 = vrot.lane.b32.xlu0 %v917, 20
      %v1275 = vpop.permute.xlu0 %1274
      %1276 = vrot.lane.b32.xlu0 %v919, 20
      %v1277 = vpop.permute.xlu0 %1276
      %1278 = vrot.lane.b32.xlu0 %v922, 20
      %v1279 = vpop.permute.xlu0 %1278
      %1280 = vrot.lane.b32.xlu0 %v924, 20
      %v1281 = vpop.permute.xlu0 %1280
      %1282 = vrot.lane.b32.xlu0 %v927, 20
      %v1283 = vpop.permute.xlu0 %1282
      %1284 = vrot.lane.b32.xlu0 %v929, 20
      %v1285 = vpop.permute.xlu0 %1284
      %1286 = vrot.lane.b32.xlu0 %v932, 20
      %v1287 = vpop.permute.xlu0 %1286
      %1288 = vrot.lane.b32.xlu0 %v934, 20
      %v1289 = vpop.permute.xlu0 %1288
      %1290 = vrot.lane.b32.xlu0 %v937, 20
      %v1291 = vpop.permute.xlu0 %1290
      %1292 = vrot.lane.b32.xlu0 %v939, 20
      %v1293 = vpop.permute.xlu0 %1292
      %1294 = vrot.lane.b32.xlu0 %v1231, 20
      %v1295 = vpop.permute.xlu0 %1294
      %1296 = vrot.lane.b32.xlu0 %v1233, 20
      %v1297 = vpop.permute.xlu0 %1296
      %1330 = vrot.lane.b32.xlu0 %v637, 24
      %v1331 = vpop.permute.xlu0 %1330
      %1332 = vrot.lane.b32.xlu0 %v514, 24
      %v1333 = vpop.permute.xlu0 %1332
      %1334 = vrot.lane.b32.xlu0 %v638, 24
      %v1335 = vpop.permute.xlu0 %1334
      %1336 = vrot.lane.b32.xlu0 %v517, 24
      %v1337 = vpop.permute.xlu0 %1336
      %1338 = vrot.lane.b32.xlu0 %v639, 24
      %v1339 = vpop.permute.xlu0 %1338
      %1340 = vrot.lane.b32.xlu0 %v520, 24
      %v1341 = vpop.permute.xlu0 %1340
      %1342 = vrot.lane.b32.xlu0 %v640, 24
      %v1343 = vpop.permute.xlu0 %1342
      %1344 = vrot.lane.b32.xlu0 %v523, 24
      %v1345 = vpop.permute.xlu0 %1344
      %1346 = vrot.lane.b32.xlu0 %v641, 24
      %v1347 = vpop.permute.xlu0 %1346
      %1348 = vrot.lane.b32.xlu0 %v526, 24
      %v1349 = vpop.permute.xlu0 %1348
      %1350 = vrot.lane.b32.xlu0 %v642, 24
      %v1351 = vpop.permute.xlu0 %1350
      %1352 = vrot.lane.b32.xlu0 %v529, 24
      %v1353 = vpop.permute.xlu0 %1352
      %1354 = vrot.lane.b32.xlu0 %v643, 24
      %v1355 = vpop.permute.xlu0 %1354
      %1356 = vrot.lane.b32.xlu0 %v532, 24
      %v1357 = vpop.permute.xlu0 %1356
      %1358 = vrot.lane.b32.xlu0 %v644, 24
      %v1359 = vpop.permute.xlu0 %1358
      %1360 = vrot.lane.b32.xlu0 %v535, 24
      %v1361 = vpop.permute.xlu0 %1360
      %1362 = vrot.lane.b32.xlu0 %v645, 24
      %v1363 = vpop.permute.xlu0 %1362
      %1364 = vrot.lane.b32.xlu0 %v538, 24
      %v1365 = vpop.permute.xlu0 %1364
      %1366 = vrot.lane.b32.xlu0 %v646, 24
      %v1367 = vpop.permute.xlu0 %1366
      %1368 = vrot.lane.b32.xlu0 %v541, 24
      %v1369 = vpop.permute.xlu0 %1368
      %1370 = vrot.lane.b32.xlu0 %v647, 24
      %v1371 = vpop.permute.xlu0 %1370
      %1372 = vrot.lane.b32.xlu0 %v544, 24
      %v1373 = vpop.permute.xlu0 %1372
      %1374 = vrot.lane.b32.xlu0 %v648, 24
      %v1375 = vpop.permute.xlu0 %1374
      %1376 = vrot.lane.b32.xlu0 %v547, 24
      %v1377 = vpop.permute.xlu0 %1376
      %1378 = vrot.lane.b32.xlu0 %v649, 24
      %v1379 = vpop.permute.xlu0 %1378
      %1380 = vrot.lane.b32.xlu0 %v550, 24
      %v1381 = vpop.permute.xlu0 %1380
      %1382 = vrot.lane.b32.xlu0 %v650, 24
      %v1383 = vpop.permute.xlu0 %1382
      %1384 = vrot.lane.b32.xlu0 %v553, 24
      %v1385 = vpop.permute.xlu0 %1384
      %1386 = vrot.lane.b32.xlu0 %v651, 24
      %v1387 = vpop.permute.xlu0 %1386
      %1388 = vrot.lane.b32.xlu0 %v556, 24
      %v1389 = vpop.permute.xlu0 %1388
      %1420 = vrot.lane.b32.xlu0 %v706, 28
      %v1421 = vpop.permute.xlu0 %1420
      %1422 = vrot.lane.b32.xlu0 %v708, 28
      %v1423 = vpop.permute.xlu0 %1422
      %1424 = vrot.lane.b32.xlu0 %v711, 28
      %v1425 = vpop.permute.xlu0 %1424
      %1426 = vrot.lane.b32.xlu0 %v713, 28
      %v1427 = vpop.permute.xlu0 %1426
      %1428 = vrot.lane.b32.xlu0 %v716, 28
      %v1429 = vpop.permute.xlu0 %1428
      %1430 = vrot.lane.b32.xlu0 %v718, 28
      %v1431 = vpop.permute.xlu0 %1430
      %1432 = vrot.lane.b32.xlu0 %v721, 28
      %v1433 = vpop.permute.xlu0 %1432
      %1434 = vrot.lane.b32.xlu0 %v723, 28
      %v1435 = vpop.permute.xlu0 %1434
      %1436 = vrot.lane.b32.xlu0 %v726, 28
      %v1437 = vpop.permute.xlu0 %1436
      %1438 = vrot.lane.b32.xlu0 %v728, 28
      %v1439 = vpop.permute.xlu0 %1438
      %1440 = vrot.lane.b32.xlu0 %v731, 28
      %v1441 = vpop.permute.xlu0 %1440
      %1442 = vrot.lane.b32.xlu0 %v733, 28
      %v1443 = vpop.permute.xlu0 %1442
      %1444 = vrot.lane.b32.xlu0 %v736, 28
      %v1445 = vpop.permute.xlu0 %1444
      %1446 = vrot.lane.b32.xlu0 %v738, 28
      %v1447 = vpop.permute.xlu0 %1446
      %1448 = vrot.lane.b32.xlu0 %v741, 28
      %v1449 = vpop.permute.xlu0 %1448
      %1450 = vrot.lane.b32.xlu0 %v743, 28
      %v1451 = vpop.permute.xlu0 %1450
      %1452 = vrot.lane.b32.xlu0 %v746, 28
      %v1453 = vpop.permute.xlu0 %1452
      %1454 = vrot.lane.b32.xlu0 %v748, 28
      %v1455 = vpop.permute.xlu0 %1454
      %1456 = vrot.lane.b32.xlu0 %v751, 28
      %v1457 = vpop.permute.xlu0 %1456
      %1458 = vrot.lane.b32.xlu0 %v753, 28
      %v1459 = vpop.permute.xlu0 %1458
      %1460 = vrot.lane.b32.xlu0 %v756, 28
      %v1461 = vpop.permute.xlu0 %1460
      %1462 = vrot.lane.b32.xlu0 %v758, 28
      %v1463 = vpop.permute.xlu0 %1462
      %1464 = vrot.lane.b32.xlu0 %v761, 28
      %v1465 = vpop.permute.xlu0 %1464
      %1466 = vrot.lane.b32.xlu0 %v763, 28
      %v1467 = vpop.permute.xlu0 %1466
      %1468 = vrot.lane.b32.xlu0 %v766, 28
      %v1469 = vpop.permute.xlu0 %1468
      %1470 = vrot.lane.b32.xlu0 %v768, 28
      %v1471 = vpop.permute.xlu0 %1470
      %1472 = vrot.lane.b32.xlu0 %v771, 28
      %v1473 = vpop.permute.xlu0 %1472
      %1474 = vrot.lane.b32.xlu0 %v773, 28
      %v1475 = vpop.permute.xlu0 %1474
      %1476 = vrot.lane.b32.xlu0 %v1130, 28
      %v1477 = vpop.permute.xlu0 %1476
      %1478 = vrot.lane.b32.xlu0 %v1132, 28
      %v1479 = vpop.permute.xlu0 %1478
      %1510 = vrot.lane.b32.xlu0 %v872, 32
      %v1511 = vpop.permute.xlu0 %1510
      %1512 = vrot.lane.b32.xlu0 %v874, 32
      %v1513 = vpop.permute.xlu0 %1512
      %1514 = vrot.lane.b32.xlu0 %v877, 32
      %v1515 = vpop.permute.xlu0 %1514
      %1516 = vrot.lane.b32.xlu0 %v879, 32
      %v1517 = vpop.permute.xlu0 %1516
      %1518 = vrot.lane.b32.xlu0 %v882, 32
      %v1519 = vpop.permute.xlu0 %1518
      %1520 = vrot.lane.b32.xlu0 %v884, 32
      %v1521 = vpop.permute.xlu0 %1520
      %1522 = vrot.lane.b32.xlu0 %v887, 32
      %v1523 = vpop.permute.xlu0 %1522
      %1524 = vrot.lane.b32.xlu0 %v889, 32
      %v1525 = vpop.permute.xlu0 %1524
      %1526 = vrot.lane.b32.xlu0 %v892, 32
      %v1527 = vpop.permute.xlu0 %1526
      %1528 = vrot.lane.b32.xlu0 %v894, 32
      %v1529 = vpop.permute.xlu0 %1528
      %1530 = vrot.lane.b32.xlu0 %v897, 32
      %v1531 = vpop.permute.xlu0 %1530
      %1532 = vrot.lane.b32.xlu0 %v899, 32
      %v1533 = vpop.permute.xlu0 %1532
      %1534 = vrot.lane.b32.xlu0 %v902, 32
      %v1535 = vpop.permute.xlu0 %1534
      %1536 = vrot.lane.b32.xlu0 %v904, 32
      %v1537 = vpop.permute.xlu0 %1536
      %1538 = vrot.lane.b32.xlu0 %v907, 32
      %v1539 = vpop.permute.xlu0 %1538
      %1540 = vrot.lane.b32.xlu0 %v909, 32
      %v1541 = vpop.permute.xlu0 %1540
      %1542 = vrot.lane.b32.xlu0 %v912, 32
      %v1543 = vpop.permute.xlu0 %1542
      %1544 = vrot.lane.b32.xlu0 %v914, 32
      %v1545 = vpop.permute.xlu0 %1544
      %1546 = vrot.lane.b32.xlu0 %v917, 32
      %v1547 = vpop.permute.xlu0 %1546
      %1548 = vrot.lane.b32.xlu0 %v919, 32
      %v1549 = vpop.permute.xlu0 %1548
      %1550 = vrot.lane.b32.xlu0 %v922, 32
      %v1551 = vpop.permute.xlu0 %1550
      %1552 = vrot.lane.b32.xlu0 %v924, 32
      %v1553 = vpop.permute.xlu0 %1552
      %1554 = vrot.lane.b32.xlu0 %v927, 32
      %v1555 = vpop.permute.xlu0 %1554
      %1556 = vrot.lane.b32.xlu0 %v929, 32
      %v1557 = vpop.permute.xlu0 %1556
      %1558 = vrot.lane.b32.xlu0 %v932, 32
      %v1559 = vpop.permute.xlu0 %1558
      %1560 = vrot.lane.b32.xlu0 %v934, 32
      %v1561 = vpop.permute.xlu0 %1560
      %1562 = vrot.lane.b32.xlu0 %v937, 32
      %v1563 = vpop.permute.xlu0 %1562
      %1564 = vrot.lane.b32.xlu0 %v939, 32
      %v1565 = vpop.permute.xlu0 %1564
      %1566 = vrot.lane.b32.xlu0 %v1231, 32
      %v1567 = vpop.permute.xlu0 %1566
      %1568 = vrot.lane.b32.xlu0 %v1233, 32
      %v1569 = vpop.permute.xlu0 %1568
      %vm1600 = vcmask 31744
      %v1601 = vsel %vm1600, %v636, %v775
      %v1602 = vsel %vm1600, %v511, %v777
      %v1603 = vsel %vm1600, %v637, %v779
      %v1604 = vsel %vm1600, %v514, %v781
      %v1605 = vsel %vm1600, %v638, %v783
      %v1606 = vsel %vm1600, %v517, %v785
      %v1607 = vsel %vm1600, %v639, %v787
      %v1608 = vsel %vm1600, %v520, %v789
      %v1609 = vsel %vm1600, %v640, %v791
      %v1610 = vsel %vm1600, %v523, %v793
      %v1611 = vsel %vm1600, %v641, %v795
      %v1612 = vsel %vm1600, %v526, %v797
      %v1613 = vsel %vm1600, %v642, %v799
      %v1614 = vsel %vm1600, %v529, %v801
      %v1615 = vsel %vm1600, %v643, %v803
      %v1616 = vsel %vm1600, %v532, %v805
      %v1617 = vsel %vm1600, %v644, %v807
      %v1618 = vsel %vm1600, %v535, %v809
      %v1619 = vsel %vm1600, %v645, %v811
      %v1620 = vsel %vm1600, %v538, %v813
      %v1621 = vsel %vm1600, %v646, %v815
      %v1622 = vsel %vm1600, %v541, %v817
      %v1623 = vsel %vm1600, %v647, %v819
      %v1624 = vsel %vm1600, %v544, %v821
      %v1625 = vsel %vm1600, %v648, %v823
      %v1626 = vsel %vm1600, %v547, %v825
      %v1627 = vsel %vm1600, %v649, %v827
      %v1628 = vsel %vm1600, %v550, %v829
      %v1629 = vsel %vm1600, %v650, %v831
      %v1630 = vsel %vm1600, %v553, %v833
      %vm1631 = vcmask 64512
      %v1632 = vsel %vm1631, %v1601, %v941
      %v1633 = vsel %vm1631, %v1602, %v943
      %v1634 = vsel %vm1631, %v1603, %v945
      %v1635 = vsel %vm1631, %v1604, %v947
      %v1636 = vsel %vm1631, %v1605, %v949
      %v1637 = vsel %vm1631, %v1606, %v951
      %v1638 = vsel %vm1631, %v1607, %v953
      %v1639 = vsel %vm1631, %v1608, %v955
      %v1640 = vsel %vm1631, %v1609, %v957
      %v1641 = vsel %vm1631, %v1610, %v959
      %v1642 = vsel %vm1631, %v1611, %v961
      %v1643 = vsel %vm1631, %v1612, %v963
      %v1644 = vsel %vm1631, %v1613, %v965
      %v1645 = vsel %vm1631, %v1614, %v967
      %v1646 = vsel %vm1631, %v1615, %v969
      %v1647 = vsel %vm1631, %v1616, %v971
      %v1648 = vsel %vm1631, %v1617, %v973
      %v1649 = vsel %vm1631, %v1618, %v975
      %v1650 = vsel %vm1631, %v1619, %v977
      %v1651 = vsel %vm1631, %v1620, %v979
      %v1652 = vsel %vm1631, %v1621, %v981
      %v1653 = vsel %vm1631, %v1622, %v983
      %v1654 = vsel %vm1631, %v1623, %v985
      %v1655 = vsel %vm1631, %v1624, %v987
      %v1656 = vsel %vm1631, %v1625, %v989
      %v1657 = vsel %vm1631, %v1626, %v991
      %v1658 = vsel %vm1631, %v1627, %v993
      %v1659 = vsel %vm1631, %v1628, %v995
      %v1660 = vsel %vm1631, %v1629, %v997
      %v1661 = vsel %vm1631, %v1630, %v999
      %vm1662 = vcmask 97280
      %v1663 = vsel %vm1662, %v1632, %v1032
      %v1664 = vsel %vm1662, %v1633, %v1034
      %v1665 = vsel %vm1662, %v1632, %v1036
      %v1666 = vsel %vm1662, %v1633, %v1038
      %v1667 = vsel %vm1662, %v1634, %v1040
      %v1668 = vsel %vm1662, %v1635, %v1042
      %v1669 = vsel %vm1662, %v1636, %v1044
      %v1670 = vsel %vm1662, %v1637, %v1046
      %v1671 = vsel %vm1662, %v1638, %v1048
      %v1672 = vsel %vm1662, %v1639, %v1050
      %v1673 = vsel %vm1662, %v1640, %v1052
      %v1674 = vsel %vm1662, %v1641, %v1054
      %v1675 = vsel %vm1662, %v1642, %v1056
      %v1676 = vsel %vm1662, %v1643, %v1058
      %v1677 = vsel %vm1662, %v1644, %v1060
      %v1678 = vsel %vm1662, %v1645, %v1062
      %v1679 = vsel %vm1662, %v1646, %v1064
      %v1680 = vsel %vm1662, %v1647, %v1066
      %v1681 = vsel %vm1662, %v1648, %v1068
      %v1682 = vsel %vm1662, %v1649, %v1070
      %v1683 = vsel %vm1662, %v1650, %v1072
      %v1684 = vsel %vm1662, %v1651, %v1074
      %v1685 = vsel %vm1662, %v1652, %v1076
      %v1686 = vsel %vm1662, %v1653, %v1078
      %v1687 = vsel %vm1662, %v1654, %v1080
      %v1688 = vsel %vm1662, %v1655, %v1082
      %v1689 = vsel %vm1662, %v1656, %v1084
      %v1690 = vsel %vm1662, %v1657, %v1086
      %v1691 = vsel %vm1662, %v1658, %v1088
      %v1692 = vsel %vm1662, %v1659, %v1090
      %v1693 = vsel %vm1662, %v1660, %v1092
      %v1694 = vsel %vm1662, %v1661, %v1094
      %vm1695 = vcmask 130048
      %v1696 = vsel %vm1695, %v1663, %v1134
      %v1697 = vsel %vm1695, %v1664, %v1136
      %v1698 = vsel %vm1695, %v1665, %v1138
      %v1699 = vsel %vm1695, %v1666, %v1140
      %v1700 = vsel %vm1695, %v1667, %v1142
      %v1701 = vsel %vm1695, %v1668, %v1144
      %v1702 = vsel %vm1695, %v1669, %v1146
      %v1703 = vsel %vm1695, %v1670, %v1148
      %v1704 = vsel %vm1695, %v1671, %v1150
      %v1705 = vsel %vm1695, %v1672, %v1152
      %v1706 = vsel %vm1695, %v1673, %v1154
      %v1707 = vsel %vm1695, %v1674, %v1156
      %v1708 = vsel %vm1695, %v1675, %v1158
      %v1709 = vsel %vm1695, %v1676, %v1160
      %v1710 = vsel %vm1695, %v1677, %v1162
      %v1711 = vsel %vm1695, %v1678, %v1164
      %v1712 = vsel %vm1695, %v1679, %v1166
      %v1713 = vsel %vm1695, %v1680, %v1168
      %v1714 = vsel %vm1695, %v1681, %v1170
      %v1715 = vsel %vm1695, %v1682, %v1172
      %v1716 = vsel %vm1695, %v1683, %v1174
      %v1717 = vsel %vm1695, %v1684, %v1176
      %v1718 = vsel %vm1695, %v1685, %v1178
      %v1719 = vsel %vm1695, %v1686, %v1180
      %v1720 = vsel %vm1695, %v1687, %v1182
      %v1721 = vsel %vm1695, %v1688, %v1184
      %v1722 = vsel %vm1695, %v1689, %v1186
      %v1723 = vsel %vm1695, %v1690, %v1188
      %v1724 = vsel %vm1695, %v1691, %v1190
      %v1725 = vsel %vm1695, %v1692, %v1192
      %v1726 = vsel %vm1695, %v1693, %v1194
      %v1727 = vsel %vm1695, %v1694, %v1196
      %vm1728 = vcmask 162816
      %v1729 = vsel %vm1728, %v1696, %v1235
      %v1730 = vsel %vm1728, %v1697, %v1237
      %v1731 = vsel %vm1728, %v1698, %v1239
      %v1732 = vsel %vm1728, %v1699, %v1241
      %v1733 = vsel %vm1728, %v1700, %v1243
      %v1734 = vsel %vm1728, %v1701, %v1245
      %v1735 = vsel %vm1728, %v1702, %v1247
      %v1736 = vsel %vm1728, %v1703, %v1249
      %v1737 = vsel %vm1728, %v1704, %v1251
      %v1738 = vsel %vm1728, %v1705, %v1253
      %v1739 = vsel %vm1728, %v1706, %v1255
      %v1740 = vsel %vm1728, %v1707, %v1257
      %v1741 = vsel %vm1728, %v1708, %v1259
      %v1742 = vsel %vm1728, %v1709, %v1261
      %v1743 = vsel %vm1728, %v1710, %v1263
      %v1744 = vsel %vm1728, %v1711, %v1265
      %v1745 = vsel %vm1728, %v1712, %v1267
      %v1746 = vsel %vm1728, %v1713, %v1269
      %v1747 = vsel %vm1728, %v1714, %v1271
      %v1748 = vsel %vm1728, %v1715, %v1273
      %v1749 = vsel %vm1728, %v1716, %v1275
      %v1750 = vsel %vm1728, %v1717, %v1277
      %v1751 = vsel %vm1728, %v1718, %v1279
      %v1752 = vsel %vm1728, %v1719, %v1281
      %v1753 = vsel %vm1728, %v1720, %v1283
      %v1754 = vsel %vm1728, %v1721, %v1285
      %v1755 = vsel %vm1728, %v1722, %v1287
      %v1756 = vsel %vm1728, %v1723, %v1289
      %v1757 = vsel %vm1728, %v1724, %v1291
      %v1758 = vsel %vm1728, %v1725, %v1293
      %v1759 = vsel %vm1728, %v1726, %v1295
      %v1760 = vsel %vm1728, %v1727, %v1297
      %vm1761 = vcmask 195584
      %v1762 = vsel %vm1761, %v1729, %v1331
      %v1763 = vsel %vm1761, %v1730, %v1333
      %v1764 = vsel %vm1761, %v1731, %v1335
      %v1765 = vsel %vm1761, %v1732, %v1337
      %v1766 = vsel %vm1761, %v1733, %v1339
      %v1767 = vsel %vm1761, %v1734, %v1341
      %v1768 = vsel %vm1761, %v1735, %v1343
      %v1769 = vsel %vm1761, %v1736, %v1345
      %v1770 = vsel %vm1761, %v1737, %v1347
      %v1771 = vsel %vm1761, %v1738, %v1349
      %v1772 = vsel %vm1761, %v1739, %v1351
      %v1773 = vsel %vm1761, %v1740, %v1353
      %v1774 = vsel %vm1761, %v1741, %v1355
      %v1775 = vsel %vm1761, %v1742, %v1357
      %v1776 = vsel %vm1761, %v1743, %v1359
      %v1777 = vsel %vm1761, %v1744, %v1361
      %v1778 = vsel %vm1761, %v1745, %v1363
      %v1779 = vsel %vm1761, %v1746, %v1365
      %v1780 = vsel %vm1761, %v1747, %v1367
      %v1781 = vsel %vm1761, %v1748, %v1369
      %v1782 = vsel %vm1761, %v1749, %v1371
      %v1783 = vsel %vm1761, %v1750, %v1373
      %v1784 = vsel %vm1761, %v1751, %v1375
      %v1785 = vsel %vm1761, %v1752, %v1377
      %v1786 = vsel %vm1761, %v1753, %v1379
      %v1787 = vsel %vm1761, %v1754, %v1381
      %v1788 = vsel %vm1761, %v1755, %v1383
      %v1789 = vsel %vm1761, %v1756, %v1385
      %v1790 = vsel %vm1761, %v1757, %v1387
      %v1791 = vsel %vm1761, %v1758, %v1389
      %v1792 = vsel %vm1761, %v1759, %v1387
      %v1793 = vsel %vm1761, %v1760, %v1389
      %vm1794 = vcmask 228352
      %v1795 = vsel %vm1794, %v1762, %v1421
      %v1796 = vsel %vm1794, %v1763, %v1423
      %v1797 = vsel %vm1794, %v1764, %v1425
      %v1798 = vsel %vm1794, %v1765, %v1427
      %v1799 = vsel %vm1794, %v1766, %v1429
      %v1800 = vsel %vm1794, %v1767, %v1431
      %v1801 = vsel %vm1794, %v1768, %v1433
      %v1802 = vsel %vm1794, %v1769, %v1435
      %v1803 = vsel %vm1794, %v1770, %v1437
      %v1804 = vsel %vm1794, %v1771, %v1439
      %v1805 = vsel %vm1794, %v1772, %v1441
      %v1806 = vsel %vm1794, %v1773, %v1443
      %v1807 = vsel %vm1794, %v1774, %v1445
      %v1808 = vsel %vm1794, %v1775, %v1447
      %v1809 = vsel %vm1794, %v1776, %v1449
      %v1810 = vsel %vm1794, %v1777, %v1451
      %v1811 = vsel %vm1794, %v1778, %v1453
      %v1812 = vsel %vm1794, %v1779, %v1455
      %v1813 = vsel %vm1794, %v1780, %v1457
      %v1814 = vsel %vm1794, %v1781, %v1459
      %v1815 = vsel %vm1794, %v1782, %v1461
      %v1816 = vsel %vm1794, %v1783, %v1463
      %v1817 = vsel %vm1794, %v1784, %v1465
      %v1818 = vsel %vm1794, %v1785, %v1467
      %v1819 = vsel %vm1794, %v1786, %v1469
      %v1820 = vsel %vm1794, %v1787, %v1471
      %v1821 = vsel %vm1794, %v1788, %v1473
      %v1822 = vsel %vm1794, %v1789, %v1475
      %v1823 = vsel %vm1794, %v1790, %v1477
      %v1824 = vsel %vm1794, %v1791, %v1479
      %v1825 = vsel %vm1794, %v1792, %v1477
      %v1826 = vsel %vm1794, %v1793, %v1479
      %vm1827 = vcmask 261120
      %v1828 = vsel %vm1827, %v1795, %v1511
      %v1829 = vsel %vm1827, %v1796, %v1513
      %v1830 = vsel %vm1827, %v1797, %v1515
      %v1831 = vsel %vm1827, %v1798, %v1517
      %v1832 = vsel %vm1827, %v1799, %v1519
      %v1833 = vsel %vm1827, %v1800, %v1521
      %v1834 = vsel %vm1827, %v1801, %v1523
      %v1835 = vsel %vm1827, %v1802, %v1525
      %v1836 = vsel %vm1827, %v1803, %v1527
      %v1837 = vsel %vm1827, %v1804, %v1529
      %v1838 = vsel %vm1827, %v1805, %v1531
      %v1839 = vsel %vm1827, %v1806, %v1533
      %v1840 = vsel %vm1827, %v1807, %v1535
      %v1841 = vsel %vm1827, %v1808, %v1537
      %v1842 = vsel %vm1827, %v1809, %v1539
      %v1843 = vsel %vm1827, %v1810, %v1541
      %v1844 = vsel %vm1827, %v1811, %v1543
      %v1845 = vsel %vm1827, %v1812, %v1545
      %v1846 = vsel %vm1827, %v1813, %v1547
      %v1847 = vsel %vm1827, %v1814, %v1549
      %v1848 = vsel %vm1827, %v1815, %v1551
      %v1849 = vsel %vm1827, %v1816, %v1553
      %v1850 = vsel %vm1827, %v1817, %v1555
      %v1851 = vsel %vm1827, %v1818, %v1557
      %v1852 = vsel %vm1827, %v1819, %v1559
      %v1853 = vsel %vm1827, %v1820, %v1561
      %v1854 = vsel %vm1827, %v1821, %v1563
      %v1855 = vsel %vm1827, %v1822, %v1565
      %v1856 = vsel %vm1827, %v1823, %v1567
      %v1857 = vsel %vm1827, %v1824, %v1569
      %v1858 = vsel %vm1827, %v1825, %v1567
      %v1859 = vsel %vm1827, %v1826, %v1569
      %v1860 = vld [vmem:[%s1] sm:$0xff]
      %v1861 = vld [vmem:[%s1 + $0x8] sm:$0xff]
      %v1862 = vld [vmem:[%s1 + $0x10] sm:$0xff]
      %v1863 = vld [vmem:[%s1 + $0x18] sm:$0xff]
      %v1864 = vld [vmem:[%s1 + $0x20] sm:$0xf]
      %v1865 = vld [vmem:[%s423] sm:$0x1]
      %v1867 = vlaneseq
      %v1868 = vshrl.u32 %v1867, 7
      %v1869 = vsub.s32 0, %v1868
      %v1870 = vrot.slane %v1865, %v1869
      %vm1872 = vcmask 293888
      %v1874 = vsel %vm1872, %v1828, 0
      %v1877 = vsel %vm1872, %v1829, 0
      %v1880 = vsel %vm1872, %v1830, 0
      %v1883 = vsel %vm1872, %v1831, 0
      %v1886 = vsel %vm1872, %v1832, 0
      %v1889 = vsel %vm1872, %v1833, 0
      %v1892 = vsel %vm1872, %v1834, 0
      %v1895 = vsel %vm1872, %v1835, 0
      %v1898 = vsel %vm1872, %v1836, 0
      %v1901 = vsel %vm1872, %v1837, 0
      %v1904 = vsel %vm1872, %v1838, 0
      %v1907 = vsel %vm1872, %v1839, 0
      %v1910 = vsel %vm1872, %v1840, 0
      %v1913 = vsel %vm1872, %v1841, 0
      %v1916 = vsel %vm1872, %v1842, 0
      %v1919 = vsel %vm1872, %v1843, 0
      %v1922 = vsel %vm1872, %v1844, 0
      %v1925 = vsel %vm1872, %v1845, 0
      %v1928 = vsel %vm1872, %v1846, 0
      %v1931 = vsel %vm1872, %v1847, 0
      %v1934 = vsel %vm1872, %v1848, 0
      %v1937 = vsel %vm1872, %v1849, 0
      %v1940 = vsel %vm1872, %v1850, 0
      %v1943 = vsel %vm1872, %v1851, 0
      %v1946 = vsel %vm1872, %v1852, 0
      %v1949 = vsel %vm1872, %v1853, 0
      %v1952 = vsel %vm1872, %v1854, 0
      %v1955 = vsel %vm1872, %v1855, 0
      %v1958 = vsel %vm1872, %v1856, 0
      %v1961 = vsel %vm1872, %v1857, 0
      %v1964 = vsel %vm1872, %v1858, 0
      %v1967 = vsel %vm1872, %v1859, 0
      %vm1969 = vcmask 1043456
      %v1971 = vsel %vm1969, %v1864, 0
      %1973 = vmatprep.subr.mxu0 0.0
      %1974 = vmatpush1.msra.mxu0 %v1860
      %1975 = vmatprep.subr.mxu0 0.0
      %1976 = vmatpush1.msra.mxu0 %v1861
      %1977 = vmatprep.subr.mxu0 0.0
      %1978 = vmatpush1.msra.mxu0 %v1862
      %1979 = vmatprep.subr.mxu0 0.0
      %1980 = vmatpush1.msra.mxu0 %v1863
      %1981 = vmatprep.subr.mxu0 0.0
      %1982 = vmatpush1.msra.mxu0 %v1971
      %1983 = vmatprep.subr.mxu0 0.0
      %1984 = vmatpush1.msra.mxu0 0.0
      %1985 = vmatprep.subr.mxu0 0.0
      %1986 = vmatpush1.msra.mxu0 0.0
      %1987 = vmatprep.subr.mxu0 0.0
      %1988 = vmatpush1.msra.mxu0 0.0
      %1989 = vmatprep.subr.mxu0 0.0
      %1990 = vmatpush1.msra.mxu0 0.0
      %1991 = vmatprep.subr.mxu0 0.0
      %1992 = vmatpush1.msra.mxu0 0.0
      %1993 = vmatprep.subr.mxu0 0.0
      %1994 = vmatpush1.msra.mxu0 0.0
      %1995 = vmatprep.subr.mxu0 0.0
      %1996 = vmatpush1.msra.mxu0 0.0
      %1997 = vmatprep.subr.mxu0 0.0
      %1998 = vmatpush1.msra.mxu0 0.0
      %1999 = vmatprep.subr.mxu0 0.0
      %2000 = vmatpush1.msra.mxu0 0.0
      %2001 = vmatprep.subr.mxu0 0.0
      %2002 = vmatpush1.msra.mxu0 0.0
      %2003 = vmatprep.subr.mxu0 0.0
      %2004 = vmatpush1.msra.mxu0 0.0
      %2005 = vmatprep.subr.mxu0 0.0
      %2006 = vmatpush1.msra.mxu0 0.0
      %2007 = vmatprep.subr.mxu0 0.0
      %2008 = vmatpush1.msra.mxu0 0.0
      %2009 = vmatprep.subr.mxu0 0.0
      %2010 = vmatpush1.msra.mxu0 0.0
      %2011 = vmatprep.subr.mxu0 0.0
      %2012 = vmatpush1.msra.mxu0 0.0
      %2013 = vmatprep.subr.mxu0 0.0
      %2014 = vmatpush1.msra.mxu0 0.0
      %2015 = vmatprep.subr.mxu0 0.0
      %2016 = vmatpush1.msra.mxu0 0.0
      %2017 = vmatprep.subr.mxu0 0.0
      %2018 = vmatpush1.msra.mxu0 0.0
      %2019 = vmatprep.subr.mxu0 0.0
      %2020 = vmatpush1.msra.mxu0 0.0
      %2021 = vmatprep.subr.mxu0 0.0
      %2022 = vmatpush1.msra.mxu0 0.0
      %2023 = vmatprep.subr.mxu0 0.0
      %2024 = vmatpush1.msra.mxu0 0.0
      %2025 = vmatprep.subr.mxu0 0.0
      %2026 = vmatpush1.msra.mxu0 0.0
      %2027 = vmatprep.subr.mxu0 0.0
      %2028 = vmatpush1.msra.mxu0 0.0
      %2029 = vmatprep.subr.mxu0 0.0
      %2030 = vmatpush1.msra.mxu0 0.0
      %2031 = vmatprep.subr.mxu0 0.0
      %2032 = vmatpush1.msra.mxu0 0.0
      %2033 = vmatprep.subr.mxu0 0.0
      %2034 = vmatpush1.msra.mxu0 0.0
      %2035 = vmatprep.subr.mxu0 0.0
      %2036 = vmatpush1.msra.mxu0 0.0
      %2037 = vmatprep.mubr.f32.mxu0 0.0
      %2038 = vmatmul.mubr.f32.gmra.mrb[0].mxu0 %v1874
      %v2039 = vpop.f32.mrb[0].mxu0
      %v2040 = vadd.f32 %v1870, %v2039
      %v2041 = vpop.f32.mrb[0].mxu0
      %2042 = vmatprep.mubr.f32.mxu0 0.0
      %2043 = vmatmul.mubr.f32.gmra.mrb[0].mxu0 %v1877
      %v2044 = vpop.f32.mrb[0].mxu0
      %v2045 = vadd.f32 %v1870, %v2044
      %v2046 = vpop.f32.mrb[0].mxu0
      %2047 = vmatprep.mubr.f32.mxu0 0.0
      %2048 = vmatmul.mubr.f32.gmra.mrb[0].mxu0 %v1880
      %v2049 = vpop.f32.mrb[0].mxu0
      %v2050 = vadd.f32 %v1870, %v2049
      %v2051 = vpop.f32.mrb[0].mxu0
      %2052 = vmatprep.mubr.f32.mxu0 0.0
      %2053 = vmatmul.mubr.f32.gmra.mrb[0].mxu0 %v1883
      %v2054 = vpop.f32.mrb[0].mxu0
      %v2055 = vadd.f32 %v1870, %v2054
      %v2056 = vpop.f32.mrb[0].mxu0
      %2057 = vmatprep.mubr.f32.mxu0 0.0
      %2058 = vmatmul.mubr.f32.gmra.mrb[0].mxu0 %v1886
      %v2059 = vpop.f32.mrb[0].mxu0
      %v2060 = vadd.f32 %v1870, %v2059
      %v2061 = vpop.f32.mrb[0].mxu0
      %2062 = vmatprep.mubr.f32.mxu0 0.0
      %2063 = vmatmul.mubr.f32.gmra.mrb[0].mxu0 %v1889
      %v2064 = vpop.f32.mrb[0].mxu0
      %v2065 = vadd.f32 %v1870, %v2064
      %v2066 = vpop.f32.mrb[0].mxu0
      %2067 = vmatprep.mubr.f32.mxu0 0.0
      %2068 = vmatmul.mubr.f32.gmra.mrb[0].mxu0 %v1892
      %v2069 = vpop.f32.mrb[0].mxu0
      %v2070 = vadd.f32 %v1870, %v2069
      %v2071 = vpop.f32.mrb[0].mxu0
      %2072 = vmatprep.mubr.f32.mxu0 0.0
      %2073 = vmatmul.mubr.f32.gmra.mrb[0].mxu0 %v1895
      %v2074 = vpop.f32.mrb[0].mxu0
      %v2075 = vadd.f32 %v1870, %v2074
      %v2076 = vpop.f32.mrb[0].mxu0
      %2077 = vmatprep.mubr.f32.mxu0 0.0
      %2078 = vmatmul.mubr.f32.gmra.mrb[0].mxu0 %v1898
      %v2079 = vpop.f32.mrb[0].mxu0
      %v2080 = vadd.f32 %v1870, %v2079
      %v2081 = vpop.f32.mrb[0].mxu0
      %2082 = vmatprep.mubr.f32.mxu0 0.0
      %2083 = vmatmul.mubr.f32.gmra.mrb[0].mxu0 %v1901
      %v2084 = vpop.f32.mrb[0].mxu0
      %v2085 = vadd.f32 %v1870, %v2084
      %v2086 = vpop.f32.mrb[0].mxu0
      %2087 = vmatprep.mubr.f32.mxu0 0.0
      %2088 = vmatmul.mubr.f32.gmra.mrb[0].mxu0 %v1904
      %v2089 = vpop.f32.mrb[0].mxu0
      %v2090 = vadd.f32 %v1870, %v2089
      %v2091 = vpop.f32.mrb[0].mxu0
      %2092 = vmatprep.mubr.f32.mxu0 0.0
      %2093 = vmatmul.mubr.f32.gmra.mrb[0].mxu0 %v1907
      %v2094 = vpop.f32.mrb[0].mxu0
      %v2095 = vadd.f32 %v1870, %v2094
      %v2096 = vpop.f32.mrb[0].mxu0
      %2097 = vmatprep.mubr.f32.mxu0 0.0
      %2098 = vmatmul.mubr.f32.gmra.mrb[0].mxu0 %v1910
      %v2099 = vpop.f32.mrb[0].mxu0
      %v2100 = vadd.f32 %v1870, %v2099
      %v2101 = vpop.f32.mrb[0].mxu0
      %2102 = vmatprep.mubr.f32.mxu0 0.0
      %2103 = vmatmul.mubr.f32.gmra.mrb[0].mxu0 %v1913
      %v2104 = vpop.f32.mrb[0].mxu0
      %v2105 = vadd.f32 %v1870, %v2104
      %v2106 = vpop.f32.mrb[0].mxu0
      %2107 = vmatprep.mubr.f32.mxu0 0.0
      %2108 = vmatmul.mubr.f32.gmra.mrb[0].mxu0 %v1916
      %v2109 = vpop.f32.mrb[0].mxu0
      %v2110 = vadd.f32 %v1870, %v2109
      %v2111 = vpop.f32.mrb[0].mxu0
      %2112 = vmatprep.mubr.f32.mxu0 0.0
      %2113 = vmatmul.mubr.f32.gmra.mrb[0].mxu0 %v1919
      %v2114 = vpop.f32.mrb[0].mxu0
      %v2115 = vadd.f32 %v1870, %v2114
      %v2116 = vpop.f32.mrb[0].mxu0
      %2117 = vmatprep.mubr.f32.mxu0 0.0
      %2118 = vmatmul.mubr.f32.gmra.mrb[0].mxu0 %v1922
      %v2119 = vpop.f32.mrb[0].mxu0
      %v2120 = vadd.f32 %v1870, %v2119
      %v2121 = vpop.f32.mrb[0].mxu0
      %2122 = vmatprep.mubr.f32.mxu0 0.0
      %2123 = vmatmul.mubr.f32.gmra.mrb[0].mxu0 %v1925
      %v2124 = vpop.f32.mrb[0].mxu0
      %v2125 = vadd.f32 %v1870, %v2124
      %v2126 = vpop.f32.mrb[0].mxu0
      %2127 = vmatprep.mubr.f32.mxu0 0.0
      %2128 = vmatmul.mubr.f32.gmra.mrb[0].mxu0 %v1928
      %v2129 = vpop.f32.mrb[0].mxu0
      %v2130 = vadd.f32 %v1870, %v2129
      %v2131 = vpop.f32.mrb[0].mxu0
      %2132 = vmatprep.mubr.f32.mxu0 0.0
      %2133 = vmatmul.mubr.f32.gmra.mrb[0].mxu0 %v1931
      %v2134 = vpop.f32.mrb[0].mxu0
      %v2135 = vadd.f32 %v1870, %v2134
      %v2136 = vpop.f32.mrb[0].mxu0
      %2137 = vmatprep.mubr.f32.mxu0 0.0
      %2138 = vmatmul.mubr.f32.gmra.mrb[0].mxu0 %v1934
      %v2139 = vpop.f32.mrb[0].mxu0
      %v2140 = vadd.f32 %v1870, %v2139
      %v2141 = vpop.f32.mrb[0].mxu0
      %2142 = vmatprep.mubr.f32.mxu0 0.0
      %2143 = vmatmul.mubr.f32.gmra.mrb[0].mxu0 %v1937
      %v2144 = vpop.f32.mrb[0].mxu0
      %v2145 = vadd.f32 %v1870, %v2144
      %v2146 = vpop.f32.mrb[0].mxu0
      %2147 = vmatprep.mubr.f32.mxu0 0.0
      %2148 = vmatmul.mubr.f32.gmra.mrb[0].mxu0 %v1940
      %v2149 = vpop.f32.mrb[0].mxu0
      %v2150 = vadd.f32 %v1870, %v2149
      %v2151 = vpop.f32.mrb[0].mxu0
      %2152 = vmatprep.mubr.f32.mxu0 0.0
      %2153 = vmatmul.mubr.f32.gmra.mrb[0].mxu0 %v1943
      %v2154 = vpop.f32.mrb[0].mxu0
      %v2155 = vadd.f32 %v1870, %v2154
      %v2156 = vpop.f32.mrb[0].mxu0
      %2157 = vmatprep.mubr.f32.mxu0 0.0
      %2158 = vmatmul.mubr.f32.gmra.mrb[0].mxu0 %v1946
      %v2159 = vpop.f32.mrb[0].mxu0
      %v2160 = vadd.f32 %v1870, %v2159
      %v2161 = vpop.f32.mrb[0].mxu0
      %2162 = vmatprep.mubr.f32.mxu0 0.0
      %2163 = vmatmul.mubr.f32.gmra.mrb[0].mxu0 %v1949
      %v2164 = vpop.f32.mrb[0].mxu0
      %v2165 = vadd.f32 %v1870, %v2164
      %v2166 = vpop.f32.mrb[0].mxu0
      %2167 = vmatprep.mubr.f32.mxu0 0.0
      %2168 = vmatmul.mubr.f32.gmra.mrb[0].mxu0 %v1952
      %v2169 = vpop.f32.mrb[0].mxu0
      %v2170 = vadd.f32 %v1870, %v2169
      %v2171 = vpop.f32.mrb[0].mxu0
      %2172 = vmatprep.mubr.f32.mxu0 0.0
      %2173 = vmatmul.mubr.f32.gmra.mrb[0].mxu0 %v1955
      %v2174 = vpop.f32.mrb[0].mxu0
      %v2175 = vadd.f32 %v1870, %v2174
      %v2176 = vpop.f32.mrb[0].mxu0
      %2177 = vmatprep.mubr.f32.mxu0 0.0
      %2178 = vmatmul.mubr.f32.gmra.mrb[0].mxu0 %v1958
      %v2179 = vpop.f32.mrb[0].mxu0
      %v2180 = vadd.f32 %v1870, %v2179
      %v2181 = vpop.f32.mrb[0].mxu0
      %2182 = vmatprep.mubr.f32.mxu0 0.0
      %2183 = vmatmul.mubr.f32.gmra.mrb[0].mxu0 %v1961
      %v2184 = vpop.f32.mrb[0].mxu0
      %v2185 = vadd.f32 %v1870, %v2184
      %v2186 = vpop.f32.mrb[0].mxu0
      %2187 = vmatprep.mubr.f32.mxu0 0.0
      %2188 = vmatmul.mubr.f32.gmra.mrb[0].mxu0 %v1964
      %v2189 = vpop.f32.mrb[0].mxu0
      %v2190 = vadd.f32 %v1870, %v2189
      %v2191 = vpop.f32.mrb[0].mxu0
      %2192 = vmatprep.mubr.f32.mxu0 0.0
      %2193 = vmatmul.mubr.f32.gmra.mrb[0].mxu0 %v1967
      %v2194 = vpop.f32.mrb[0].mxu0
      %v2195 = vadd.f32 %v1870, %v2194
      %v2196 = vpop.f32.mrb[0].mxu0
      %2197 = vdwg.mxu0
      %v2198 = vld [vmem:[%s426] sm:$0x1]
      %v2199 = vmul.f32 %v2198, 1.442695
      %v2200 = vpow.pop %v2199
      %v2202 = vlaneseq
      %v2203 = vshrl.u32 %v2202, 7
      %v2204 = vsub.s32 0, %v2203
      %v2205 = vrot.slane %v2200, %v2204
      %v2207 = vmul.f32 %v2040, %v2205
      %v2208 = vmul.f32 %v2045, %v2205
      %v2209 = vmul.f32 %v2050, %v2205
      %v2210 = vmul.f32 %v2055, %v2205
      %v2211 = vmul.f32 %v2060, %v2205
      %v2212 = vmul.f32 %v2065, %v2205
      %v2213 = vmul.f32 %v2070, %v2205
      %v2214 = vmul.f32 %v2075, %v2205
      %v2215 = vmul.f32 %v2080, %v2205
      %v2216 = vmul.f32 %v2085, %v2205
      %v2217 = vmul.f32 %v2090, %v2205
      %v2218 = vmul.f32 %v2095, %v2205
      %v2219 = vmul.f32 %v2100, %v2205
      %v2220 = vmul.f32 %v2105, %v2205
      %v2221 = vmul.f32 %v2110, %v2205
      %v2222 = vmul.f32 %v2115, %v2205
      %v2223 = vmul.f32 %v2120, %v2205
      %v2224 = vmul.f32 %v2125, %v2205
      %v2225 = vmul.f32 %v2130, %v2205
      %v2226 = vmul.f32 %v2135, %v2205
      %v2227 = vmul.f32 %v2140, %v2205
      %v2228 = vmul.f32 %v2145, %v2205
      %v2229 = vmul.f32 %v2150, %v2205
      %v2230 = vmul.f32 %v2155, %v2205
      %v2231 = vmul.f32 %v2160, %v2205
      %v2232 = vmul.f32 %v2165, %v2205
      %v2233 = vmul.f32 %v2170, %v2205
      %v2234 = vmul.f32 %v2175, %v2205
      %v2235 = vmul.f32 %v2180, %v2205
      %v2236 = vmul.f32 %v2185, %v2205
      %v2237 = vmul.f32 %v2190, %v2205
      %v2238 = vmul.f32 %v2195, %v2205
      %v2239 = vmax.f32 %v2207, 0.0
      %v2240 = vmax.f32 %v2208, 0.0
      %v2241 = vmax.f32 %v2209, 0.0
      %v2242 = vmax.f32 %v2210, 0.0
      %v2243 = vmax.f32 %v2211, 0.0
      %v2244 = vmax.f32 %v2212, 0.0
      %v2245 = vmax.f32 %v2213, 0.0
      %v2246 = vmax.f32 %v2214, 0.0
      %v2247 = vmax.f32 %v2215, 0.0
      %v2248 = vmax.f32 %v2216, 0.0
      %v2249 = vmax.f32 %v2217, 0.0
      %v2250 = vmax.f32 %v2218, 0.0
      %v2251 = vmax.f32 %v2219, 0.0
      %v2252 = vmax.f32 %v2220, 0.0
      %v2253 = vmax.f32 %v2221, 0.0
      %v2254 = vmax.f32 %v2222, 0.0
      %v2255 = vmax.f32 %v2223, 0.0
      %v2256 = vmax.f32 %v2224, 0.0
      %v2257 = vmax.f32 %v2225, 0.0
      %v2258 = vmax.f32 %v2226, 0.0
      %v2259 = vmax.f32 %v2227, 0.0
      %v2260 = vmax.f32 %v2228, 0.0
      %v2261 = vmax.f32 %v2229, 0.0
      %v2262 = vmax.f32 %v2230, 0.0
      %v2263 = vmax.f32 %v2231, 0.0
      %v2264 = vmax.f32 %v2232, 0.0
      %v2265 = vmax.f32 %v2233, 0.0
      %v2266 = vmax.f32 %v2234, 0.0
      %v2267 = vmax.f32 %v2235, 0.0
      %v2268 = vmax.f32 %v2236, 0.0
      %v2269 = vmax.f32 %v2237, 0.0
      %v2270 = vmax.f32 %v2238, 0.0
      %v2271 = vld [vmem:[%s2] sm:$0xff]
      %v2272 = vld [vmem:[%s2 + $0x8] sm:$0xff]
      %v2273 = vld [vmem:[%s2 + $0x10] sm:$0xff]
      %v2274 = vld [vmem:[%s2 + $0x18] sm:$0xff]
      %v2275 = vld [vmem:[%s429] sm:$0x1]
      %v2277 = vlaneseq
      %v2278 = vshrl.u32 %v2277, 7
      %v2279 = vsub.s32 0, %v2278
      %v2280 = vrot.slane %v2275, %v2279
      %v2283 = vsel %vm1827, %v2239, 0
      %v2286 = vsel %vm1827, %v2240, 0
      %v2289 = vsel %vm1827, %v2241, 0
      %v2292 = vsel %vm1827, %v2242, 0
      %v2295 = vsel %vm1827, %v2243, 0
      %v2298 = vsel %vm1827, %v2244, 0
      %v2301 = vsel %vm1827, %v2245, 0
      %v2304 = vsel %vm1827, %v2246, 0
      %v2307 = vsel %vm1827, %v2247, 0
      %v2310 = vsel %vm1827, %v2248, 0
      %v2313 = vsel %vm1827, %v2249, 0
      %v2316 = vsel %vm1827, %v2250, 0
      %v2319 = vsel %vm1827, %v2251, 0
      %v2322 = vsel %vm1827, %v2252, 0
      %v2325 = vsel %vm1827, %v2253, 0
      %v2328 = vsel %vm1827, %v2254, 0
      %v2331 = vsel %vm1827, %v2255, 0
      %v2334 = vsel %vm1827, %v2256, 0
      %v2337 = vsel %vm1827, %v2257, 0
      %v2340 = vsel %vm1827, %v2258, 0
      %v2343 = vsel %vm1827, %v2259, 0
      %v2346 = vsel %vm1827, %v2260, 0
      %v2349 = vsel %vm1827, %v2261, 0
      %v2352 = vsel %vm1827, %v2262, 0
      %v2355 = vsel %vm1827, %v2263, 0
      %v2358 = vsel %vm1827, %v2264, 0
      %v2361 = vsel %vm1827, %v2265, 0
      %v2364 = vsel %vm1827, %v2266, 0
      %v2367 = vsel %vm1827, %v2267, 0
      %v2370 = vsel %vm1827, %v2268, 0
      %v2373 = vsel %vm1827, %v2269, 0
      %v2376 = vsel %vm1827, %v2270, 0
      %2378 = vmatprep.subr.mxu0 0.0
      %2379 = vmatpush1.msra.mxu0 %v2271
      %2380 = vmatprep.subr.mxu0 0.0
      %2381 = vmatpush1.msra.mxu0 %v2272
      %2382 = vmatprep.subr.mxu0 0.0
      %2383 = vmatpush1.msra.mxu0 %v2273
      %2384 = vmatprep.subr.mxu0 0.0
      %2385 = vmatpush1.msra.mxu0 %v2274
      %2386 = vmatprep.subr.mxu0 0.0
      %2387 = vmatpush1.msra.mxu0 0.0
      %2388 = vmatprep.subr.mxu0 0.0
      %2389 = vmatpush1.msra.mxu0 0.0
      %2390 = vmatprep.subr.mxu0 0.0
      %2391 = vmatpush1.msra.mxu0 0.0
      %2392 = vmatprep.subr.mxu0 0.0
      %2393 = vmatpush1.msra.mxu0 0.0
      %2394 = vmatprep.subr.mxu0 0.0
      %2395 = vmatpush1.msra.mxu0 0.0
      %2396 = vmatprep.subr.mxu0 0.0
      %2397 = vmatpush1.msra.mxu0 0.0
      %2398 = vmatprep.subr.mxu0 0.0
      %2399 = vmatpush1.msra.mxu0 0.0
      %2400 = vmatprep.subr.mxu0 0.0
      %2401 = vmatpush1.msra.mxu0 0.0
      %2402 = vmatprep.subr.mxu0 0.0
      %2403 = vmatpush1.msra.mxu0 0.0
      %2404 = vmatprep.subr.mxu0 0.0
      %2405 = vmatpush1.msra.mxu0 0.0
      %2406 = vmatprep.subr.mxu0 0.0
      %2407 = vmatpush1.msra.mxu0 0.0
      %2408 = vmatprep.subr.mxu0 0.0
      %2409 = vmatpush1.msra.mxu0 0.0
      %2410 = vmatprep.subr.mxu0 0.0
      %2411 = vmatpush1.msra.mxu0 0.0
      %2412 = vmatprep.subr.mxu0 0.0
      %2413 = vmatpush1.msra.mxu0 0.0
      %2414 = vmatprep.subr.mxu0 0.0
      %2415 = vmatpush1.msra.mxu0 0.0
      %2416 = vmatprep.subr.mxu0 0.0
      %2417 = vmatpush1.msra.mxu0 0.0
      %2418 = vmatprep.subr.mxu0 0.0
      %2419 = vmatpush1.msra.mxu0 0.0
      %2420 = vmatprep.subr.mxu0 0.0
      %2421 = vmatpush1.msra.mxu0 0.0
      %2422 = vmatprep.subr.mxu0 0.0
      %2423 = vmatpush1.msra.mxu0 0.0
      %2424 = vmatprep.subr.mxu0 0.0
      %2425 = vmatpush1.msra.mxu0 0.0
      %2426 = vmatprep.subr.mxu0 0.0
      %2427 = vmatpush1.msra.mxu0 0.0
      %2428 = vmatprep.subr.mxu0 0.0
      %2429 = vmatpush1.msra.mxu0 0.0
      %2430 = vmatprep.subr.mxu0 0.0
      %2431 = vmatpush1.msra.mxu0 0.0
      %2432 = vmatprep.subr.mxu0 0.0
      %2433 = vmatpush1.msra.mxu0 0.0
      %2434 = vmatprep.subr.mxu0 0.0
      %2435 = vmatpush1.msra.mxu0 0.0
      %2436 = vmatprep.subr.mxu0 0.0
      %2437 = vmatpush1.msra.mxu0 0.0
      %2438 = vmatprep.subr.mxu0 0.0
      %2439 = vmatpush1.msra.mxu0 0.0
      %2440 = vmatprep.subr.mxu0 0.0
      %2441 = vmatpush1.msra.mxu0 0.0
      %2442 = vmatprep.mubr.f32.mxu0 0.0
      %2443 = vmatmul.mubr.f32.gmra.mrb[0].mxu0 %v2283
      %v2444 = vpop.f32.mrb[0].mxu0
      %v2445 = vadd.f32 %v2280, %v2444
      %v2446 = vpop.f32.mrb[0].mxu0
      %2447 = vmatprep.mubr.f32.mxu0 0.0
      %2448 = vmatmul.mubr.f32.gmra.mrb[0].mxu0 %v2286
      %v2449 = vpop.f32.mrb[0].mxu0
      %v2450 = vadd.f32 %v2280, %v2449
      %v2451 = vpop.f32.mrb[0].mxu0
      %2452 = vmatprep.mubr.f32.mxu0 0.0
      %2453 = vmatmul.mubr.f32.gmra.mrb[0].mxu0 %v2289
      %v2454 = vpop.f32.mrb[0].mxu0
      %v2455 = vadd.f32 %v2280, %v2454
      %v2456 = vpop.f32.mrb[0].mxu0
      %2457 = vmatprep.mubr.f32.mxu0 0.0
      %2458 = vmatmul.mubr.f32.gmra.mrb[0].mxu0 %v2292
      %v2459 = vpop.f32.mrb[0].mxu0
      %v2460 = vadd.f32 %v2280, %v2459
      %v2461 = vpop.f32.mrb[0].mxu0
      %2462 = vmatprep.mubr.f32.mxu0 0.0
      %2463 = vmatmul.mubr.f32.gmra.mrb[0].mxu0 %v2295
      %v2464 = vpop.f32.mrb[0].mxu0
      %v2465 = vadd.f32 %v2280, %v2464
      %v2466 = vpop.f32.mrb[0].mxu0
      %2467 = vmatprep.mubr.f32.mxu0 0.0
      %2468 = vmatmul.mubr.f32.gmra.mrb[0].mxu0 %v2298
      %v2469 = vpop.f32.mrb[0].mxu0
      %v2470 = vadd.f32 %v2280, %v2469
      %v2471 = vpop.f32.mrb[0].mxu0
      %2472 = vmatprep.mubr.f32.mxu0 0.0
      %2473 = vmatmul.mubr.f32.gmra.mrb[0].mxu0 %v2301
      %v2474 = vpop.f32.mrb[0].mxu0
      %v2475 = vadd.f32 %v2280, %v2474
      %v2476 = vpop.f32.mrb[0].mxu0
      %2477 = vmatprep.mubr.f32.mxu0 0.0
      %2478 = vmatmul.mubr.f32.gmra.mrb[0].mxu0 %v2304
      %v2479 = vpop.f32.mrb[0].mxu0
      %v2480 = vadd.f32 %v2280, %v2479
      %v2481 = vpop.f32.mrb[0].mxu0
      %2482 = vmatprep.mubr.f32.mxu0 0.0
      %2483 = vmatmul.mubr.f32.gmra.mrb[0].mxu0 %v2307
      %v2484 = vpop.f32.mrb[0].mxu0
      %v2485 = vadd.f32 %v2280, %v2484
      %v2486 = vpop.f32.mrb[0].mxu0
      %2487 = vmatprep.mubr.f32.mxu0 0.0
      %2488 = vmatmul.mubr.f32.gmra.mrb[0].mxu0 %v2310
      %v2489 = vpop.f32.mrb[0].mxu0
      %v2490 = vadd.f32 %v2280, %v2489
      %v2491 = vpop.f32.mrb[0].mxu0
      %2492 = vmatprep.mubr.f32.mxu0 0.0
      %2493 = vmatmul.mubr.f32.gmra.mrb[0].mxu0 %v2313
      %v2494 = vpop.f32.mrb[0].mxu0
      %v2495 = vadd.f32 %v2280, %v2494
      %v2496 = vpop.f32.mrb[0].mxu0
      %2497 = vmatprep.mubr.f32.mxu0 0.0
      %2498 = vmatmul.mubr.f32.gmra.mrb[0].mxu0 %v2316
      %v2499 = vpop.f32.mrb[0].mxu0
      %v2500 = vadd.f32 %v2280, %v2499
      %v2501 = vpop.f32.mrb[0].mxu0
      %2502 = vmatprep.mubr.f32.mxu0 0.0
      %2503 = vmatmul.mubr.f32.gmra.mrb[0].mxu0 %v2319
      %v2504 = vpop.f32.mrb[0].mxu0
      %v2505 = vadd.f32 %v2280, %v2504
      %v2506 = vpop.f32.mrb[0].mxu0
      %2507 = vmatprep.mubr.f32.mxu0 0.0
      %2508 = vmatmul.mubr.f32.gmra.mrb[0].mxu0 %v2322
      %v2509 = vpop.f32.mrb[0].mxu0
      %v2510 = vadd.f32 %v2280, %v2509
      %v2511 = vpop.f32.mrb[0].mxu0
      %2512 = vmatprep.mubr.f32.mxu0 0.0
      %2513 = vmatmul.mubr.f32.gmra.mrb[0].mxu0 %v2325
      %v2514 = vpop.f32.mrb[0].mxu0
      %v2515 = vadd.f32 %v2280, %v2514
      %v2516 = vpop.f32.mrb[0].mxu0
      %2517 = vmatprep.mubr.f32.mxu0 0.0
      %2518 = vmatmul.mubr.f32.gmra.mrb[0].mxu0 %v2328
      %v2519 = vpop.f32.mrb[0].mxu0
      %v2520 = vadd.f32 %v2280, %v2519
      %v2521 = vpop.f32.mrb[0].mxu0
      %2522 = vmatprep.mubr.f32.mxu0 0.0
      %2523 = vmatmul.mubr.f32.gmra.mrb[0].mxu0 %v2331
      %v2524 = vpop.f32.mrb[0].mxu0
      %v2525 = vadd.f32 %v2280, %v2524
      %v2526 = vpop.f32.mrb[0].mxu0
      %2527 = vmatprep.mubr.f32.mxu0 0.0
      %2528 = vmatmul.mubr.f32.gmra.mrb[0].mxu0 %v2334
      %v2529 = vpop.f32.mrb[0].mxu0
      %v2530 = vadd.f32 %v2280, %v2529
      %v2531 = vpop.f32.mrb[0].mxu0
      %2532 = vmatprep.mubr.f32.mxu0 0.0
      %2533 = vmatmul.mubr.f32.gmra.mrb[0].mxu0 %v2337
      %v2534 = vpop.f32.mrb[0].mxu0
      %v2535 = vadd.f32 %v2280, %v2534
      %v2536 = vpop.f32.mrb[0].mxu0
      %2537 = vmatprep.mubr.f32.mxu0 0.0
      %2538 = vmatmul.mubr.f32.gmra.mrb[0].mxu0 %v2340
      %v2539 = vpop.f32.mrb[0].mxu0
      %v2540 = vadd.f32 %v2280, %v2539
      %v2541 = vpop.f32.mrb[0].mxu0
      %2542 = vmatprep.mubr.f32.mxu0 0.0
      %2543 = vmatmul.mubr.f32.gmra.mrb[0].mxu0 %v2343
      %v2544 = vpop.f32.mrb[0].mxu0
      %v2545 = vadd.f32 %v2280, %v2544
      %v2546 = vpop.f32.mrb[0].mxu0
      %2547 = vmatprep.mubr.f32.mxu0 0.0
      %2548 = vmatmul.mubr.f32.gmra.mrb[0].mxu0 %v2346
      %v2549 = vpop.f32.mrb[0].mxu0
      %v2550 = vadd.f32 %v2280, %v2549
      %v2551 = vpop.f32.mrb[0].mxu0
      %2552 = vmatprep.mubr.f32.mxu0 0.0
      %2553 = vmatmul.mubr.f32.gmra.mrb[0].mxu0 %v2349
      %v2554 = vpop.f32.mrb[0].mxu0
      %v2555 = vadd.f32 %v2280, %v2554
      %v2556 = vpop.f32.mrb[0].mxu0
      %2557 = vmatprep.mubr.f32.mxu0 0.0
      %2558 = vmatmul.mubr.f32.gmra.mrb[0].mxu0 %v2352
      %v2559 = vpop.f32.mrb[0].mxu0
      %v2560 = vadd.f32 %v2280, %v2559
      %v2561 = vpop.f32.mrb[0].mxu0
      %2562 = vmatprep.mubr.f32.mxu0 0.0
      %2563 = vmatmul.mubr.f32.gmra.mrb[0].mxu0 %v2355
      %v2564 = vpop.f32.mrb[0].mxu0
      %v2565 = vadd.f32 %v2280, %v2564
      %v2566 = vpop.f32.mrb[0].mxu0
      %2567 = vmatprep.mubr.f32.mxu0 0.0
      %2568 = vmatmul.mubr.f32.gmra.mrb[0].mxu0 %v2358
      %v2569 = vpop.f32.mrb[0].mxu0
      %v2570 = vadd.f32 %v2280, %v2569
      %v2571 = vpop.f32.mrb[0].mxu0
      %2572 = vmatprep.mubr.f32.mxu0 0.0
      %2573 = vmatmul.mubr.f32.gmra.mrb[0].mxu0 %v2361
      %v2574 = vpop.f32.mrb[0].mxu0
      %v2575 = vadd.f32 %v2280, %v2574
      %v2576 = vpop.f32.mrb[0].mxu0
      %2577 = vmatprep.mubr.f32.mxu0 0.0
      %2578 = vmatmul.mubr.f32.gmra.mrb[0].mxu0 %v2364
      %v2579 = vpop.f32.mrb[0].mxu0
      %v2580 = vadd.f32 %v2280, %v2579
      %v2581 = vpop.f32.mrb[0].mxu0
      %2582 = vmatprep.mubr.f32.mxu0 0.0
      %2583 = vmatmul.mubr.f32.gmra.mrb[0].mxu0 %v2367
      %v2584 = vpop.f32.mrb[0].mxu0
      %v2585 = vadd.f32 %v2280, %v2584
      %v2586 = vpop.f32.mrb[0].mxu0
      %2587 = vmatprep.mubr.f32.mxu0 0.0
      %2588 = vmatmul.mubr.f32.gmra.mrb[0].mxu0 %v2370
      %v2589 = vpop.f32.mrb[0].mxu0
      %v2590 = vadd.f32 %v2280, %v2589
      %v2591 = vpop.f32.mrb[0].mxu0
      %2592 = vmatprep.mubr.f32.mxu0 0.0
      %2593 = vmatmul.mubr.f32.gmra.mrb[0].mxu0 %v2373
      %v2594 = vpop.f32.mrb[0].mxu0
      %v2595 = vadd.f32 %v2280, %v2594
      %v2596 = vpop.f32.mrb[0].mxu0
      %2597 = vmatprep.mubr.f32.mxu0 0.0
      %2598 = vmatmul.mubr.f32.gmra.mrb[0].mxu0 %v2376
      %v2599 = vpop.f32.mrb[0].mxu0
      %v2600 = vadd.f32 %v2280, %v2599
      %v2601 = vpop.f32.mrb[0].mxu0
      %2602 = vdwg.mxu0
      %v2603 = vld [vmem:[%s432] sm:$0x1]
      %v2604 = vmul.f32 %v2603, 1.442695
      %v2605 = vpow.pop %v2604
      %v2607 = vlaneseq
      %v2608 = vshrl.u32 %v2607, 7
      %v2609 = vsub.s32 0, %v2608
      %v2610 = vrot.slane %v2605, %v2609
      %v2612 = vmul.f32 %v2445, %v2610
      %v2613 = vmul.f32 %v2450, %v2610
      %v2614 = vmul.f32 %v2455, %v2610
      %v2615 = vmul.f32 %v2460, %v2610
      %v2616 = vmul.f32 %v2465, %v2610
      %v2617 = vmul.f32 %v2470, %v2610
      %v2618 = vmul.f32 %v2475, %v2610
      %v2619 = vmul.f32 %v2480, %v2610
      %v2620 = vmul.f32 %v2485, %v2610
      %v2621 = vmul.f32 %v2490, %v2610
      %v2622 = vmul.f32 %v2495, %v2610
      %v2623 = vmul.f32 %v2500, %v2610
      %v2624 = vmul.f32 %v2505, %v2610
      %v2625 = vmul.f32 %v2510, %v2610
      %v2626 = vmul.f32 %v2515, %v2610
      %v2627 = vmul.f32 %v2520, %v2610
      %v2628 = vmul.f32 %v2525, %v2610
      %v2629 = vmul.f32 %v2530, %v2610
      %v2630 = vmul.f32 %v2535, %v2610
      %v2631 = vmul.f32 %v2540, %v2610
      %v2632 = vmul.f32 %v2545, %v2610
      %v2633 = vmul.f32 %v2550, %v2610
      %v2634 = vmul.f32 %v2555, %v2610
      %v2635 = vmul.f32 %v2560, %v2610
      %v2636 = vmul.f32 %v2565, %v2610
      %v2637 = vmul.f32 %v2570, %v2610
      %v2638 = vmul.f32 %v2575, %v2610
      %v2639 = vmul.f32 %v2580, %v2610
      %v2640 = vmul.f32 %v2585, %v2610
      %v2641 = vmul.f32 %v2590, %v2610
      %v2642 = vmul.f32 %v2595, %v2610
      %v2643 = vmul.f32 %v2600, %v2610
      %v2644 = vmax.f32 %v2612, 0.0
      %v2645 = vmax.f32 %v2613, 0.0
      %v2646 = vmax.f32 %v2614, 0.0
      %v2647 = vmax.f32 %v2615, 0.0
      %v2648 = vmax.f32 %v2616, 0.0
      %v2649 = vmax.f32 %v2617, 0.0
      %v2650 = vmax.f32 %v2618, 0.0
      %v2651 = vmax.f32 %v2619, 0.0
      %v2652 = vmax.f32 %v2620, 0.0
      %v2653 = vmax.f32 %v2621, 0.0
      %v2654 = vmax.f32 %v2622, 0.0
      %v2655 = vmax.f32 %v2623, 0.0
      %v2656 = vmax.f32 %v2624, 0.0
      %v2657 = vmax.f32 %v2625, 0.0
      %v2658 = vmax.f32 %v2626, 0.0
      %v2659 = vmax.f32 %v2627, 0.0
      %v2660 = vmax.f32 %v2628, 0.0
      %v2661 = vmax.f32 %v2629, 0.0
      %v2662 = vmax.f32 %v2630, 0.0
      %v2663 = vmax.f32 %v2631, 0.0
      %v2664 = vmax.f32 %v2632, 0.0
      %v2665 = vmax.f32 %v2633, 0.0
      %v2666 = vmax.f32 %v2634, 0.0
      %v2667 = vmax.f32 %v2635, 0.0
      %v2668 = vmax.f32 %v2636, 0.0
      %v2669 = vmax.f32 %v2637, 0.0
      %v2670 = vmax.f32 %v2638, 0.0
      %v2671 = vmax.f32 %v2639, 0.0
      %v2672 = vmax.f32 %v2640, 0.0
      %v2673 = vmax.f32 %v2641, 0.0
      %v2674 = vmax.f32 %v2642, 0.0
      %v2675 = vmax.f32 %v2643, 0.0
      %v2708 = vrot.slane %v2644, 7
      %v2709 = vrot.slane %v2645, 7
      %v2710 = vsel %vm508, %v2708, %v2709
      %v2711 = vrot.slane %v2646, 7
      %v2712 = vrot.slane %v2647, 7
      %v2713 = vsel %vm508, %v2711, %v2712
      %v2714 = vrot.slane %v2648, 7
      %v2715 = vrot.slane %v2649, 7
      %v2716 = vsel %vm508, %v2714, %v2715
      %v2717 = vrot.slane %v2650, 7
      %v2718 = vrot.slane %v2651, 7
      %v2719 = vsel %vm508, %v2717, %v2718
      %v2720 = vrot.slane %v2652, 7
      %v2721 = vrot.slane %v2653, 7
      %v2722 = vsel %vm508, %v2720, %v2721
      %v2723 = vrot.slane %v2654, 7
      %v2724 = vrot.slane %v2655, 7
      %v2725 = vsel %vm508, %v2723, %v2724
      %v2726 = vrot.slane %v2656, 7
      %v2727 = vrot.slane %v2657, 7
      %v2728 = vsel %vm508, %v2726, %v2727
      %v2729 = vrot.slane %v2658, 7
      %v2730 = vrot.slane %v2659, 7
      %v2731 = vsel %vm508, %v2729, %v2730
      %v2732 = vrot.slane %v2660, 7
      %v2733 = vrot.slane %v2661, 7
      %v2734 = vsel %vm508, %v2732, %v2733
      %v2735 = vrot.slane %v2662, 7
      %v2736 = vrot.slane %v2663, 7
      %v2737 = vsel %vm508, %v2735, %v2736
      %v2738 = vrot.slane %v2664, 7
      %v2739 = vrot.slane %v2665, 7
      %v2740 = vsel %vm508, %v2738, %v2739
      %v2741 = vrot.slane %v2666, 7
      %v2742 = vrot.slane %v2667, 7
      %v2743 = vsel %vm508, %v2741, %v2742
      %v2744 = vrot.slane %v2668, 7
      %v2745 = vrot.slane %v2669, 7
      %v2746 = vsel %vm508, %v2744, %v2745
      %v2747 = vrot.slane %v2670, 7
      %v2748 = vrot.slane %v2671, 7
      %v2749 = vsel %vm508, %v2747, %v2748
      %v2750 = vrot.slane %v2672, 7
      %v2751 = vrot.slane %v2673, 7
      %v2752 = vsel %vm508, %v2750, %v2751
      %v2753 = vrot.slane %v2674, 7
      %v2754 = vrot.slane %v2675, 7
      %v2755 = vsel %vm508, %v2753, %v2754
      %v2803 = vrot.slane %v2645, 6
      %v2804 = vrot.slane %v2647, 6
      %v2805 = vrot.slane %v2649, 6
      %v2806 = vrot.slane %v2651, 6
      %v2807 = vrot.slane %v2653, 6
      %v2808 = vrot.slane %v2655, 6
      %v2809 = vrot.slane %v2657, 6
      %v2810 = vrot.slane %v2659, 6
      %v2811 = vrot.slane %v2661, 6
      %v2812 = vrot.slane %v2663, 6
      %v2813 = vrot.slane %v2665, 6
      %v2814 = vrot.slane %v2667, 6
      %v2815 = vrot.slane %v2669, 6
      %v2816 = vrot.slane %v2671, 6
      %v2817 = vrot.slane %v2673, 6
      %v2818 = vrot.slane %v2675, 6
      %v2835 = vsel %vm508, %v2644, %v2708
      %v2836 = vsel %vm508, %v2646, %v2711
      %v2837 = vsel %vm508, %v2648, %v2714
      %v2838 = vsel %vm508, %v2650, %v2717
      %v2839 = vsel %vm508, %v2652, %v2720
      %v2840 = vsel %vm508, %v2654, %v2723
      %v2841 = vsel %vm508, %v2656, %v2726
      %v2842 = vsel %vm508, %v2658, %v2729
      %v2843 = vsel %vm508, %v2660, %v2732
      %v2844 = vsel %vm508, %v2662, %v2735
      %v2845 = vsel %vm508, %v2664, %v2738
      %v2846 = vsel %vm508, %v2666, %v2741
      %v2847 = vsel %vm508, %v2668, %v2744
      %v2848 = vsel %vm508, %v2670, %v2747
      %v2849 = vsel %vm508, %v2672, %v2750
      %v2850 = vsel %vm508, %v2674, %v2753
      %v2851 = vsel %vm508, %v2709, %v2803
      %v2852 = vsel %vm508, %v2712, %v2804
      %v2853 = vsel %vm508, %v2715, %v2805
      %v2854 = vsel %vm508, %v2718, %v2806
      %v2855 = vsel %vm508, %v2721, %v2807
      %v2856 = vsel %vm508, %v2724, %v2808
      %v2857 = vsel %vm508, %v2727, %v2809
      %v2858 = vsel %vm508, %v2730, %v2810
      %v2859 = vsel %vm508, %v2733, %v2811
      %v2860 = vsel %vm508, %v2736, %v2812
      %v2861 = vsel %vm508, %v2739, %v2813
      %v2862 = vsel %vm508, %v2742, %v2814
      %v2863 = vsel %vm508, %v2745, %v2815
      %v2864 = vsel %vm508, %v2748, %v2816
      %v2865 = vsel %vm508, %v2751, %v2817
      %v2866 = vsel %vm508, %v2754, %v2818
      %v2897 = vrot.slane %v2835, 1
      %v2898 = vrot.slane %v2710, 1
      %v2899 = vsel %vm698, %v2897, %v2898
      %v2900 = vrot.slane %v2851, 1
      %v2901 = vsel %vm698, %v2898, %v2900
      %v2902 = vrot.slane %v2836, 1
      %v2903 = vrot.slane %v2713, 1
      %v2904 = vsel %vm698, %v2902, %v2903
      %v2905 = vrot.slane %v2852, 1
      %v2906 = vsel %vm698, %v2903, %v2905
      %v2907 = vrot.slane %v2837, 1
      %v2908 = vrot.slane %v2716, 1
      %v2909 = vsel %vm698, %v2907, %v2908
      %v2910 = vrot.slane %v2853, 1
      %v2911 = vsel %vm698, %v2908, %v2910
      %v2912 = vrot.slane %v2838, 1
      %v2913 = vrot.slane %v2719, 1
      %v2914 = vsel %vm698, %v2912, %v2913
      %v2915 = vrot.slane %v2854, 1
      %v2916 = vsel %vm698, %v2913, %v2915
      %v2917 = vrot.slane %v2839, 1
      %v2918 = vrot.slane %v2722, 1
      %v2919 = vsel %vm698, %v2917, %v2918
      %v2920 = vrot.slane %v2855, 1
      %v2921 = vsel %vm698, %v2918, %v2920
      %v2922 = vrot.slane %v2840, 1
      %v2923 = vrot.slane %v2725, 1
      %v2924 = vsel %vm698, %v2922, %v2923
      %v2925 = vrot.slane %v2856, 1
      %v2926 = vsel %vm698, %v2923, %v2925
      %v2927 = vrot.slane %v2841, 1
      %v2928 = vrot.slane %v2728, 1
      %v2929 = vsel %vm698, %v2927, %v2928
      %v2930 = vrot.slane %v2857, 1
      %v2931 = vsel %vm698, %v2928, %v2930
      %v2932 = vrot.slane %v2842, 1
      %v2933 = vrot.slane %v2731, 1
      %v2934 = vsel %vm698, %v2932, %v2933
      %v2935 = vrot.slane %v2858, 1
      %v2936 = vsel %vm698, %v2933, %v2935
      %v2937 = vrot.slane %v2843, 1
      %v2938 = vrot.slane %v2734, 1
      %v2939 = vsel %vm698, %v2937, %v2938
      %v2940 = vrot.slane %v2859, 1
      %v2941 = vsel %vm698, %v2938, %v2940
      %v2942 = vrot.slane %v2844, 1
      %v2943 = vrot.slane %v2737, 1
      %v2944 = vsel %vm698, %v2942, %v2943
      %v2945 = vrot.slane %v2860, 1
      %v2946 = vsel %vm698, %v2943, %v2945
      %v2947 = vrot.slane %v2845, 1
      %v2948 = vrot.slane %v2740, 1
      %v2949 = vsel %vm698, %v2947, %v2948
      %v2950 = vrot.slane %v2861, 1
      %v2951 = vsel %vm698, %v2948, %v2950
      %v2952 = vrot.slane %v2846, 1
      %v2953 = vrot.slane %v2743, 1
      %v2954 = vsel %vm698, %v2952, %v2953
      %v2955 = vrot.slane %v2862, 1
      %v2956 = vsel %vm698, %v2953, %v2955
      %v2957 = vrot.slane %v2847, 1
      %v2958 = vrot.slane %v2746, 1
      %v2959 = vsel %vm698, %v2957, %v2958
      %v2960 = vrot.slane %v2863, 1
      %v2961 = vsel %vm698, %v2958, %v2960
      %v2962 = vrot.slane %v2848, 1
      %v2963 = vrot.slane %v2749, 1
      %v2964 = vsel %vm698, %v2962, %v2963
      %v2965 = vrot.slane %v2864, 1
      %v2966 = vsel %vm698, %v2963, %v2965
      %v2967 = vrot.slane %v2849, 1
      %v2968 = vrot.slane %v2752, 1
      %v2969 = vsel %vm698, %v2967, %v2968
      %v2970 = vrot.slane %v2865, 1
      %v2971 = vsel %vm698, %v2968, %v2970
      %2972 = vrot.lane.b32.xlu0 %v2899, 32
      %v2973 = vpop.permute.xlu0 %2972
      %2974 = vrot.lane.b32.xlu0 %v2901, 32
      %v2975 = vpop.permute.xlu0 %2974
      %2976 = vrot.lane.b32.xlu0 %v2904, 32
      %v2977 = vpop.permute.xlu0 %2976
      %2978 = vrot.lane.b32.xlu0 %v2906, 32
      %v2979 = vpop.permute.xlu0 %2978
      %2980 = vrot.lane.b32.xlu0 %v2909, 32
      %v2981 = vpop.permute.xlu0 %2980
      %2982 = vrot.lane.b32.xlu0 %v2911, 32
      %v2983 = vpop.permute.xlu0 %2982
      %2984 = vrot.lane.b32.xlu0 %v2914, 32
      %v2985 = vpop.permute.xlu0 %2984
      %2986 = vrot.lane.b32.xlu0 %v2916, 32
      %v2987 = vpop.permute.xlu0 %2986
      %2988 = vrot.lane.b32.xlu0 %v2919, 32
      %v2989 = vpop.permute.xlu0 %2988
      %2990 = vrot.lane.b32.xlu0 %v2921, 32
      %v2991 = vpop.permute.xlu0 %2990
      %2992 = vrot.lane.b32.xlu0 %v2924, 32
      %v2993 = vpop.permute.xlu0 %2992
      %2994 = vrot.lane.b32.xlu0 %v2926, 32
      %v2995 = vpop.permute.xlu0 %2994
      %2996 = vrot.lane.b32.xlu0 %v2929, 32
      %v2997 = vpop.permute.xlu0 %2996
      %2998 = vrot.lane.b32.xlu0 %v2931, 32
      %v2999 = vpop.permute.xlu0 %2998
      %3000 = vrot.lane.b32.xlu0 %v2934, 32
      %v3001 = vpop.permute.xlu0 %3000
      %3002 = vrot.lane.b32.xlu0 %v2936, 32
      %v3003 = vpop.permute.xlu0 %3002
      %3004 = vrot.lane.b32.xlu0 %v2939, 32
      %v3005 = vpop.permute.xlu0 %3004
      %3006 = vrot.lane.b32.xlu0 %v2941, 32
      %v3007 = vpop.permute.xlu0 %3006
      %3008 = vrot.lane.b32.xlu0 %v2944, 32
      %v3009 = vpop.permute.xlu0 %3008
      %3010 = vrot.lane.b32.xlu0 %v2946, 32
      %v3011 = vpop.permute.xlu0 %3010
      %3012 = vrot.lane.b32.xlu0 %v2949, 32
      %v3013 = vpop.permute.xlu0 %3012
      %3014 = vrot.lane.b32.xlu0 %v2951, 32
      %v3015 = vpop.permute.xlu0 %3014
      %3016 = vrot.lane.b32.xlu0 %v2954, 32
      %v3017 = vpop.permute.xlu0 %3016
      %3018 = vrot.lane.b32.xlu0 %v2956, 32
      %v3019 = vpop.permute.xlu0 %3018
      %3020 = vrot.lane.b32.xlu0 %v2959, 32
      %v3021 = vpop.permute.xlu0 %3020
      %3022 = vrot.lane.b32.xlu0 %v2961, 32
      %v3023 = vpop.permute.xlu0 %3022
      %3024 = vrot.lane.b32.xlu0 %v2964, 32
      %v3025 = vpop.permute.xlu0 %3024
      %3026 = vrot.lane.b32.xlu0 %v2966, 32
      %v3027 = vpop.permute.xlu0 %3026
      %3028 = vrot.lane.b32.xlu0 %v2969, 32
      %v3029 = vpop.permute.xlu0 %3028
      %3030 = vrot.lane.b32.xlu0 %v2971, 32
      %v3031 = vpop.permute.xlu0 %3030
      %v3062 = vrot.slane %v2835, 2
      %v3063 = vrot.slane %v2710, 2
      %v3064 = vsel %vm864, %v3062, %v3063
      %v3065 = vrot.slane %v2851, 2
      %v3066 = vsel %vm864, %v3063, %v3065
      %v3067 = vrot.slane %v2836, 2
      %v3068 = vrot.slane %v2713, 2
      %v3069 = vsel %vm864, %v3067, %v3068
      %v3070 = vrot.slane %v2852, 2
      %v3071 = vsel %vm864, %v3068, %v3070
      %v3072 = vrot.slane %v2837, 2
      %v3073 = vrot.slane %v2716, 2
      %v3074 = vsel %vm864, %v3072, %v3073
      %v3075 = vrot.slane %v2853, 2
      %v3076 = vsel %vm864, %v3073, %v3075
      %v3077 = vrot.slane %v2838, 2
      %v3078 = vrot.slane %v2719, 2
      %v3079 = vsel %vm864, %v3077, %v3078
      %v3080 = vrot.slane %v2854, 2
      %v3081 = vsel %vm864, %v3078, %v3080
      %v3082 = vrot.slane %v2839, 2
      %v3083 = vrot.slane %v2722, 2
      %v3084 = vsel %vm864, %v3082, %v3083
      %v3085 = vrot.slane %v2855, 2
      %v3086 = vsel %vm864, %v3083, %v3085
      %v3087 = vrot.slane %v2840, 2
      %v3088 = vrot.slane %v2725, 2
      %v3089 = vsel %vm864, %v3087, %v3088
      %v3090 = vrot.slane %v2856, 2
      %v3091 = vsel %vm864, %v3088, %v3090
      %v3092 = vrot.slane %v2841, 2
      %v3093 = vrot.slane %v2728, 2
      %v3094 = vsel %vm864, %v3092, %v3093
      %v3095 = vrot.slane %v2857, 2
      %v3096 = vsel %vm864, %v3093, %v3095
      %v3097 = vrot.slane %v2842, 2
      %v3098 = vrot.slane %v2731, 2
      %v3099 = vsel %vm864, %v3097, %v3098
      %v3100 = vrot.slane %v2858, 2
      %v3101 = vsel %vm864, %v3098, %v3100
      %v3102 = vrot.slane %v2843, 2
      %v3103 = vrot.slane %v2734, 2
      %v3104 = vsel %vm864, %v3102, %v3103
      %v3105 = vrot.slane %v2859, 2
      %v3106 = vsel %vm864, %v3103, %v3105
      %v3107 = vrot.slane %v2844, 2
      %v3108 = vrot.slane %v2737, 2
      %v3109 = vsel %vm864, %v3107, %v3108
      %v3110 = vrot.slane %v2860, 2
      %v3111 = vsel %vm864, %v3108, %v3110
      %v3112 = vrot.slane %v2845, 2
      %v3113 = vrot.slane %v2740, 2
      %v3114 = vsel %vm864, %v3112, %v3113
      %v3115 = vrot.slane %v2861, 2
      %v3116 = vsel %vm864, %v3113, %v3115
      %v3117 = vrot.slane %v2846, 2
      %v3118 = vrot.slane %v2743, 2
      %v3119 = vsel %vm864, %v3117, %v3118
      %v3120 = vrot.slane %v2862, 2
      %v3121 = vsel %vm864, %v3118, %v3120
      %v3122 = vrot.slane %v2847, 2
      %v3123 = vrot.slane %v2746, 2
      %v3124 = vsel %vm864, %v3122, %v3123
      %v3125 = vrot.slane %v2863, 2
      %v3126 = vsel %vm864, %v3123, %v3125
      %v3127 = vrot.slane %v2848, 2
      %v3128 = vrot.slane %v2749, 2
      %v3129 = vsel %vm864, %v3127, %v3128
      %v3130 = vrot.slane %v2864, 2
      %v3131 = vsel %vm864, %v3128, %v3130
      %v3132 = vrot.slane %v2849, 2
      %v3133 = vrot.slane %v2752, 2
      %v3134 = vsel %vm864, %v3132, %v3133
      %v3135 = vrot.slane %v2865, 2
      %v3136 = vsel %vm864, %v3133, %v3135
      %3137 = vrot.lane.b32.xlu0 %v3064, 64
      %v3138 = vpop.permute.xlu0 %3137
      %3139 = vrot.lane.b32.xlu0 %v3066, 64
      %v3140 = vpop.permute.xlu0 %3139
      %3141 = vrot.lane.b32.xlu0 %v3069, 64
      %v3142 = vpop.permute.xlu0 %3141
      %3143 = vrot.lane.b32.xlu0 %v3071, 64
      %v3144 = vpop.permute.xlu0 %3143
      %3145 = vrot.lane.b32.xlu0 %v3074, 64
      %v3146 = vpop.permute.xlu0 %3145
      %3147 = vrot.lane.b32.xlu0 %v3076, 64
      %v3148 = vpop.permute.xlu0 %3147
      %3149 = vrot.lane.b32.xlu0 %v3079, 64
      %v3150 = vpop.permute.xlu0 %3149
      %3151 = vrot.lane.b32.xlu0 %v3081, 64
      %v3152 = vpop.permute.xlu0 %3151
      %3153 = vrot.lane.b32.xlu0 %v3084, 64
      %v3154 = vpop.permute.xlu0 %3153
      %3155 = vrot.lane.b32.xlu0 %v3086, 64
      %v3156 = vpop.permute.xlu0 %3155
      %3157 = vrot.lane.b32.xlu0 %v3089, 64
      %v3158 = vpop.permute.xlu0 %3157
      %3159 = vrot.lane.b32.xlu0 %v3091, 64
      %v3160 = vpop.permute.xlu0 %3159
      %3161 = vrot.lane.b32.xlu0 %v3094, 64
      %v3162 = vpop.permute.xlu0 %3161
      %3163 = vrot.lane.b32.xlu0 %v3096, 64
      %v3164 = vpop.permute.xlu0 %3163
      %3165 = vrot.lane.b32.xlu0 %v3099, 64
      %v3166 = vpop.permute.xlu0 %3165
      %3167 = vrot.lane.b32.xlu0 %v3101, 64
      %v3168 = vpop.permute.xlu0 %3167
      %3169 = vrot.lane.b32.xlu0 %v3104, 64
      %v3170 = vpop.permute.xlu0 %3169
      %3171 = vrot.lane.b32.xlu0 %v3106, 64
      %v3172 = vpop.permute.xlu0 %3171
      %3173 = vrot.lane.b32.xlu0 %v3109, 64
      %v3174 = vpop.permute.xlu0 %3173
      %3175 = vrot.lane.b32.xlu0 %v3111, 64
      %v3176 = vpop.permute.xlu0 %3175
      %3177 = vrot.lane.b32.xlu0 %v3114, 64
      %v3178 = vpop.permute.xlu0 %3177
      %3179 = vrot.lane.b32.xlu0 %v3116, 64
      %v3180 = vpop.permute.xlu0 %3179
      %3181 = vrot.lane.b32.xlu0 %v3119, 64
      %v3182 = vpop.permute.xlu0 %3181
      %3183 = vrot.lane.b32.xlu0 %v3121, 64
      %v3184 = vpop.permute.xlu0 %3183
      %3185 = vrot.lane.b32.xlu0 %v3124, 64
      %v3186 = vpop.permute.xlu0 %3185
      %3187 = vrot.lane.b32.xlu0 %v3126, 64
      %v3188 = vpop.permute.xlu0 %3187
      %3189 = vrot.lane.b32.xlu0 %v3129, 64
      %v3190 = vpop.permute.xlu0 %3189
      %3191 = vrot.lane.b32.xlu0 %v3131, 64
      %v3192 = vpop.permute.xlu0 %3191
      %3193 = vrot.lane.b32.xlu0 %v3134, 64
      %v3194 = vpop.permute.xlu0 %3193
      %3195 = vrot.lane.b32.xlu0 %v3136, 64
      %v3196 = vpop.permute.xlu0 %3195
      %3228 = vrot.lane.b32.xlu0 %v2835, 96
      %v3229 = vpop.permute.xlu0 %3228
      %3230 = vrot.lane.b32.xlu0 %v2710, 96
      %v3231 = vpop.permute.xlu0 %3230
      %3232 = vrot.lane.b32.xlu0 %v2836, 96
      %v3233 = vpop.permute.xlu0 %3232
      %3234 = vrot.lane.b32.xlu0 %v2713, 96
      %v3235 = vpop.permute.xlu0 %3234
      %3236 = vrot.lane.b32.xlu0 %v2837, 96
      %v3237 = vpop.permute.xlu0 %3236
      %3238 = vrot.lane.b32.xlu0 %v2716, 96
      %v3239 = vpop.permute.xlu0 %3238
      %3240 = vrot.lane.b32.xlu0 %v2838, 96
      %v3241 = vpop.permute.xlu0 %3240
      %3242 = vrot.lane.b32.xlu0 %v2719, 96
      %v3243 = vpop.permute.xlu0 %3242
      %3244 = vrot.lane.b32.xlu0 %v2839, 96
      %v3245 = vpop.permute.xlu0 %3244
      %3246 = vrot.lane.b32.xlu0 %v2722, 96
      %v3247 = vpop.permute.xlu0 %3246
      %3248 = vrot.lane.b32.xlu0 %v2840, 96
      %v3249 = vpop.permute.xlu0 %3248
      %3250 = vrot.lane.b32.xlu0 %v2725, 96
      %v3251 = vpop.permute.xlu0 %3250
      %3252 = vrot.lane.b32.xlu0 %v2841, 96
      %v3253 = vpop.permute.xlu0 %3252
      %3254 = vrot.lane.b32.xlu0 %v2728, 96
      %v3255 = vpop.permute.xlu0 %3254
      %3256 = vrot.lane.b32.xlu0 %v2842, 96
      %v3257 = vpop.permute.xlu0 %3256
      %3258 = vrot.lane.b32.xlu0 %v2731, 96
      %v3259 = vpop.permute.xlu0 %3258
      %3260 = vrot.lane.b32.xlu0 %v2843, 96
      %v3261 = vpop.permute.xlu0 %3260
      %3262 = vrot.lane.b32.xlu0 %v2734, 96
      %v3263 = vpop.permute.xlu0 %3262
      %3264 = vrot.lane.b32.xlu0 %v2844, 96
      %v3265 = vpop.permute.xlu0 %3264
      %3266 = vrot.lane.b32.xlu0 %v2737, 96
      %v3267 = vpop.permute.xlu0 %3266
      %3268 = vrot.lane.b32.xlu0 %v2845, 96
      %v3269 = vpop.permute.xlu0 %3268
      %3270 = vrot.lane.b32.xlu0 %v2740, 96
      %v3271 = vpop.permute.xlu0 %3270
      %3272 = vrot.lane.b32.xlu0 %v2846, 96
      %v3273 = vpop.permute.xlu0 %3272
      %3274 = vrot.lane.b32.xlu0 %v2743, 96
      %v3275 = vpop.permute.xlu0 %3274
      %3276 = vrot.lane.b32.xlu0 %v2847, 96
      %v3277 = vpop.permute.xlu0 %3276
      %3278 = vrot.lane.b32.xlu0 %v2746, 96
      %v3279 = vpop.permute.xlu0 %3278
      %3280 = vrot.lane.b32.xlu0 %v2848, 96
      %v3281 = vpop.permute.xlu0 %3280
      %3282 = vrot.lane.b32.xlu0 %v2749, 96
      %v3283 = vpop.permute.xlu0 %3282
      %3284 = vrot.lane.b32.xlu0 %v2849, 96
      %v3285 = vpop.permute.xlu0 %3284
      %3286 = vrot.lane.b32.xlu0 %v2752, 96
      %v3287 = vpop.permute.xlu0 %3286
      %3288 = vrot.lane.b32.xlu0 %v2850, 96
      %v3289 = vpop.permute.xlu0 %3288
      %3290 = vrot.lane.b32.xlu0 %v2755, 96
      %v3291 = vpop.permute.xlu0 %3290
      %v3325 = vrot.slane %v2850, 1
      %v3326 = vrot.slane %v2755, 1
      %v3327 = vsel %vm698, %v3325, %v3326
      %v3328 = vrot.slane %v2866, 1
      %v3329 = vsel %vm698, %v3326, %v3328
      %v3362 = vrot.slane %v2850, 2
      %v3363 = vrot.slane %v2755, 2
      %v3364 = vsel %vm864, %v3362, %v3363
      %v3365 = vrot.slane %v2866, 2
      %v3366 = vsel %vm864, %v3363, %v3365
      %3367 = vrot.lane.b32.xlu0 %v3064, 32
      %v3368 = vpop.permute.xlu0 %3367
      %3369 = vrot.lane.b32.xlu0 %v3066, 32
      %v3370 = vpop.permute.xlu0 %3369
      %3371 = vrot.lane.b32.xlu0 %v3069, 32
      %v3372 = vpop.permute.xlu0 %3371
      %3373 = vrot.lane.b32.xlu0 %v3071, 32
      %v3374 = vpop.permute.xlu0 %3373
      %3375 = vrot.lane.b32.xlu0 %v3074, 32
      %v3376 = vpop.permute.xlu0 %3375
      %3377 = vrot.lane.b32.xlu0 %v3076, 32
      %v3378 = vpop.permute.xlu0 %3377
      %3379 = vrot.lane.b32.xlu0 %v3079, 32
      %v3380 = vpop.permute.xlu0 %3379
      %3381 = vrot.lane.b32.xlu0 %v3081, 32
      %v3382 = vpop.permute.xlu0 %3381
      %3383 = vrot.lane.b32.xlu0 %v3084, 32
      %v3384 = vpop.permute.xlu0 %3383
      %3385 = vrot.lane.b32.xlu0 %v3086, 32
      %v3386 = vpop.permute.xlu0 %3385
      %3387 = vrot.lane.b32.xlu0 %v3089, 32
      %v3388 = vpop.permute.xlu0 %3387
      %3389 = vrot.lane.b32.xlu0 %v3091, 32
      %v3390 = vpop.permute.xlu0 %3389
      %3391 = vrot.lane.b32.xlu0 %v3094, 32
      %v3392 = vpop.permute.xlu0 %3391
      %3393 = vrot.lane.b32.xlu0 %v3096, 32
      %v3394 = vpop.permute.xlu0 %3393
      %3395 = vrot.lane.b32.xlu0 %v3099, 32
      %v3396 = vpop.permute.xlu0 %3395
      %3397 = vrot.lane.b32.xlu0 %v3101, 32
      %v3398 = vpop.permute.xlu0 %3397
      %3399 = vrot.lane.b32.xlu0 %v3104, 32
      %v3400 = vpop.permute.xlu0 %3399
      %3401 = vrot.lane.b32.xlu0 %v3106, 32
      %v3402 = vpop.permute.xlu0 %3401
      %3403 = vrot.lane.b32.xlu0 %v3109, 32
      %v3404 = vpop.permute.xlu0 %3403
      %3405 = vrot.lane.b32.xlu0 %v3111, 32
      %v3406 = vpop.permute.xlu0 %3405
      %3407 = vrot.lane.b32.xlu0 %v3114, 32
      %v3408 = vpop.permute.xlu0 %3407
      %3409 = vrot.lane.b32.xlu0 %v3116, 32
      %v3410 = vpop.permute.xlu0 %3409
      %3411 = vrot.lane.b32.xlu0 %v3119, 32
      %v3412 = vpop.permute.xlu0 %3411
      %3413 = vrot.lane.b32.xlu0 %v3121, 32
      %v3414 = vpop.permute.xlu0 %3413
      %3415 = vrot.lane.b32.xlu0 %v3124, 32
      %v3416 = vpop.permute.xlu0 %3415
      %3417 = vrot.lane.b32.xlu0 %v3126, 32
      %v3418 = vpop.permute.xlu0 %3417
      %3419 = vrot.lane.b32.xlu0 %v3129, 32
      %v3420 = vpop.permute.xlu0 %3419
      %3421 = vrot.lane.b32.xlu0 %v3131, 32
      %v3422 = vpop.permute.xlu0 %3421
      %3423 = vrot.lane.b32.xlu0 %v3134, 32
      %v3424 = vpop.permute.xlu0 %3423
      %3425 = vrot.lane.b32.xlu0 %v3136, 32
      %v3426 = vpop.permute.xlu0 %3425
      %3427 = vrot.lane.b32.xlu0 %v3364, 32
      %v3428 = vpop.permute.xlu0 %3427
      %3429 = vrot.lane.b32.xlu0 %v3366, 32
      %v3430 = vpop.permute.xlu0 %3429
      %3463 = vrot.lane.b32.xlu0 %v2836, 64
      %v3464 = vpop.permute.xlu0 %3463
      %3465 = vrot.lane.b32.xlu0 %v2713, 64
      %v3466 = vpop.permute.xlu0 %3465
      %3467 = vrot.lane.b32.xlu0 %v2837, 64
      %v3468 = vpop.permute.xlu0 %3467
      %3469 = vrot.lane.b32.xlu0 %v2716, 64
      %v3470 = vpop.permute.xlu0 %3469
      %3471 = vrot.lane.b32.xlu0 %v2838, 64
      %v3472 = vpop.permute.xlu0 %3471
      %3473 = vrot.lane.b32.xlu0 %v2719, 64
      %v3474 = vpop.permute.xlu0 %3473
      %3475 = vrot.lane.b32.xlu0 %v2839, 64
      %v3476 = vpop.permute.xlu0 %3475
      %3477 = vrot.lane.b32.xlu0 %v2722, 64
      %v3478 = vpop.permute.xlu0 %3477
      %3479 = vrot.lane.b32.xlu0 %v2840, 64
      %v3480 = vpop.permute.xlu0 %3479
      %3481 = vrot.lane.b32.xlu0 %v2725, 64
      %v3482 = vpop.permute.xlu0 %3481
      %3483 = vrot.lane.b32.xlu0 %v2841, 64
      %v3484 = vpop.permute.xlu0 %3483
      %3485 = vrot.lane.b32.xlu0 %v2728, 64
      %v3486 = vpop.permute.xlu0 %3485
      %3487 = vrot.lane.b32.xlu0 %v2842, 64
      %v3488 = vpop.permute.xlu0 %3487
      %3489 = vrot.lane.b32.xlu0 %v2731, 64
      %v3490 = vpop.permute.xlu0 %3489
      %3491 = vrot.lane.b32.xlu0 %v2843, 64
      %v3492 = vpop.permute.xlu0 %3491
      %3493 = vrot.lane.b32.xlu0 %v2734, 64
      %v3494 = vpop.permute.xlu0 %3493
      %3495 = vrot.lane.b32.xlu0 %v2844, 64
      %v3496 = vpop.permute.xlu0 %3495
      %3497 = vrot.lane.b32.xlu0 %v2737, 64
      %v3498 = vpop.permute.xlu0 %3497
      %3499 = vrot.lane.b32.xlu0 %v2845, 64
      %v3500 = vpop.permute.xlu0 %3499
      %3501 = vrot.lane.b32.xlu0 %v2740, 64
      %v3502 = vpop.permute.xlu0 %3501
      %3503 = vrot.lane.b32.xlu0 %v2846, 64
      %v3504 = vpop.permute.xlu0 %3503
      %3505 = vrot.lane.b32.xlu0 %v2743, 64
      %v3506 = vpop.permute.xlu0 %3505
      %3507 = vrot.lane.b32.xlu0 %v2847, 64
      %v3508 = vpop.permute.xlu0 %3507
      %3509 = vrot.lane.b32.xlu0 %v2746, 64
      %v3510 = vpop.permute.xlu0 %3509
      %3511 = vrot.lane.b32.xlu0 %v2848, 64
      %v3512 = vpop.permute.xlu0 %3511
      %3513 = vrot.lane.b32.xlu0 %v2749, 64
      %v3514 = vpop.permute.xlu0 %3513
      %3515 = vrot.lane.b32.xlu0 %v2849, 64
      %v3516 = vpop.permute.xlu0 %3515
      %3517 = vrot.lane.b32.xlu0 %v2752, 64
      %v3518 = vpop.permute.xlu0 %3517
      %3519 = vrot.lane.b32.xlu0 %v2850, 64
      %v3520 = vpop.permute.xlu0 %3519
      %3521 = vrot.lane.b32.xlu0 %v2755, 64
      %v3522 = vpop.permute.xlu0 %3521
      %3553 = vrot.lane.b32.xlu0 %v2904, 96
      %v3554 = vpop.permute.xlu0 %3553
      %3555 = vrot.lane.b32.xlu0 %v2906, 96
      %v3556 = vpop.permute.xlu0 %3555
      %3557 = vrot.lane.b32.xlu0 %v2909, 96
      %v3558 = vpop.permute.xlu0 %3557
      %3559 = vrot.lane.b32.xlu0 %v2911, 96
      %v3560 = vpop.permute.xlu0 %3559
      %3561 = vrot.lane.b32.xlu0 %v2914, 96
      %v3562 = vpop.permute.xlu0 %3561
      %3563 = vrot.lane.b32.xlu0 %v2916, 96
      %v3564 = vpop.permute.xlu0 %3563
      %3565 = vrot.lane.b32.xlu0 %v2919, 96
      %v3566 = vpop.permute.xlu0 %3565
      %3567 = vrot.lane.b32.xlu0 %v2921, 96
      %v3568 = vpop.permute.xlu0 %3567
      %3569 = vrot.lane.b32.xlu0 %v2924, 96
      %v3570 = vpop.permute.xlu0 %3569
      %3571 = vrot.lane.b32.xlu0 %v2926, 96
      %v3572 = vpop.permute.xlu0 %3571
      %3573 = vrot.lane.b32.xlu0 %v2929, 96
      %v3574 = vpop.permute.xlu0 %3573
      %3575 = vrot.lane.b32.xlu0 %v2931, 96
      %v3576 = vpop.permute.xlu0 %3575
      %3577 = vrot.lane.b32.xlu0 %v2934, 96
      %v3578 = vpop.permute.xlu0 %3577
      %3579 = vrot.lane.b32.xlu0 %v2936, 96
      %v3580 = vpop.permute.xlu0 %3579
      %3581 = vrot.lane.b32.xlu0 %v2939, 96
      %v3582 = vpop.permute.xlu0 %3581
      %3583 = vrot.lane.b32.xlu0 %v2941, 96
      %v3584 = vpop.permute.xlu0 %3583
      %3585 = vrot.lane.b32.xlu0 %v2944, 96
      %v3586 = vpop.permute.xlu0 %3585
      %3587 = vrot.lane.b32.xlu0 %v2946, 96
      %v3588 = vpop.permute.xlu0 %3587
      %3589 = vrot.lane.b32.xlu0 %v2949, 96
      %v3590 = vpop.permute.xlu0 %3589
      %3591 = vrot.lane.b32.xlu0 %v2951, 96
      %v3592 = vpop.permute.xlu0 %3591
      %3593 = vrot.lane.b32.xlu0 %v2954, 96
      %v3594 = vpop.permute.xlu0 %3593
      %3595 = vrot.lane.b32.xlu0 %v2956, 96
      %v3596 = vpop.permute.xlu0 %3595
      %3597 = vrot.lane.b32.xlu0 %v2959, 96
      %v3598 = vpop.permute.xlu0 %3597
      %3599 = vrot.lane.b32.xlu0 %v2961, 96
      %v3600 = vpop.permute.xlu0 %3599
      %3601 = vrot.lane.b32.xlu0 %v2964, 96
      %v3602 = vpop.permute.xlu0 %3601
      %3603 = vrot.lane.b32.xlu0 %v2966, 96
      %v3604 = vpop.permute.xlu0 %3603
      %3605 = vrot.lane.b32.xlu0 %v2969, 96
      %v3606 = vpop.permute.xlu0 %3605
      %3607 = vrot.lane.b32.xlu0 %v2971, 96
      %v3608 = vpop.permute.xlu0 %3607
      %3609 = vrot.lane.b32.xlu0 %v3327, 96
      %v3610 = vpop.permute.xlu0 %3609
      %3611 = vrot.lane.b32.xlu0 %v3329, 96
      %v3612 = vpop.permute.xlu0 %3611
      %v3643 = vsel %vm1827, %v2835, %v2973
      %v3644 = vsel %vm1827, %v2710, %v2975
      %v3645 = vsel %vm1827, %v2836, %v2977
      %v3646 = vsel %vm1827, %v2713, %v2979
      %v3647 = vsel %vm1827, %v2837, %v2981
      %v3648 = vsel %vm1827, %v2716, %v2983
      %v3649 = vsel %vm1827, %v2838, %v2985
      %v3650 = vsel %vm1827, %v2719, %v2987
      %v3651 = vsel %vm1827, %v2839, %v2989
      %v3652 = vsel %vm1827, %v2722, %v2991
      %v3653 = vsel %vm1827, %v2840, %v2993
      %v3654 = vsel %vm1827, %v2725, %v2995
      %v3655 = vsel %vm1827, %v2841, %v2997
      %v3656 = vsel %vm1827, %v2728, %v2999
      %v3657 = vsel %vm1827, %v2842, %v3001
      %v3658 = vsel %vm1827, %v2731, %v3003
      %v3659 = vsel %vm1827, %v2843, %v3005
      %v3660 = vsel %vm1827, %v2734, %v3007
      %v3661 = vsel %vm1827, %v2844, %v3009
      %v3662 = vsel %vm1827, %v2737, %v3011
      %v3663 = vsel %vm1827, %v2845, %v3013
      %v3664 = vsel %vm1827, %v2740, %v3015
      %v3665 = vsel %vm1827, %v2846, %v3017
      %v3666 = vsel %vm1827, %v2743, %v3019
      %v3667 = vsel %vm1827, %v2847, %v3021
      %v3668 = vsel %vm1827, %v2746, %v3023
      %v3669 = vsel %vm1827, %v2848, %v3025
      %v3670 = vsel %vm1827, %v2749, %v3027
      %v3671 = vsel %vm1827, %v2849, %v3029
      %v3672 = vsel %vm1827, %v2752, %v3031
      %vm3673 = vcmask 523264
      %v3674 = vsel %vm3673, %v3643, %v3138
      %v3675 = vsel %vm3673, %v3644, %v3140
      %v3676 = vsel %vm3673, %v3645, %v3142
      %v3677 = vsel %vm3673, %v3646, %v3144
      %v3678 = vsel %vm3673, %v3647, %v3146
      %v3679 = vsel %vm3673, %v3648, %v3148
      %v3680 = vsel %vm3673, %v3649, %v3150
      %v3681 = vsel %vm3673, %v3650, %v3152
      %v3682 = vsel %vm3673, %v3651, %v3154
      %v3683 = vsel %vm3673, %v3652, %v3156
      %v3684 = vsel %vm3673, %v3653, %v3158
      %v3685 = vsel %vm3673, %v3654, %v3160
      %v3686 = vsel %vm3673, %v3655, %v3162
      %v3687 = vsel %vm3673, %v3656, %v3164
      %v3688 = vsel %vm3673, %v3657, %v3166
      %v3689 = vsel %vm3673, %v3658, %v3168
      %v3690 = vsel %vm3673, %v3659, %v3170
      %v3691 = vsel %vm3673, %v3660, %v3172
      %v3692 = vsel %vm3673, %v3661, %v3174
      %v3693 = vsel %vm3673, %v3662, %v3176
      %v3694 = vsel %vm3673, %v3663, %v3178
      %v3695 = vsel %vm3673, %v3664, %v3180
      %v3696 = vsel %vm3673, %v3665, %v3182
      %v3697 = vsel %vm3673, %v3666, %v3184
      %v3698 = vsel %vm3673, %v3667, %v3186
      %v3699 = vsel %vm3673, %v3668, %v3188
      %v3700 = vsel %vm3673, %v3669, %v3190
      %v3701 = vsel %vm3673, %v3670, %v3192
      %v3702 = vsel %vm3673, %v3671, %v3194
      %v3703 = vsel %vm3673, %v3672, %v3196
      %vm3704 = vcmask 785408
      %v3705 = vsel %vm3704, %v3674, %v3229
      %v3706 = vsel %vm3704, %v3675, %v3231
      %v3707 = vsel %vm3704, %v3674, %v3233
      %v3708 = vsel %vm3704, %v3675, %v3235
      %v3709 = vsel %vm3704, %v3676, %v3237
      %v3710 = vsel %vm3704, %v3677, %v3239
      %v3711 = vsel %vm3704, %v3678, %v3241
      %v3712 = vsel %vm3704, %v3679, %v3243
      %v3713 = vsel %vm3704, %v3680, %v3245
      %v3714 = vsel %vm3704, %v3681, %v3247
      %v3715 = vsel %vm3704, %v3682, %v3249
      %v3716 = vsel %vm3704, %v3683, %v3251
      %v3717 = vsel %vm3704, %v3684, %v3253
      %v3718 = vsel %vm3704, %v3685, %v3255
      %v3719 = vsel %vm3704, %v3686, %v3257
      %v3720 = vsel %vm3704, %v3687, %v3259
      %v3721 = vsel %vm3704, %v3688, %v3261
      %v3722 = vsel %vm3704, %v3689, %v3263
      %v3723 = vsel %vm3704, %v3690, %v3265
      %v3724 = vsel %vm3704, %v3691, %v3267
      %v3725 = vsel %vm3704, %v3692, %v3269
      %v3726 = vsel %vm3704, %v3693, %v3271
      %v3727 = vsel %vm3704, %v3694, %v3273
      %v3728 = vsel %vm3704, %v3695, %v3275
      %v3729 = vsel %vm3704, %v3696, %v3277
      %v3730 = vsel %vm3704, %v3697, %v3279
      %v3731 = vsel %vm3704, %v3698, %v3281
      %v3732 = vsel %vm3704, %v3699, %v3283
      %v3733 = vsel %vm3704, %v3700, %v3285
      %v3734 = vsel %vm3704, %v3701, %v3287
      %v3735 = vsel %vm3704, %v3702, %v3289
      %v3736 = vsel %vm3704, %v3703, %v3291
      %v3737 = vsel %vm1827, %v2899, %v3368
      %v3738 = vsel %vm1827, %v2901, %v3370
      %v3739 = vsel %vm1827, %v2904, %v3372
      %v3740 = vsel %vm1827, %v2906, %v3374
      %v3741 = vsel %vm1827, %v2909, %v3376
      %v3742 = vsel %vm1827, %v2911, %v3378
      %v3743 = vsel %vm1827, %v2914, %v3380
      %v3744 = vsel %vm1827, %v2916, %v3382
      %v3745 = vsel %vm1827, %v2919, %v3384
      %v3746 = vsel %vm1827, %v2921, %v3386
      %v3747 = vsel %vm1827, %v2924, %v3388
      %v3748 = vsel %vm1827, %v2926, %v3390
      %v3749 = vsel %vm1827, %v2929, %v3392
      %v3750 = vsel %vm1827, %v2931, %v3394
      %v3751 = vsel %vm1827, %v2934, %v3396
      %v3752 = vsel %vm1827, %v2936, %v3398
      %v3753 = vsel %vm1827, %v2939, %v3400
      %v3754 = vsel %vm1827, %v2941, %v3402
      %v3755 = vsel %vm1827, %v2944, %v3404
      %v3756 = vsel %vm1827, %v2946, %v3406
      %v3757 = vsel %vm1827, %v2949, %v3408
      %v3758 = vsel %vm1827, %v2951, %v3410
      %v3759 = vsel %vm1827, %v2954, %v3412
      %v3760 = vsel %vm1827, %v2956, %v3414
      %v3761 = vsel %vm1827, %v2959, %v3416
      %v3762 = vsel %vm1827, %v2961, %v3418
      %v3763 = vsel %vm1827, %v2964, %v3420
      %v3764 = vsel %vm1827, %v2966, %v3422
      %v3765 = vsel %vm1827, %v2969, %v3424
      %v3766 = vsel %vm1827, %v2971, %v3426
      %v3767 = vsel %vm1827, %v3327, %v3428
      %v3768 = vsel %vm1827, %v3329, %v3430
      %v3769 = vsel %vm3673, %v3737, %v3464
      %v3770 = vsel %vm3673, %v3738, %v3466
      %v3771 = vsel %vm3673, %v3739, %v3468
      %v3772 = vsel %vm3673, %v3740, %v3470
      %v3773 = vsel %vm3673, %v3741, %v3472
      %v3774 = vsel %vm3673, %v3742, %v3474
      %v3775 = vsel %vm3673, %v3743, %v3476
      %v3776 = vsel %vm3673, %v3744, %v3478
      %v3777 = vsel %vm3673, %v3745, %v3480
      %v3778 = vsel %vm3673, %v3746, %v3482
      %v3779 = vsel %vm3673, %v3747, %v3484
      %v3780 = vsel %vm3673, %v3748, %v3486
      %v3781 = vsel %vm3673, %v3749, %v3488
      %v3782 = vsel %vm3673, %v3750, %v3490
      %v3783 = vsel %vm3673, %v3751, %v3492
      %v3784 = vsel %vm3673, %v3752, %v3494
      %v3785 = vsel %vm3673, %v3753, %v3496
      %v3786 = vsel %vm3673, %v3754, %v3498
      %v3787 = vsel %vm3673, %v3755, %v3500
      %v3788 = vsel %vm3673, %v3756, %v3502
      %v3789 = vsel %vm3673, %v3757, %v3504
      %v3790 = vsel %vm3673, %v3758, %v3506
      %v3791 = vsel %vm3673, %v3759, %v3508
      %v3792 = vsel %vm3673, %v3760, %v3510
      %v3793 = vsel %vm3673, %v3761, %v3512
      %v3794 = vsel %vm3673, %v3762, %v3514
      %v3795 = vsel %vm3673, %v3763, %v3516
      %v3796 = vsel %vm3673, %v3764, %v3518
      %v3797 = vsel %vm3673, %v3765, %v3520
      %v3798 = vsel %vm3673, %v3766, %v3522
      %v3799 = vsel %vm3673, %v3767, %v3520
      %v3800 = vsel %vm3673, %v3768, %v3522
      %v3801 = vsel %vm3704, %v3769, %v3554
      %v3802 = vsel %vm3704, %v3770, %v3556
      %v3803 = vsel %vm3704, %v3771, %v3558
      %v3804 = vsel %vm3704, %v3772, %v3560
      %v3805 = vsel %vm3704, %v3773, %v3562
      %v3806 = vsel %vm3704, %v3774, %v3564
      %v3807 = vsel %vm3704, %v3775, %v3566
      %v3808 = vsel %vm3704, %v3776, %v3568
      %v3809 = vsel %vm3704, %v3777, %v3570
      %v3810 = vsel %vm3704, %v3778, %v3572
      %v3811 = vsel %vm3704, %v3779, %v3574
      %v3812 = vsel %vm3704, %v3780, %v3576
      %v3813 = vsel %vm3704, %v3781, %v3578
      %v3814 = vsel %vm3704, %v3782, %v3580
      %v3815 = vsel %vm3704, %v3783, %v3582
      %v3816 = vsel %vm3704, %v3784, %v3584
      %v3817 = vsel %vm3704, %v3785, %v3586
      %v3818 = vsel %vm3704, %v3786, %v3588
      %v3819 = vsel %vm3704, %v3787, %v3590
      %v3820 = vsel %vm3704, %v3788, %v3592
      %v3821 = vsel %vm3704, %v3789, %v3594
      %v3822 = vsel %vm3704, %v3790, %v3596
      %v3823 = vsel %vm3704, %v3791, %v3598
      %v3824 = vsel %vm3704, %v3792, %v3600
      %v3825 = vsel %vm3704, %v3793, %v3602
      %v3826 = vsel %vm3704, %v3794, %v3604
      %v3827 = vsel %vm3704, %v3795, %v3606
      %v3828 = vsel %vm3704, %v3796, %v3608
      %v3829 = vsel %vm3704, %v3797, %v3610
      %v3830 = vsel %vm3704, %v3798, %v3612
      %v3831 = vsel %vm3704, %v3799, %v3610
      %v3832 = vsel %vm3704, %v3800, %v3612
      %v3833 = vld [vmem:[%s3] sm:$0xff]
      %v3834 = vld [vmem:[%s3 + $0x8] sm:$0xff]
      %v3835 = vld [vmem:[%s3 + $0x10] sm:$0xff]
      %v3836 = vld [vmem:[%s3 + $0x18] sm:$0xff]
      %v3837 = vld [vmem:[%s3 + $0x20] sm:$0xff]
      %v3838 = vld [vmem:[%s3 + $0x28] sm:$0xff]
      %v3839 = vld [vmem:[%s3 + $0x30] sm:$0xff]
      %v3840 = vld [vmem:[%s3 + $0x38] sm:$0xff]
      %v3841 = vld [vmem:[%s3 + $0x40] sm:$0xff]
      %v3842 = vld [vmem:[%s3 + $0x48] sm:$0xff]
      %v3843 = vld [vmem:[%s3 + $0x50] sm:$0xff]
      %v3844 = vld [vmem:[%s3 + $0x58] sm:$0xff]
      %v3845 = vld [vmem:[%s3 + $0x60] sm:$0xff]
      %v3846 = vld [vmem:[%s3 + $0x68] sm:$0xff]
      %v3847 = vld [vmem:[%s3 + $0x70] sm:$0xff]
      %v3848 = vld [vmem:[%s3 + $0x78] sm:$0xff]
      %v3849 = vld [vmem:[%s3 + $0x80] sm:$0xff]
      %v3850 = vld [vmem:[%s3 + $0x88] sm:$0xff]
      %v3851 = vld [vmem:[%s3 + $0x90] sm:$0xff]
      %v3852 = vld [vmem:[%s3 + $0x98] sm:$0xff]
      %v3853 = vld [vmem:[%s3 + $0xa0] sm:$0xff]
      %v3854 = vld [vmem:[%s3 + $0xa8] sm:$0xff]
      %v3855 = vld [vmem:[%s3 + $0xb0] sm:$0xff]
      %v3856 = vld [vmem:[%s3 + $0xb8] sm:$0xff]
      %v3857 = vld [vmem:[%s3 + $0xc0] sm:$0xff]
      %v3858 = vld [vmem:[%s3 + $0xc8] sm:$0xff]
      %v3859 = vld [vmem:[%s3 + $0xd0] sm:$0xff]
      %v3860 = vld [vmem:[%s3 + $0xd8] sm:$0xff]
      %v3861 = vld [vmem:[%s3 + $0xe0] sm:$0xff]
      %v3862 = vld [vmem:[%s3 + $0xe8] sm:$0xff]
      %v3863 = vld [vmem:[%s3 + $0xf0] sm:$0xff]
      %v3864 = vld [vmem:[%s3 + $0xf8] sm:$0xff]
      %v3865 = vld [vmem:[%s3 + $0x100] sm:$0xff]
      %v3866 = vld [vmem:[%s3 + $0x108] sm:$0xff]
      %v3867 = vld [vmem:[%s3 + $0x110] sm:$0xff]
      %v3868 = vld [vmem:[%s3 + $0x118] sm:$0xff]
      %v3869 = vld [vmem:[%s435] sm:$0x1]
      %v3871 = vlaneseq
      %v3872 = vshrl.u32 %v3871, 7
      %v3873 = vsub.s32 0, %v3872
      %v3874 = vrot.slane %v3869, %v3873
      %v3876 = vsel %vm1827, %v3069, 0
      %v3878 = vsel %vm1827, %v3071, 0
      %v3880 = vsel %vm1827, %v3074, 0
      %v3882 = vsel %vm1827, %v3076, 0
      %v3884 = vsel %vm1827, %v3079, 0
      %v3886 = vsel %vm1827, %v3081, 0
      %v3888 = vsel %vm1827, %v3084, 0
      %v3890 = vsel %vm1827, %v3086, 0
      %v3892 = vsel %vm1827, %v3089, 0
      %v3894 = vsel %vm1827, %v3091, 0
      %v3896 = vsel %vm1827, %v3094, 0
      %v3898 = vsel %vm1827, %v3096, 0
      %v3900 = vsel %vm1827, %v3099, 0
      %v3902 = vsel %vm1827, %v3101, 0
      %v3904 = vsel %vm1827, %v3104, 0
      %v3906 = vsel %vm1827, %v3106, 0
      %v3908 = vsel %vm1827, %v3109, 0
      %v3910 = vsel %vm1827, %v3111, 0
      %v3912 = vsel %vm1827, %v3114, 0
      %v3914 = vsel %vm1827, %v3116, 0
      %v3916 = vsel %vm1827, %v3119, 0
      %v3918 = vsel %vm1827, %v3121, 0
      %v3920 = vsel %vm1827, %v3124, 0
      %v3922 = vsel %vm1827, %v3126, 0
      %v3924 = vsel %vm1827, %v3129, 0
      %v3926 = vsel %vm1827, %v3131, 0
      %v3928 = vsel %vm1827, %v3134, 0
      %v3930 = vsel %vm1827, %v3136, 0
      %v3932 = vsel %vm1827, %v3364, 0
      %v3934 = vsel %vm1827, %v3366, 0
      %3936 = vmatprep.subr.mxu0 0.0
      %3937 = vmatpush1.msra.mxu0 %v3833
      %3938 = vmatprep.subr.mxu0 0.0
      %3939 = vmatpush1.msra.mxu0 %v3834
      %3940 = vmatprep.subr.mxu0 0.0
      %3941 = vmatpush1.msra.mxu0 %v3835
      %3942 = vmatprep.subr.mxu0 0.0
      %3943 = vmatpush1.msra.mxu0 %v3836
      %3944 = vmatprep.subr.mxu0 0.0
      %3945 = vmatpush1.msra.mxu0 %v3837
      %3946 = vmatprep.subr.mxu0 0.0
      %3947 = vmatpush1.msra.mxu0 %v3838
      %3948 = vmatprep.subr.mxu0 0.0
      %3949 = vmatpush1.msra.mxu0 %v3839
      %3950 = vmatprep.subr.mxu0 0.0
      %3951 = vmatpush1.msra.mxu0 %v3840
      %3952 = vmatprep.subr.mxu0 0.0
      %3953 = vmatpush1.msra.mxu0 %v3841
      %3954 = vmatprep.subr.mxu0 0.0
      %3955 = vmatpush1.msra.mxu0 %v3842
      %3956 = vmatprep.subr.mxu0 0.0
      %3957 = vmatpush1.msra.mxu0 %v3843
      %3958 = vmatprep.subr.mxu0 0.0
      %3959 = vmatpush1.msra.mxu0 %v3844
      %3960 = vmatprep.subr.mxu0 0.0
      %3961 = vmatpush1.msra.mxu0 %v3845
      %3962 = vmatprep.subr.mxu0 0.0
      %3963 = vmatpush1.msra.mxu0 %v3846
      %3964 = vmatprep.subr.mxu0 0.0
      %3965 = vmatpush1.msra.mxu0 %v3847
      %3966 = vmatprep.subr.mxu0 0.0
      %3967 = vmatpush1.msra.mxu0 %v3848
      %3968 = vmatprep.subr.mxu0 0.0
      %3969 = vmatpush1.msra.mxu0 %v3849
      %3970 = vmatprep.subr.mxu0 0.0
      %3971 = vmatpush1.msra.mxu0 %v3850
      %3972 = vmatprep.subr.mxu0 0.0
      %3973 = vmatpush1.msra.mxu0 %v3851
      %3974 = vmatprep.subr.mxu0 0.0
      %3975 = vmatpush1.msra.mxu0 %v3852
      %3976 = vmatprep.subr.mxu0 0.0
      %3977 = vmatpush1.msra.mxu0 %v3853
      %3978 = vmatprep.subr.mxu0 0.0
      %3979 = vmatpush1.msra.mxu0 %v3854
      %3980 = vmatprep.subr.mxu0 0.0
      %3981 = vmatpush1.msra.mxu0 %v3855
      %3982 = vmatprep.subr.mxu0 0.0
      %3983 = vmatpush1.msra.mxu0 %v3856
      %3984 = vmatprep.subr.mxu0 0.0
      %3985 = vmatpush1.msra.mxu0 %v3857
      %3986 = vmatprep.subr.mxu0 0.0
      %3987 = vmatpush1.msra.mxu0 %v3858
      %3988 = vmatprep.subr.mxu0 0.0
      %3989 = vmatpush1.msra.mxu0 %v3859
      %3990 = vmatprep.subr.mxu0 0.0
      %3991 = vmatpush1.msra.mxu0 %v3860
      %3992 = vmatprep.subr.mxu0 0.0
      %3993 = vmatpush1.msra.mxu0 %v3861
      %3994 = vmatprep.subr.mxu0 0.0
      %3995 = vmatpush1.msra.mxu0 %v3862
      %3996 = vmatprep.subr.mxu0 0.0
      %3997 = vmatpush1.msra.mxu0 %v3863
      %3998 = vmatprep.subr.mxu0 0.0
      %3999 = vmatpush1.msra.mxu0 %v3864
      %4000 = vmatprep.mubr.f32.mxu0 %v3801
      %4001 = vmatmul.mubr.f32.gmra.mrb[0].mxu0 %v3705
      %v4002 = vpop.f32.mrb[0].mxu0
      %v4003 = vadd.f32 %v3874, %v4002
      %v4004 = vpop.f32.mrb[0].mxu0
      %4005 = vmatprep.mubr.f32.mxu0 %v3802
      %4006 = vmatmul.mubr.f32.gmra.mrb[0].mxu0 %v3706
      %v4007 = vpop.f32.mrb[0].mxu0
      %v4008 = vadd.f32 %v3874, %v4007
      %v4009 = vpop.f32.mrb[0].mxu0
      %4010 = vmatprep.mubr.f32.mxu0 %v3803
      %4011 = vmatmul.mubr.f32.gmra.mrb[0].mxu0 %v3707
      %v4012 = vpop.f32.mrb[0].mxu0
      %v4013 = vadd.f32 %v3874, %v4012
      %v4014 = vpop.f32.mrb[0].mxu0
      %4015 = vmatprep.mubr.f32.mxu0 %v3804
      %4016 = vmatmul.mubr.f32.gmra.mrb[0].mxu0 %v3708
      %v4017 = vpop.f32.mrb[0].mxu0
      %v4018 = vadd.f32 %v3874, %v4017
      %v4019 = vpop.f32.mrb[0].mxu0
      %4020 = vmatprep.mubr.f32.mxu0 %v3805
      %4021 = vmatmul.mubr.f32.gmra.mrb[0].mxu0 %v3709
      %v4022 = vpop.f32.mrb[0].mxu0
      %v4023 = vadd.f32 %v3874, %v4022
      %v4024 = vpop.f32.mrb[0].mxu0
      %4025 = vmatprep.mubr.f32.mxu0 %v3806
      %4026 = vmatmul.mubr.f32.gmra.mrb[0].mxu0 %v3710
      %v4027 = vpop.f32.mrb[0].mxu0
      %v4028 = vadd.f32 %v3874, %v4027
      %v4029 = vpop.f32.mrb[0].mxu0
      %4030 = vmatprep.mubr.f32.mxu0 %v3807
      %4031 = vmatmul.mubr.f32.gmra.mrb[0].mxu0 %v3711
      %v4032 = vpop.f32.mrb[0].mxu0
      %v4033 = vadd.f32 %v3874, %v4032
      %v4034 = vpop.f32.mrb[0].mxu0
      %4035 = vmatprep.mubr.f32.mxu0 %v3808
      %4036 = vmatmul.mubr.f32.gmra.mrb[0].mxu0 %v3712
      %v4037 = vpop.f32.mrb[0].mxu0
      %v4038 = vadd.f32 %v3874, %v4037
      %v4039 = vpop.f32.mrb[0].mxu0
      %4040 = vmatprep.mubr.f32.mxu0 %v3809
      %4041 = vmatmul.mubr.f32.gmra.mrb[0].mxu0 %v3713
      %v4042 = vpop.f32.mrb[0].mxu0
      %v4043 = vadd.f32 %v3874, %v4042
      %v4044 = vpop.f32.mrb[0].mxu0
      %4045 = vmatprep.mubr.f32.mxu0 %v3810
      %4046 = vmatmul.mubr.f32.gmra.mrb[0].mxu0 %v3714
      %v4047 = vpop.f32.mrb[0].mxu0
      %v4048 = vadd.f32 %v3874, %v4047
      %v4049 = vpop.f32.mrb[0].mxu0
      %4050 = vmatprep.mubr.f32.mxu0 %v3811
      %4051 = vmatmul.mubr.f32.gmra.mrb[0].mxu0 %v3715
      %v4052 = vpop.f32.mrb[0].mxu0
      %v4053 = vadd.f32 %v3874, %v4052
      %v4054 = vpop.f32.mrb[0].mxu0
      %4055 = vmatprep.mubr.f32.mxu0 %v3812
      %4056 = vmatmul.mubr.f32.gmra.mrb[0].mxu0 %v3716
      %v4057 = vpop.f32.mrb[0].mxu0
      %v4058 = vadd.f32 %v3874, %v4057
      %v4059 = vpop.f32.mrb[0].mxu0
      %4060 = vmatprep.mubr.f32.mxu0 %v3813
      %4061 = vmatmul.mubr.f32.gmra.mrb[0].mxu0 %v3717
      %v4062 = vpop.f32.mrb[0].mxu0
      %v4063 = vadd.f32 %v3874, %v4062
      %v4064 = vpop.f32.mrb[0].mxu0
      %4065 = vmatprep.mubr.f32.mxu0 %v3814
      %4066 = vmatmul.mubr.f32.gmra.mrb[0].mxu0 %v3718
      %v4067 = vpop.f32.mrb[0].mxu0
      %v4068 = vadd.f32 %v3874, %v4067
      %v4069 = vpop.f32.mrb[0].mxu0
      %4070 = vmatprep.mubr.f32.mxu0 %v3815
      %4071 = vmatmul.mubr.f32.gmra.mrb[0].mxu0 %v3719
      %v4072 = vpop.f32.mrb[0].mxu0
      %v4073 = vadd.f32 %v3874, %v4072
      %v4074 = vpop.f32.mrb[0].mxu0
      %4075 = vmatprep.mubr.f32.mxu0 %v3816
      %4076 = vmatmul.mubr.f32.gmra.mrb[0].mxu0 %v3720
      %v4077 = vpop.f32.mrb[0].mxu0
      %v4078 = vadd.f32 %v3874, %v4077
      %v4079 = vpop.f32.mrb[0].mxu0
      %4080 = vmatprep.mubr.f32.mxu0 %v3817
      %4081 = vmatmul.mubr.f32.gmra.mrb[0].mxu0 %v3721
      %v4082 = vpop.f32.mrb[0].mxu0
      %v4083 = vadd.f32 %v3874, %v4082
      %v4084 = vpop.f32.mrb[0].mxu0
      %4085 = vmatprep.mubr.f32.mxu0 %v3818
      %4086 = vmatmul.mubr.f32.gmra.mrb[0].mxu0 %v3722
      %v4087 = vpop.f32.mrb[0].mxu0
      %v4088 = vadd.f32 %v3874, %v4087
      %v4089 = vpop.f32.mrb[0].mxu0
      %4090 = vmatprep.mubr.f32.mxu0 %v3819
      %4091 = vmatmul.mubr.f32.gmra.mrb[0].mxu0 %v3723
      %v4092 = vpop.f32.mrb[0].mxu0
      %v4093 = vadd.f32 %v3874, %v4092
      %v4094 = vpop.f32.mrb[0].mxu0
      %4095 = vmatprep.mubr.f32.mxu0 %v3820
      %4096 = vmatmul.mubr.f32.gmra.mrb[0].mxu0 %v3724
      %v4097 = vpop.f32.mrb[0].mxu0
      %v4098 = vadd.f32 %v3874, %v4097
      %v4099 = vpop.f32.mrb[0].mxu0
      %4100 = vmatprep.mubr.f32.mxu0 %v3821
      %4101 = vmatmul.mubr.f32.gmra.mrb[0].mxu0 %v3725
      %v4102 = vpop.f32.mrb[0].mxu0
      %v4103 = vadd.f32 %v3874, %v4102
      %v4104 = vpop.f32.mrb[0].mxu0
      %4105 = vmatprep.mubr.f32.mxu0 %v3822
      %4106 = vmatmul.mubr.f32.gmra.mrb[0].mxu0 %v3726
      %v4107 = vpop.f32.mrb[0].mxu0
      %v4108 = vadd.f32 %v3874, %v4107
      %v4109 = vpop.f32.mrb[0].mxu0
      %4110 = vmatprep.mubr.f32.mxu0 %v3823
      %4111 = vmatmul.mubr.f32.gmra.mrb[0].mxu0 %v3727
      %v4112 = vpop.f32.mrb[0].mxu0
      %v4113 = vadd.f32 %v3874, %v4112
      %v4114 = vpop.f32.mrb[0].mxu0
      %4115 = vmatprep.mubr.f32.mxu0 %v3824
      %4116 = vmatmul.mubr.f32.gmra.mrb[0].mxu0 %v3728
      %v4117 = vpop.f32.mrb[0].mxu0
      %v4118 = vadd.f32 %v3874, %v4117
      %v4119 = vpop.f32.mrb[0].mxu0
      %4120 = vmatprep.mubr.f32.mxu0 %v3825
      %4121 = vmatmul.mubr.f32.gmra.mrb[0].mxu0 %v3729
      %v4122 = vpop.f32.mrb[0].mxu0
      %v4123 = vadd.f32 %v3874, %v4122
      %v4124 = vpop.f32.mrb[0].mxu0
      %4125 = vmatprep.mubr.f32.mxu0 %v3826
      %4126 = vmatmul.mubr.f32.gmra.mrb[0].mxu0 %v3730
      %v4127 = vpop.f32.mrb[0].mxu0
      %v4128 = vadd.f32 %v3874, %v4127
      %v4129 = vpop.f32.mrb[0].mxu0
      %4130 = vmatprep.mubr.f32.mxu0 %v3827
      %4131 = vmatmul.mubr.f32.gmra.mrb[0].mxu0 %v3731
      %v4132 = vpop.f32.mrb[0].mxu0
      %v4133 = vadd.f32 %v3874, %v4132
      %v4134 = vpop.f32.mrb[0].mxu0
      %4135 = vmatprep.mubr.f32.mxu0 %v3828
      %4136 = vmatmul.mubr.f32.gmra.mrb[0].mxu0 %v3732
      %v4137 = vpop.f32.mrb[0].mxu0
      %v4138 = vadd.f32 %v3874, %v4137
      %v4139 = vpop.f32.mrb[0].mxu0
      %4140 = vmatprep.mubr.f32.mxu0 %v3829
      %4141 = vmatmul.mubr.f32.gmra.mrb[0].mxu0 %v3733
      %v4142 = vpop.f32.mrb[0].mxu0
      %v4143 = vadd.f32 %v3874, %v4142
      %v4144 = vpop.f32.mrb[0].mxu0
      %4145 = vmatprep.mubr.f32.mxu0 %v3830
      %4146 = vmatmul.mubr.f32.gmra.mrb[0].mxu0 %v3734
      %v4147 = vpop.f32.mrb[0].mxu0
      %v4148 = vadd.f32 %v3874, %v4147
      %v4149 = vpop.f32.mrb[0].mxu0
      %4150 = vmatprep.mubr.f32.mxu0 %v3831
      %4151 = vmatmul.mubr.f32.gmra.mrb[0].mxu0 %v3735
      %v4152 = vpop.f32.mrb[0].mxu0
      %v4153 = vadd.f32 %v3874, %v4152
      %v4154 = vpop.f32.mrb[0].mxu0
      %4155 = vmatprep.mubr.f32.mxu0 %v3832
      %4156 = vmatmul.mubr.f32.gmra.mrb[0].mxu0 %v3736
      %v4157 = vpop.f32.mrb[0].mxu0
      %v4158 = vadd.f32 %v3874, %v4157
      %v4159 = vpop.f32.mrb[0].mxu0
      %4160 = vdwg.mxu0
      %4161 = vmatprep.subr.mxu0 0.0
      %4162 = vmatpush1.msra.mxu0 %v3865
      %4163 = vmatprep.subr.mxu0 0.0
      %4164 = vmatpush1.msra.mxu0 %v3866
      %4165 = vmatprep.subr.mxu0 0.0
      %4166 = vmatpush1.msra.mxu0 %v3867
      %4167 = vmatprep.subr.mxu0 0.0
      %4168 = vmatpush1.msra.mxu0 %v3868
      %4169 = vmatprep.subr.mxu0 0.0
      %4170 = vmatpush1.msra.mxu0 0.0
      %4171 = vmatprep.subr.mxu0 0.0
      %4172 = vmatpush1.msra.mxu0 0.0
      %4173 = vmatprep.subr.mxu0 0.0
      %4174 = vmatpush1.msra.mxu0 0.0
      %4175 = vmatprep.subr.mxu0 0.0
      %4176 = vmatpush1.msra.mxu0 0.0
      %4177 = vmatprep.subr.mxu0 0.0
      %4178 = vmatpush1.msra.mxu0 0.0
      %4179 = vmatprep.subr.mxu0 0.0
      %4180 = vmatpush1.msra.mxu0 0.0
      %4181 = vmatprep.subr.mxu0 0.0
      %4182 = vmatpush1.msra.mxu0 0.0
      %4183 = vmatprep.subr.mxu0 0.0
      %4184 = vmatpush1.msra.mxu0 0.0
      %4185 = vmatprep.subr.mxu0 0.0
      %4186 = vmatpush1.msra.mxu0 0.0
      %4187 = vmatprep.subr.mxu0 0.0
      %4188 = vmatpush1.msra.mxu0 0.0
      %4189 = vmatprep.subr.mxu0 0.0
      %4190 = vmatpush1.msra.mxu0 0.0
      %4191 = vmatprep.subr.mxu0 0.0
      %4192 = vmatpush1.msra.mxu0 0.0
      %4193 = vmatprep.subr.mxu0 0.0
      %4194 = vmatpush1.msra.mxu0 0.0
      %4195 = vmatprep.subr.mxu0 0.0
      %4196 = vmatpush1.msra.mxu0 0.0
      %4197 = vmatprep.subr.mxu0 0.0
      %4198 = vmatpush1.msra.mxu0 0.0
      %4199 = vmatprep.subr.mxu0 0.0
      %4200 = vmatpush1.msra.mxu0 0.0
      %4201 = vmatprep.subr.mxu0 0.0
      %4202 = vmatpush1.msra.mxu0 0.0
      %4203 = vmatprep.subr.mxu0 0.0
      %4204 = vmatpush1.msra.mxu0 0.0
      %4205 = vmatprep.subr.mxu0 0.0
      %4206 = vmatpush1.msra.mxu0 0.0
      %4207 = vmatprep.subr.mxu0 0.0
      %4208 = vmatpush1.msra.mxu0 0.0
      %4209 = vmatprep.subr.mxu0 0.0
      %4210 = vmatpush1.msra.mxu0 0.0
      %4211 = vmatprep.subr.mxu0 0.0
      %4212 = vmatpush1.msra.mxu0 0.0
      %4213 = vmatprep.subr.mxu0 0.0
      %4214 = vmatpush1.msra.mxu0 0.0
      %4215 = vmatprep.subr.mxu0 0.0
      %4216 = vmatpush1.msra.mxu0 0.0
      %4217 = vmatprep.subr.mxu0 0.0
      %4218 = vmatpush1.msra.mxu0 0.0
      %4219 = vmatprep.subr.mxu0 0.0
      %4220 = vmatpush1.msra.mxu0 0.0
      %4221 = vmatprep.subr.mxu0 0.0
      %4222 = vmatpush1.msra.mxu0 0.0
      %4223 = vmatprep.subr.mxu0 0.0
      %4224 = vmatpush1.msra.mxu0 0.0
      %4225 = vmatprep.mubr.f32.mxu0 0.0
      %4226 = vmatmul.mubr.f32.gmra.mrb[0].mxu0 %v3876
      %v4227 = vpop.f32.mrb[0].mxu0
      %v4228 = vadd.f32 %v4003, %v4227
      %v4229 = vpop.f32.mrb[0].mxu0
      %4230 = vmatprep.mubr.f32.mxu0 0.0
      %4231 = vmatmul.mubr.f32.gmra.mrb[0].mxu0 %v3878
      %v4232 = vpop.f32.mrb[0].mxu0
      %v4233 = vadd.f32 %v4008, %v4232
      %v4234 = vpop.f32.mrb[0].mxu0
      %4235 = vmatprep.mubr.f32.mxu0 0.0
      %4236 = vmatmul.mubr.f32.gmra.mrb[0].mxu0 %v3880
      %v4237 = vpop.f32.mrb[0].mxu0
      %v4238 = vadd.f32 %v4013, %v4237
      %v4239 = vpop.f32.mrb[0].mxu0
      %4240 = vmatprep.mubr.f32.mxu0 0.0
      %4241 = vmatmul.mubr.f32.gmra.mrb[0].mxu0 %v3882
      %v4242 = vpop.f32.mrb[0].mxu0
      %v4243 = vadd.f32 %v4018, %v4242
      %v4244 = vpop.f32.mrb[0].mxu0
      %4245 = vmatprep.mubr.f32.mxu0 0.0
      %4246 = vmatmul.mubr.f32.gmra.mrb[0].mxu0 %v3884
      %v4247 = vpop.f32.mrb[0].mxu0
      %v4248 = vadd.f32 %v4023, %v4247
      %v4249 = vpop.f32.mrb[0].mxu0
      %4250 = vmatprep.mubr.f32.mxu0 0.0
      %4251 = vmatmul.mubr.f32.gmra.mrb[0].mxu0 %v3886
      %v4252 = vpop.f32.mrb[0].mxu0
      %v4253 = vadd.f32 %v4028, %v4252
      %v4254 = vpop.f32.mrb[0].mxu0
      %4255 = vmatprep.mubr.f32.mxu0 0.0
      %4256 = vmatmul.mubr.f32.gmra.mrb[0].mxu0 %v3888
      %v4257 = vpop.f32.mrb[0].mxu0
      %v4258 = vadd.f32 %v4033, %v4257
      %v4259 = vpop.f32.mrb[0].mxu0
      %4260 = vmatprep.mubr.f32.mxu0 0.0
      %4261 = vmatmul.mubr.f32.gmra.mrb[0].mxu0 %v3890
      %v4262 = vpop.f32.mrb[0].mxu0
      %v4263 = vadd.f32 %v4038, %v4262
      %v4264 = vpop.f32.mrb[0].mxu0
      %4265 = vmatprep.mubr.f32.mxu0 0.0
      %4266 = vmatmul.mubr.f32.gmra.mrb[0].mxu0 %v3892
      %v4267 = vpop.f32.mrb[0].mxu0
      %v4268 = vadd.f32 %v4043, %v4267
      %v4269 = vpop.f32.mrb[0].mxu0
      %4270 = vmatprep.mubr.f32.mxu0 0.0
      %4271 = vmatmul.mubr.f32.gmra.mrb[0].mxu0 %v3894
      %v4272 = vpop.f32.mrb[0].mxu0
      %v4273 = vadd.f32 %v4048, %v4272
      %v4274 = vpop.f32.mrb[0].mxu0
      %4275 = vmatprep.mubr.f32.mxu0 0.0
      %4276 = vmatmul.mubr.f32.gmra.mrb[0].mxu0 %v3896
      %v4277 = vpop.f32.mrb[0].mxu0
      %v4278 = vadd.f32 %v4053, %v4277
      %v4279 = vpop.f32.mrb[0].mxu0
      %4280 = vmatprep.mubr.f32.mxu0 0.0
      %4281 = vmatmul.mubr.f32.gmra.mrb[0].mxu0 %v3898
      %v4282 = vpop.f32.mrb[0].mxu0
      %v4283 = vadd.f32 %v4058, %v4282
      %v4284 = vpop.f32.mrb[0].mxu0
      %4285 = vmatprep.mubr.f32.mxu0 0.0
      %4286 = vmatmul.mubr.f32.gmra.mrb[0].mxu0 %v3900
      %v4287 = vpop.f32.mrb[0].mxu0
      %v4288 = vadd.f32 %v4063, %v4287
      %v4289 = vpop.f32.mrb[0].mxu0
      %4290 = vmatprep.mubr.f32.mxu0 0.0
      %4291 = vmatmul.mubr.f32.gmra.mrb[0].mxu0 %v3902
      %v4292 = vpop.f32.mrb[0].mxu0
      %v4293 = vadd.f32 %v4068, %v4292
      %v4294 = vpop.f32.mrb[0].mxu0
      %4295 = vmatprep.mubr.f32.mxu0 0.0
      %4296 = vmatmul.mubr.f32.gmra.mrb[0].mxu0 %v3904
      %v4297 = vpop.f32.mrb[0].mxu0
      %v4298 = vadd.f32 %v4073, %v4297
      %v4299 = vpop.f32.mrb[0].mxu0
      %4300 = vmatprep.mubr.f32.mxu0 0.0
      %4301 = vmatmul.mubr.f32.gmra.mrb[0].mxu0 %v3906
      %v4302 = vpop.f32.mrb[0].mxu0
      %v4303 = vadd.f32 %v4078, %v4302
      %v4304 = vpop.f32.mrb[0].mxu0
      %4305 = vmatprep.mubr.f32.mxu0 0.0
      %4306 = vmatmul.mubr.f32.gmra.mrb[0].mxu0 %v3908
      %v4307 = vpop.f32.mrb[0].mxu0
      %v4308 = vadd.f32 %v4083, %v4307
      %v4309 = vpop.f32.mrb[0].mxu0
      %4310 = vmatprep.mubr.f32.mxu0 0.0
      %4311 = vmatmul.mubr.f32.gmra.mrb[0].mxu0 %v3910
      %v4312 = vpop.f32.mrb[0].mxu0
      %v4313 = vadd.f32 %v4088, %v4312
      %v4314 = vpop.f32.mrb[0].mxu0
      %4315 = vmatprep.mubr.f32.mxu0 0.0
      %4316 = vmatmul.mubr.f32.gmra.mrb[0].mxu0 %v3912
      %v4317 = vpop.f32.mrb[0].mxu0
      %v4318 = vadd.f32 %v4093, %v4317
      %v4319 = vpop.f32.mrb[0].mxu0
      %4320 = vmatprep.mubr.f32.mxu0 0.0
      %4321 = vmatmul.mubr.f32.gmra.mrb[0].mxu0 %v3914
      %v4322 = vpop.f32.mrb[0].mxu0
      %v4323 = vadd.f32 %v4098, %v4322
      %v4324 = vpop.f32.mrb[0].mxu0
      %4325 = vmatprep.mubr.f32.mxu0 0.0
      %4326 = vmatmul.mubr.f32.gmra.mrb[0].mxu0 %v3916
      %v4327 = vpop.f32.mrb[0].mxu0
      %v4328 = vadd.f32 %v4103, %v4327
      %v4329 = vpop.f32.mrb[0].mxu0
      %4330 = vmatprep.mubr.f32.mxu0 0.0
      %4331 = vmatmul.mubr.f32.gmra.mrb[0].mxu0 %v3918
      %v4332 = vpop.f32.mrb[0].mxu0
      %v4333 = vadd.f32 %v4108, %v4332
      %v4334 = vpop.f32.mrb[0].mxu0
      %4335 = vmatprep.mubr.f32.mxu0 0.0
      %4336 = vmatmul.mubr.f32.gmra.mrb[0].mxu0 %v3920
      %v4337 = vpop.f32.mrb[0].mxu0
      %v4338 = vadd.f32 %v4113, %v4337
      %v4339 = vpop.f32.mrb[0].mxu0
      %4340 = vmatprep.mubr.f32.mxu0 0.0
      %4341 = vmatmul.mubr.f32.gmra.mrb[0].mxu0 %v3922
      %v4342 = vpop.f32.mrb[0].mxu0
      %v4343 = vadd.f32 %v4118, %v4342
      %v4344 = vpop.f32.mrb[0].mxu0
      %4345 = vmatprep.mubr.f32.mxu0 0.0
      %4346 = vmatmul.mubr.f32.gmra.mrb[0].mxu0 %v3924
      %v4347 = vpop.f32.mrb[0].mxu0
      %v4348 = vadd.f32 %v4123, %v4347
      %v4349 = vpop.f32.mrb[0].mxu0
      %4350 = vmatprep.mubr.f32.mxu0 0.0
      %4351 = vmatmul.mubr.f32.gmra.mrb[0].mxu0 %v3926
      %v4352 = vpop.f32.mrb[0].mxu0
      %v4353 = vadd.f32 %v4128, %v4352
      %v4354 = vpop.f32.mrb[0].mxu0
      %4355 = vmatprep.mubr.f32.mxu0 0.0
      %4356 = vmatmul.mubr.f32.gmra.mrb[0].mxu0 %v3928
      %v4357 = vpop.f32.mrb[0].mxu0
      %v4358 = vadd.f32 %v4133, %v4357
      %v4359 = vpop.f32.mrb[0].mxu0
      %4360 = vmatprep.mubr.f32.mxu0 0.0
      %4361 = vmatmul.mubr.f32.gmra.mrb[0].mxu0 %v3930
      %v4362 = vpop.f32.mrb[0].mxu0
      %v4363 = vadd.f32 %v4138, %v4362
      %v4364 = vpop.f32.mrb[0].mxu0
      %4365 = vmatprep.mubr.f32.mxu0 0.0
      %4366 = vmatmul.mubr.f32.gmra.mrb[0].mxu0 %v3932
      %v4367 = vpop.f32.mrb[0].mxu0
      %v4368 = vadd.f32 %v4143, %v4367
      %v4369 = vpop.f32.mrb[0].mxu0
      %4370 = vmatprep.mubr.f32.mxu0 0.0
      %4371 = vmatmul.mubr.f32.gmra.mrb[0].mxu0 %v3934
      %v4372 = vpop.f32.mrb[0].mxu0
      %v4373 = vadd.f32 %v4148, %v4372
      %v4374 = vpop.f32.mrb[0].mxu0
      %4375 = vmatprep.mubr.f32.mxu0 0.0
      %4376 = vmatmul.mubr.f32.gmra.mrb[0].mxu0 %v3932
      %v4377 = vpop.f32.mrb[0].mxu0
      %v4378 = vadd.f32 %v4153, %v4377
      %v4379 = vpop.f32.mrb[0].mxu0
      %4380 = vmatprep.mubr.f32.mxu0 0.0
      %4381 = vmatmul.mubr.f32.gmra.mrb[0].mxu0 %v3934
      %v4382 = vpop.f32.mrb[0].mxu0
      %v4383 = vadd.f32 %v4158, %v4382
      %v4384 = vpop.f32.mrb[0].mxu0
      %4385 = vdwg.mxu0
      %v4386 = vld [vmem:[%s438] sm:$0x1]
      %v4387 = vmul.f32 %v4386, 1.442695
      %v4388 = vpow.pop %v4387
      %v4390 = vlaneseq
      %v4391 = vshrl.u32 %v4390, 7
      %v4392 = vsub.s32 0, %v4391
      %v4393 = vrot.slane %v4388, %v4392
      %v4395 = vmul.f32 %v4228, %v4393
      %v4396 = vmul.f32 %v4233, %v4393
      %v4397 = vmul.f32 %v4238, %v4393
      %v4398 = vmul.f32 %v4243, %v4393
      %v4399 = vmul.f32 %v4248, %v4393
      %v4400 = vmul.f32 %v4253, %v4393
      %v4401 = vmul.f32 %v4258, %v4393
      %v4402 = vmul.f32 %v4263, %v4393
      %v4403 = vmul.f32 %v4268, %v4393
      %v4404 = vmul.f32 %v4273, %v4393
      %v4405 = vmul.f32 %v4278, %v4393
      %v4406 = vmul.f32 %v4283, %v4393
      %v4407 = vmul.f32 %v4288, %v4393
      %v4408 = vmul.f32 %v4293, %v4393
      %v4409 = vmul.f32 %v4298, %v4393
      %v4410 = vmul.f32 %v4303, %v4393
      %v4411 = vmul.f32 %v4308, %v4393
      %v4412 = vmul.f32 %v4313, %v4393
      %v4413 = vmul.f32 %v4318, %v4393
      %v4414 = vmul.f32 %v4323, %v4393
      %v4415 = vmul.f32 %v4328, %v4393
      %v4416 = vmul.f32 %v4333, %v4393
      %v4417 = vmul.f32 %v4338, %v4393
      %v4418 = vmul.f32 %v4343, %v4393
      %v4419 = vmul.f32 %v4348, %v4393
      %v4420 = vmul.f32 %v4353, %v4393
      %v4421 = vmul.f32 %v4358, %v4393
      %v4422 = vmul.f32 %v4363, %v4393
      %v4423 = vmul.f32 %v4368, %v4393
      %v4424 = vmul.f32 %v4373, %v4393
      %v4425 = vmul.f32 %v4378, %v4393
      %v4426 = vmul.f32 %v4383, %v4393
      %4427 = vst.msk [vmem:[%s443] sm:$0xff] %vm1631, %v4395
      %4428 = vst.msk [vmem:[%s443 + $0x8] sm:$0xff] %vm1631, %v4396
      %4429 = vst.msk [vmem:[%s443 + $0x10] sm:$0xff] %vm1631, %v4397
      %4430 = vst.msk [vmem:[%s443 + $0x18] sm:$0xff] %vm1631, %v4398
      %4431 = vst.msk [vmem:[%s443 + $0x20] sm:$0xff] %vm1631, %v4399
      %4432 = vst.msk [vmem:[%s443 + $0x28] sm:$0xff] %vm1631, %v4400
      %4433 = vst.msk [vmem:[%s443 + $0x30] sm:$0xff] %vm1631, %v4401
      %4434 = vst.msk [vmem:[%s443 + $0x38] sm:$0xff] %vm1631, %v4402
      %4435 = vst.msk [vmem:[%s443 + $0x40] sm:$0xff] %vm1631, %v4403
      %4436 = vst.msk [vmem:[%s443 + $0x48] sm:$0xff] %vm1631, %v4404
      %4437 = vst.msk [vmem:[%s443 + $0x50] sm:$0xff] %vm1631, %v4405
      %4438 = vst.msk [vmem:[%s443 + $0x58] sm:$0xff] %vm1631, %v4406
      %4439 = vst.msk [vmem:[%s443 + $0x60] sm:$0xff] %vm1631, %v4407
      %4440 = vst.msk [vmem:[%s443 + $0x68] sm:$0xff] %vm1631, %v4408
      %4441 = vst.msk [vmem:[%s443 + $0x70] sm:$0xff] %vm1631, %v4409
      %4442 = vst.msk [vmem:[%s443 + $0x78] sm:$0xff] %vm1631, %v4410
      %4443 = vst.msk [vmem:[%s443 + $0x80] sm:$0xff] %vm1631, %v4411
      %4444 = vst.msk [vmem:[%s443 + $0x88] sm:$0xff] %vm1631, %v4412
      %4445 = vst.msk [vmem:[%s443 + $0x90] sm:$0xff] %vm1631, %v4413
      %4446 = vst.msk [vmem:[%s443 + $0x98] sm:$0xff] %vm1631, %v4414
      %4447 = vst.msk [vmem:[%s443 + $0xa0] sm:$0xff] %vm1631, %v4415
      %4448 = vst.msk [vmem:[%s443 + $0xa8] sm:$0xff] %vm1631, %v4416
      %4449 = vst.msk [vmem:[%s443 + $0xb0] sm:$0xff] %vm1631, %v4417
      %4450 = vst.msk [vmem:[%s443 + $0xb8] sm:$0xff] %vm1631, %v4418
      %4451 = vst.msk [vmem:[%s443 + $0xc0] sm:$0xff] %vm1631, %v4419
      %4452 = vst.msk [vmem:[%s443 + $0xc8] sm:$0xff] %vm1631, %v4420
      %4453 = vst.msk [vmem:[%s443 + $0xd0] sm:$0xff] %vm1631, %v4421
      %4454 = vst.msk [vmem:[%s443 + $0xd8] sm:$0xff] %vm1631, %v4422
      %4455 = vst.msk [vmem:[%s443 + $0xe0] sm:$0xff] %vm1631, %v4423
      %4456 = vst.msk [vmem:[%s443 + $0xe8] sm:$0xff] %vm1631, %v4424
      %4457 = vst.msk [vmem:[%s443 + $0xf0] sm:$0xff] %vm1631, %v4425
      %4458 = vst.msk [vmem:[%s443 + $0xf8] sm:$0xff] %vm1631, %v4426
      %p4459 = scmp.lt.s32.totalorder %s21, 1
      %s4460 = scalar_select %p4459, %s21, 1
      %s4461 = smul.addr %s4460, 32
      %s4462 = smul.addr %s4461, 8
      %s4463 = scalar_lea.vmem %s10, %s4462
      // Predicated region
      $region61: #{connn_forward.1} parent=59 // pred_check
        %p4464 = pneg %p284
      $region62: #{connn_forward.1} parent=59 // pred_check_branch
        %4466 = sbr.rel (%p4464) target = $region64
      $region63: #{connn_forward.1} parent=59 // pred_region
        _
      $region64: #{connn_forward.1} parent=59 // pred_fallthru
        _
    $region60: #{connn_forward.1} parent=5 // pred_fallthru
      _
    %p4467 = scmp.le.s32.totalorder 2, %s16
    // Predicated region
    $region65: #{connn_forward.1} parent=5 // pred_check
      %p4468 = pneg %p4467
    $region66: #{connn_forward.1} parent=5 // pred_check_branch
      %4470 = sbr.rel (%p4468) target = $region68
    $region67: #{connn_forward.1} parent=5 // pred_region
      %s4471 = ssub.s32 %s16, 2
      // Predicated region
      $region69: #{connn_forward.1} parent=67 // pred_check
        %p4472 = pneg %p290
      $region70: #{connn_forward.1} parent=67 // pred_check_branch
        %4474 = sbr.rel (%p4472) target = $region72
      $region71: #{connn_forward.1} parent=67 // pred_region
        %p4475 = scmp.lt.s32.totalorder %s22, 1
        %s4476 = scalar_select %p4475, %s22, 1
        %s4477 = smul.addr %s4476, 32
        %s4478 = smul.addr %s4477, 8
        %s4479 = scalar_lea.vmem %s10, %s4478
      $region72: #{connn_forward.1} parent=67 // pred_fallthru
        _
    $region68: #{connn_forward.1} parent=5 // pred_fallthru
      _
  $region6: #{connn_forward.1} parent=0 // loop_footer
    %s20 = sadd.s32 1, %s16
  $region7: #{connn_forward.1} parent=0 // loop_footer_branch
    %15 = sbr.rel target = $region3
  $region8: #{connn_forward.1} parent=0 // loop_exit
    _

</llo_original>
